<compile_context>
chip_gen: v5e
topology: v5e:2x2
jax: 0.10.0
libtpu: 0.0.40
codegen_flags: <defaults>
</compile_context>

<pallas_src>
import jax
import jax.numpy as jnp
from jax.experimental import pallas as pl
from jax.experimental.pallas import tpu as pltpu

# ----------------------------- small synthetic config -----------------------------
PATCH = 16
IMG = 32
CIN = 3
HIDDEN = 64
HEADS = 4
HEAD_DIM = HIDDEN // HEADS
MLP = 4 * HIDDEN          # ViT uses 4x hidden for the intermediate size
LAYERS = 2                # ViT-base has 12; shrunk for the synthetic run
CLASSES = 10              # real checkpoint has 1000 ImageNet classes
LN_EPS = 1e-12            # config.layer_norm_eps

NUM_PATCHES = (IMG // PATCH) ** 2
SEQ = NUM_PATCHES + 1
CPP = CIN * PATCH * PATCH

HPAD = 128                # lane-padded hidden width for the xln output
CPAD = 128                # lane-padded class width for the logits output


# ----------------------------- in-kernel helpers -----------------------------
def _layernorm(x, g, b):
    # f32 statistics regardless of matmul dtype.
    mu = jnp.mean(x, axis=-1, keepdims=True)
    xc = x - mu
    var = jnp.mean(xc * xc, axis=-1, keepdims=True)
    return xc * jax.lax.rsqrt(var + LN_EPS) * g + b


def _gelu(x):
    # TODO(synk): HF ViT uses exact erf-based GELU; erf is not guaranteed to lower
    # in Mosaic, so the tanh approximation is used (tiny numerical divergence).
    c = 0.7978845608028654  # sqrt(2/pi)
    return 0.5 * x * (1.0 + jnp.tanh(c * (x + 0.044715 * x * x * x)))


# ----------------------------- fused forward kernel -----------------------------
def _vit_fused_kernel(x_ref, add_ref, patch_w_ref,
                      ln1_g_ref, ln1_b_ref, wqkv_ref, bqkv_ref, wo_ref, bo_ref,
                      ln2_g_ref, ln2_b_ref, w1_ref, b1_ref, w2_ref, b2_ref,
                      lnf_g_ref, lnf_b_ref, fcw_ref, fcb_ref,
                      xln_ref, logits_ref):
    scale = 1.0 / (HEAD_DIM ** 0.5)

    # Patch embedding for this sample.  The CLS row of x is zero; its cls+pos term
    # (and the patch-embed bias + pos for patch rows) is precomputed in add_ref,
    # so one matmul builds the full (SEQ, HIDDEN) token tensor for the sample.
    x = x_ref[0]                                                   # (SEQ, CPP) bf16
    tokens = jnp.dot(x, patch_w_ref[...],
                     preferred_element_type=jnp.float32) + add_ref[...]   # f32

    for l in range(LAYERS):                    # static unroll: weights stay in VMEM
        # ---- multi-head self-attention (pre-LN), heads as a batch dim ----
        y = _layernorm(tokens, ln1_g_ref[l], ln1_b_ref[l])         # (SEQ, H) f32
        yb = jnp.broadcast_to(y.astype(jnp.bfloat16), (HEADS, SEQ, HIDDEN))
        qkv = jax.lax.dot_general(                                 # (HEADS, SEQ, 3*HD) f32
            yb, wqkv_ref[l], (((2,), (1,)), ((0,), (0,))),
            preferred_element_type=jnp.float32) + bqkv_ref[l]
        q = qkv[:, :, :HEAD_DIM].astype(jnp.bfloat16)
        k = qkv[:, :, HEAD_DIM:2 * HEAD_DIM].astype(jnp.bfloat16)
        v = qkv[:, :, 2 * HEAD_DIM:].astype(jnp.bfloat16)
        s = jax.lax.dot_general(                                   # (HEADS, SEQ, SEQ) f32
            q, k, (((2,), (2,)), ((0,), (0,))),
            preferred_element_type=jnp.float32) * scale
        s = s - jnp.max(s, axis=-1, keepdims=True)                 # softmax in f32
        e = jnp.exp(s)
        p = e * pl.reciprocal(jnp.sum(e, axis=-1, keepdims=True), approx=True)
        ctx = jax.lax.dot_general(                                 # (HEADS, SEQ, HD) f32
            p.astype(jnp.bfloat16), v, (((2,), (1,)), ((0,), (0,))),
            preferred_element_type=jnp.float32)
        # Per-head output projection + sum over heads == concat(ctx_heads) @ Wo.
        attn_h = jax.lax.dot_general(                              # (HEADS, SEQ, H) f32
            ctx.astype(jnp.bfloat16), wo_ref[l], (((2,), (1,)), ((0,), (0,))),
            preferred_element_type=jnp.float32)
        tokens = tokens + jnp.sum(attn_h, axis=0) + bo_ref[l]

        # ---- MLP (pre-LN) ----
        y2 = _layernorm(tokens, ln2_g_ref[l], ln2_b_ref[l])
        m = jnp.dot(y2.astype(jnp.bfloat16), w1_ref[l],
                    preferred_element_type=jnp.float32) + b1_ref[l]
        m = _gelu(m)
        tokens = tokens + jnp.dot(m.astype(jnp.bfloat16), w2_ref[l],
                                  preferred_element_type=jnp.float32) + b2_ref[l]

    # ---- head: module LayerNorm (eps=1e-12) + classifier on the CLS row ONLY ----
    cls_tok = tokens[0:1, :]                                       # (1, HIDDEN)
    xln = _layernorm(cls_tok, lnf_g_ref[...], lnf_b_ref[...])      # (1, HIDDEN) f32
    # Single 128-lane dense store (keep the unmasked vst path).
    xln_ref[0] = jnp.concatenate(
        [xln, jnp.zeros((1, HPAD - HIDDEN), jnp.float32)], axis=-1)
    logits_ref[0] = jnp.dot(xln.astype(jnp.bfloat16), fcw_ref[...],
                            preferred_element_type=jnp.float32) + fcb_ref[...]


def vit_fused(xpad, add, flat_params, batch):
    def const_spec(a):
        nd = a.ndim
        return pl.BlockSpec(a.shape, lambda b, _n=nd: (0,) * _n)

    in_specs = [pl.BlockSpec((1, SEQ, CPP), lambda b: (b, 0, 0)),   # per-sample patches
                const_spec(add)]
    in_specs += [const_spec(w) for w in flat_params]                # weights: one block, kept resident

    out_shape = (jax.ShapeDtypeStruct((batch, 1, HPAD), jnp.float32),
                 jax.ShapeDtypeStruct((batch, 1, CPAD), jnp.float32))
    out_specs = (pl.BlockSpec((1, 1, HPAD), lambda b: (b, 0, 0)),
                 pl.BlockSpec((1, 1, CPAD), lambda b: (b, 0, 0)))

    return pl.pallas_call(
        _vit_fused_kernel,
        out_shape=out_shape,
        grid=(batch,),
        in_specs=in_specs,
        out_specs=out_specs,
        compiler_params=pltpu.CompilerParams(
            dimension_semantics=("parallel",)),      # batch shards across TCs on v7x
    )(xpad, add, *flat_params)


# ----------------------------- plain-JAX glue -----------------------------
def extract_patches(x):
    """NCHW image -> (B, num_patches, C*P*P), matching Conv2d(k=P, stride=P) weight layout."""
    B, C, H, W = x.shape
    gh, gw = H // PATCH, W // PATCH
    x = x.reshape(B, C, gh, PATCH, gw, PATCH)
    x = x.transpose(0, 2, 4, 1, 3, 5)          # (B, gh, gw, C, P, P)
    return x.reshape(B, gh * gw, C * PATCH * PATCH)


def prepare_fused_params(params):
    """Head-major QKV/Wo, per-layer stacking, bf16 matmul weights, padded classifier."""
    f32, bf16 = jnp.float32, jnp.bfloat16

    def head_major(w):  # (H, H) col-major heads -> (HEADS, H, HEAD_DIM)
        return w.reshape(HIDDEN, HEADS, HEAD_DIM).transpose(1, 0, 2)

    wqkv = jnp.stack([
        jnp.concatenate([head_major(params["layers"][l]["wq"]),
                         head_major(params["layers"][l]["wk"]),
                         head_major(params["layers"][l]["wv"])], axis=-1)
        for l in range(LAYERS)], axis=0).astype(bf16)              # (L, HEADS, H, 3*HD)
    bqkv = jnp.stack([
        jnp.concatenate([params["layers"][l]["bq"].reshape(HEADS, 1, HEAD_DIM),
                         params["layers"][l]["bk"].reshape(HEADS, 1, HEAD_DIM),
                         params["layers"][l]["bv"].reshape(HEADS, 1, HEAD_DIM)], axis=-1)
        for l in range(LAYERS)], axis=0).astype(f32)               # (L, HEADS, 1, 3*HD)
    wo = jnp.stack([params["layers"][l]["wo"].reshape(HEADS, HEAD_DIM, HIDDEN)
                    for l in range(LAYERS)], axis=0).astype(bf16)  # (L, HEADS, HD, H)

    def stack(name, dtype=f32):
        return jnp.stack([params["layers"][l][name] for l in range(LAYERS)],
                         axis=0).astype(dtype)

    fcw_pad = jnp.zeros((HIDDEN, CPAD), f32).at[:, :CLASSES].set(
        params["fc_w"]).astype(bf16)
    fcb_pad = jnp.zeros((1, CPAD), f32).at[:, :CLASSES].set(params["fc_b"])
    return [
        params["patch_w"].astype(bf16),
        stack("ln1_g"), stack("ln1_b"),
        wqkv, bqkv, wo, stack("bo"),
        stack("ln2_g"), stack("ln2_b"),
        stack("w1", bf16), stack("b1"),
        stack("w2", bf16), stack("b2"),
        params["ln_g"], params["ln_b"],
        fcw_pad, fcb_pad,
    ]


def vit_forward(x, params):
    B = x.shape[0]
    x = x.astype(jnp.float32)

    # Patch extraction + a zero "seed" CLS row so the patch-embed matmul also
    # places CLS/pos (their values come from the shared additive term below).
    patches = extract_patches(x)                                         # (B, N, CPP)
    xpad = jnp.concatenate([jnp.zeros((B, 1, CPP), jnp.float32), patches],
                           axis=1).astype(jnp.bfloat16)                  # (B, SEQ, CPP)

    # Shared per-row additive term: row 0 -> cls + pos[0]; patch rows -> patch_b + pos.
    row_add = jnp.concatenate(
        [params["cls"].reshape(1, HIDDEN),
         jnp.broadcast_to(params["patch_b"].reshape(1, HIDDEN),
                          (NUM_PATCHES, HIDDEN))], axis=0)               # (SEQ, H)
    add = (params["pos"].reshape(SEQ, HIDDEN) + row_add).astype(jnp.float32)

    flat = prepare_fused_params(params)
    xln_o, logits_o = vit_fused(xpad, add, flat, B)

    xln = xln_o[:, 0, :HIDDEN]
    logits = logits_o[:, 0, :CLASSES]
    return xln, logits


# ----------------------------- deterministic parameter init -----------------------------
def init_params(key):
    keys = iter(jax.random.split(key, 64))
    std = 0.02

    def nrm(shape):
        return std * jax.random.normal(next(keys), shape, jnp.float32)

    params = {
        "patch_w": nrm((CPP, HIDDEN)),
        "patch_b": nrm((1, HIDDEN)),
        "cls": nrm((1, 1, HIDDEN)),
        "pos": nrm((1, SEQ, HIDDEN)),
        "ln_g": jnp.ones((1, HIDDEN), jnp.float32),
        "ln_b": jnp.zeros((1, HIDDEN), jnp.float32),
        "fc_w": nrm((HIDDEN, CLASSES)),
        "fc_b": jnp.zeros((1, CLASSES), jnp.float32),
        "layers": [],
    }
    for _ in range(LAYERS):
        params["layers"].append({
            "ln1_g": jnp.ones((1, HIDDEN), jnp.float32),
            "ln1_b": jnp.zeros((1, HIDDEN), jnp.float32),
            "wq": nrm((HIDDEN, HIDDEN)), "bq": nrm((1, HIDDEN)),
            "wk": nrm((HIDDEN, HIDDEN)), "bk": nrm((1, HIDDEN)),
            "wv": nrm((HIDDEN, HIDDEN)), "bv": nrm((1, HIDDEN)),
            "wo": nrm((HIDDEN, HIDDEN)), "bo": nrm((1, HIDDEN)),
            "ln2_g": jnp.ones((1, HIDDEN), jnp.float32),
            "ln2_b": jnp.zeros((1, HIDDEN), jnp.float32),
            "w1": nrm((HIDDEN, MLP)), "b1": nrm((1, MLP)),
            "w2": nrm((MLP, HIDDEN)), "b2": nrm((1, HIDDEN)),
        })
    return params


if __name__ == "__main__":
    key = jax.random.PRNGKey(0)
    kx, kp = jax.random.split(key)
    x = jax.random.normal(kx, (2, CIN, IMG, IMG), jnp.float32)   # NCHW like PyTorch
    params = init_params(kp)

    x_ln, logits = jax.jit(vit_forward)(x, params)
    jax.block_until_ready((x_ln, logits))

    assert x_ln.shape == (2, HIDDEN), x_ln.shape
    assert logits.shape == (2, CLASSES), logits.shape
    assert jnp.all(jnp.isfinite(x_ln)) and jnp.all(jnp.isfinite(logits))
    print("KERNEL_OK")
</pallas_src>

<mosaic_0001>
module attributes {stable_mosaic.version = 11 : i64} {
  func.func @_vit_fused_kernel(%arg0: i32, %arg1: memref<1x5x768xbf16, #tpu.memory_space<vmem>>, %arg2: memref<5x64xf32, #tpu.memory_space<vmem>>, %arg3: memref<768x64xbf16, #tpu.memory_space<vmem>>, %arg4: memref<2x1x64xf32, #tpu.memory_space<vmem>>, %arg5: memref<2x1x64xf32, #tpu.memory_space<vmem>>, %arg6: memref<2x4x64x48xbf16, #tpu.memory_space<vmem>>, %arg7: memref<2x4x1x48xf32, #tpu.memory_space<vmem>>, %arg8: memref<2x4x16x64xbf16, #tpu.memory_space<vmem>>, %arg9: memref<2x1x64xf32, #tpu.memory_space<vmem>>, %arg10: memref<2x1x64xf32, #tpu.memory_space<vmem>>, %arg11: memref<2x1x64xf32, #tpu.memory_space<vmem>>, %arg12: memref<2x64x256xbf16, #tpu.memory_space<vmem>>, %arg13: memref<2x1x256xf32, #tpu.memory_space<vmem>>, %arg14: memref<2x256x64xbf16, #tpu.memory_space<vmem>>, %arg15: memref<2x1x64xf32, #tpu.memory_space<vmem>>, %arg16: memref<1x64xf32, #tpu.memory_space<vmem>>, %arg17: memref<1x64xf32, #tpu.memory_space<vmem>>, %arg18: memref<64x128xbf16, #tpu.memory_space<vmem>>, %arg19: memref<1x128xf32, #tpu.memory_space<vmem>>, %arg20: memref<1x1x128xf32, #tpu.memory_space<vmem>>, %arg21: memref<1x1x128xf32, #tpu.memory_space<vmem>>) attributes {dimension_semantics = [#tpu.dimension_semantics<parallel>], iteration_bounds = array<i64: 2>, scalar_prefetch = 0 : i64, scratch_operands = 0 : i64, tpu.core_type = #tpu.core_type<tc>, window_params = [{transform_indices = @transform_0, window_bounds = array<i64: 1, 5, 768>}, {pipeline_mode = #tpu.pipeline_mode<synchronous>, transform_indices = @transform_1, window_bounds = array<i64: 5, 64>}, {pipeline_mode = #tpu.pipeline_mode<synchronous>, transform_indices = @transform_2, window_bounds = array<i64: 768, 64>}, {pipeline_mode = #tpu.pipeline_mode<synchronous>, transform_indices = @transform_3, window_bounds = array<i64: 2, 1, 64>}, {pipeline_mode = #tpu.pipeline_mode<synchronous>, transform_indices = @transform_4, window_bounds = array<i64: 2, 1, 64>}, {pipeline_mode = #tpu.pipeline_mode<synchronous>, transform_indices = @transform_5, window_bounds = array<i64: 2, 4, 64, 48>}, {pipeline_mode = #tpu.pipeline_mode<synchronous>, transform_indices = @transform_6, window_bounds = array<i64: 2, 4, 1, 48>}, {pipeline_mode = #tpu.pipeline_mode<synchronous>, transform_indices = @transform_7, window_bounds = array<i64: 2, 4, 16, 64>}, {pipeline_mode = #tpu.pipeline_mode<synchronous>, transform_indices = @transform_8, window_bounds = array<i64: 2, 1, 64>}, {pipeline_mode = #tpu.pipeline_mode<synchronous>, transform_indices = @transform_9, window_bounds = array<i64: 2, 1, 64>}, {pipeline_mode = #tpu.pipeline_mode<synchronous>, transform_indices = @transform_10, window_bounds = array<i64: 2, 1, 64>}, {pipeline_mode = #tpu.pipeline_mode<synchronous>, transform_indices = @transform_11, window_bounds = array<i64: 2, 64, 256>}, {pipeline_mode = #tpu.pipeline_mode<synchronous>, transform_indices = @transform_12, window_bounds = array<i64: 2, 1, 256>}, {pipeline_mode = #tpu.pipeline_mode<synchronous>, transform_indices = @transform_13, window_bounds = array<i64: 2, 256, 64>}, {pipeline_mode = #tpu.pipeline_mode<synchronous>, transform_indices = @transform_14, window_bounds = array<i64: 2, 1, 64>}, {pipeline_mode = #tpu.pipeline_mode<synchronous>, transform_indices = @transform_15, window_bounds = array<i64: 1, 64>}, {pipeline_mode = #tpu.pipeline_mode<synchronous>, transform_indices = @transform_16, window_bounds = array<i64: 1, 64>}, {pipeline_mode = #tpu.pipeline_mode<synchronous>, transform_indices = @transform_17, window_bounds = array<i64: 64, 128>}, {pipeline_mode = #tpu.pipeline_mode<synchronous>, transform_indices = @transform_18, window_bounds = array<i64: 1, 128>}, {transform_indices = @transform_19, window_bounds = array<i64: 1, 1, 128>}, {transform_indices = @transform_20, window_bounds = array<i64: 1, 1, 128>}]} {
    %c0 = arith.constant 0 : index
    %c0_0 = arith.constant 0 : index
    %c0_1 = arith.constant 0 : index
    %0 = vector.load %arg1[%c0, %c0_0, %c0_1] : memref<1x5x768xbf16, #tpu.memory_space<vmem>>, vector<1x5x768xbf16>
    %1 = vector.shape_cast %0 : vector<1x5x768xbf16> to vector<5x768xbf16>
    %c0_2 = arith.constant 0 : index
    %c0_3 = arith.constant 0 : index
    %2 = vector.load %arg3[%c0_2, %c0_3] : memref<768x64xbf16, #tpu.memory_space<vmem>>, vector<768x64xbf16>
    %cst = arith.constant dense<0.000000e+00> : vector<5x64xf32>
    %3 = tpu.matmul %1, %2, %cst {dimension_numbers = #tpu.dot_dimension_numbers<[1], [0], [0], [1], [0, 0, 1, 1], [], []>} : vector<5x768xbf16>, vector<768x64xbf16>, vector<5x64xf32> -> vector<5x64xf32>
    %c0_4 = arith.constant 0 : index
    %c0_5 = arith.constant 0 : index
    %4 = vector.load %arg2[%c0_4, %c0_5] : memref<5x64xf32, #tpu.memory_space<vmem>>, vector<5x64xf32>
    %5 = arith.addf %3, %4 : vector<5x64xf32>
    %c0_6 = arith.constant 0 : index
    %c0_7 = arith.constant 0 : index
    %c0_8 = arith.constant 0 : index
    %6 = vector.load %arg4[%c0_6, %c0_7, %c0_8] : memref<2x1x64xf32, #tpu.memory_space<vmem>>, vector<1x1x64xf32>
    %7 = vector.shape_cast %6 : vector<1x1x64xf32> to vector<1x64xf32>
    %c0_9 = arith.constant 0 : index
    %c0_10 = arith.constant 0 : index
    %c0_11 = arith.constant 0 : index
    %8 = vector.load %arg5[%c0_9, %c0_10, %c0_11] : memref<2x1x64xf32, #tpu.memory_space<vmem>>, vector<1x1x64xf32>
    %9 = vector.shape_cast %8 : vector<1x1x64xf32> to vector<1x64xf32>
    %cst_12 = arith.constant dense<0.000000e+00> : vector<5xf32>
    %10 = vector.multi_reduction <add>, %5, %cst_12 [1] : vector<5x64xf32> to vector<5xf32>
    %11 = vector.shape_cast %10 : vector<5xf32> to vector<5x1xf32>
    %cst_13 = arith.constant 6.400000e+01 : f32
    %12 = vector.broadcast %cst_13 : f32 to vector<5x1xf32>
    %13 = arith.divf %11, %12 : vector<5x1xf32>
    %14 = vector.broadcast %13 : vector<5x1xf32> to vector<5x64xf32>
    %15 = arith.subf %5, %14 : vector<5x64xf32>
    %16 = arith.mulf %15, %15 : vector<5x64xf32>
    %cst_14 = arith.constant dense<0.000000e+00> : vector<5xf32>
    %17 = vector.multi_reduction <add>, %16, %cst_14 [1] : vector<5x64xf32> to vector<5xf32>
    %18 = vector.shape_cast %17 : vector<5xf32> to vector<5x1xf32>
    %cst_15 = arith.constant 6.400000e+01 : f32
    %19 = vector.broadcast %cst_15 : f32 to vector<5x1xf32>
    %20 = arith.divf %18, %19 : vector<5x1xf32>
    %cst_16 = arith.constant 9.99999996E-13 : f32
    %21 = vector.broadcast %cst_16 : f32 to vector<5x1xf32>
    %22 = arith.addf %20, %21 : vector<5x1xf32>
    %23 = math.rsqrt %22 : vector<5x1xf32>
    %24 = vector.broadcast %23 : vector<5x1xf32> to vector<5x64xf32>
    %25 = arith.mulf %15, %24 : vector<5x64xf32>
    %26 = vector.broadcast %7 : vector<1x64xf32> to vector<5x64xf32>
    %27 = arith.mulf %25, %26 : vector<5x64xf32>
    %28 = vector.broadcast %9 : vector<1x64xf32> to vector<5x64xf32>
    %29 = arith.addf %27, %28 : vector<5x64xf32>
    %30 = arith.truncf %29 : vector<5x64xf32> to vector<5x64xbf16>
    %31 = vector.shape_cast %30 : vector<5x64xbf16> to vector<1x5x64xbf16>
    %32 = vector.broadcast %31 : vector<1x5x64xbf16> to vector<4x5x64xbf16>
    %c0_17 = arith.constant 0 : index
    %c0_18 = arith.constant 0 : index
    %c0_19 = arith.constant 0 : index
    %c0_20 = arith.constant 0 : index
    %33 = vector.load %arg6[%c0_17, %c0_18, %c0_19, %c0_20] : memref<2x4x64x48xbf16, #tpu.memory_space<vmem>>, vector<1x4x64x48xbf16>
    %34 = vector.shape_cast %33 : vector<1x4x64x48xbf16> to vector<4x64x48xbf16>
    %cst_21 = arith.constant dense<0.000000e+00> : vector<4x5x48xf32>
    %35 = tpu.matmul %32, %34, %cst_21 {dimension_numbers = #tpu.dot_dimension_numbers<[2], [1], [1], [2], [0, 0, 0, 1, 1, 2], [0], [0]>} : vector<4x5x64xbf16>, vector<4x64x48xbf16>, vector<4x5x48xf32> -> vector<4x5x48xf32>
    %c0_22 = arith.constant 0 : index
    %c0_23 = arith.constant 0 : index
    %c0_24 = arith.constant 0 : index
    %c0_25 = arith.constant 0 : index
    %36 = vector.load %arg7[%c0_22, %c0_23, %c0_24, %c0_25] : memref<2x4x1x48xf32, #tpu.memory_space<vmem>>, vector<1x4x1x48xf32>
    %37 = vector.shape_cast %36 : vector<1x4x1x48xf32> to vector<4x1x48xf32>
    %38 = vector.broadcast %37 : vector<4x1x48xf32> to vector<4x5x48xf32>
    %39 = arith.addf %35, %38 : vector<4x5x48xf32>
    %40 = vector.extract_strided_slice %39 {offsets = [0, 0, 0], sizes = [4, 5, 16], strides = [1, 1, 1]} : vector<4x5x48xf32> to vector<4x5x16xf32>
    %41 = arith.truncf %40 : vector<4x5x16xf32> to vector<4x5x16xbf16>
    %42 = vector.extract_strided_slice %39 {offsets = [0, 0, 16], sizes = [4, 5, 16], strides = [1, 1, 1]} : vector<4x5x48xf32> to vector<4x5x16xf32>
    %43 = arith.truncf %42 : vector<4x5x16xf32> to vector<4x5x16xbf16>
    %44 = vector.extract_strided_slice %39 {offsets = [0, 0, 32], sizes = [4, 5, 16], strides = [1, 1, 1]} : vector<4x5x48xf32> to vector<4x5x16xf32>
    %45 = arith.truncf %44 : vector<4x5x16xf32> to vector<4x5x16xbf16>
    %cst_26 = arith.constant dense<0.000000e+00> : vector<4x5x5xf32>
    %46 = tpu.matmul %41, %43, %cst_26 {dimension_numbers = #tpu.dot_dimension_numbers<[2], [2], [1], [1], [0, 0, 0, 1, 1, 1], [0], [0]>} : vector<4x5x16xbf16>, vector<4x5x16xbf16>, vector<4x5x5xf32> -> vector<4x5x5xf32>
    %cst_27 = arith.constant 2.500000e-01 : f32
    %47 = vector.broadcast %cst_27 : f32 to vector<4x5x5xf32>
    %48 = arith.mulf %46, %47 : vector<4x5x5xf32>
    %cst_28 = arith.constant dense<0xFF800000> : vector<4x5xf32>
    %49 = vector.multi_reduction <maximumf>, %48, %cst_28 [2] : vector<4x5x5xf32> to vector<4x5xf32>
    %50 = vector.shape_cast %49 : vector<4x5xf32> to vector<4x5x1xf32>
    %51 = vector.broadcast %50 : vector<4x5x1xf32> to vector<4x5x5xf32>
    %52 = arith.subf %48, %51 : vector<4x5x5xf32>
    %53 = math.exp %52 : vector<4x5x5xf32>
    %cst_29 = arith.constant dense<0.000000e+00> : vector<4x5xf32>
    %54 = vector.multi_reduction <add>, %53, %cst_29 [2] : vector<4x5x5xf32> to vector<4x5xf32>
    %55 = vector.shape_cast %54 : vector<4x5xf32> to vector<4x5x1xf32>
    %56 = tpu.reciprocal %55 {approx = true} : vector<4x5x1xf32> -> vector<4x5x1xf32>
    %57 = vector.broadcast %56 : vector<4x5x1xf32> to vector<4x5x5xf32>
    %58 = arith.mulf %53, %57 : vector<4x5x5xf32>
    %59 = arith.truncf %58 : vector<4x5x5xf32> to vector<4x5x5xbf16>
    %cst_30 = arith.constant dense<0.000000e+00> : vector<4x5x16xf32>
    %60 = tpu.matmul %59, %45, %cst_30 {dimension_numbers = #tpu.dot_dimension_numbers<[2], [1], [1], [2], [0, 0, 0, 1, 1, 2], [0], [0]>} : vector<4x5x5xbf16>, vector<4x5x16xbf16>, vector<4x5x16xf32> -> vector<4x5x16xf32>
    %61 = arith.truncf %60 : vector<4x5x16xf32> to vector<4x5x16xbf16>
    %c0_31 = arith.constant 0 : index
    %c0_32 = arith.constant 0 : index
    %c0_33 = arith.constant 0 : index
    %c0_34 = arith.constant 0 : index
    %62 = vector.load %arg8[%c0_31, %c0_32, %c0_33, %c0_34] : memref<2x4x16x64xbf16, #tpu.memory_space<vmem>>, vector<1x4x16x64xbf16>
    %63 = vector.shape_cast %62 : vector<1x4x16x64xbf16> to vector<4x16x64xbf16>
    %cst_35 = arith.constant dense<0.000000e+00> : vector<4x5x64xf32>
    %64 = tpu.matmul %61, %63, %cst_35 {dimension_numbers = #tpu.dot_dimension_numbers<[2], [1], [1], [2], [0, 0, 0, 1, 1, 2], [0], [0]>} : vector<4x5x16xbf16>, vector<4x16x64xbf16>, vector<4x5x64xf32> -> vector<4x5x64xf32>
    %cst_36 = arith.constant dense<0.000000e+00> : vector<5x64xf32>
    %65 = vector.multi_reduction <add>, %64, %cst_36 [0] : vector<4x5x64xf32> to vector<5x64xf32>
    %66 = arith.addf %5, %65 : vector<5x64xf32>
    %c0_37 = arith.constant 0 : index
    %c0_38 = arith.constant 0 : index
    %c0_39 = arith.constant 0 : index
    %67 = vector.load %arg9[%c0_37, %c0_38, %c0_39] : memref<2x1x64xf32, #tpu.memory_space<vmem>>, vector<1x1x64xf32>
    %68 = vector.shape_cast %67 : vector<1x1x64xf32> to vector<1x64xf32>
    %69 = vector.broadcast %68 : vector<1x64xf32> to vector<5x64xf32>
    %70 = arith.addf %66, %69 : vector<5x64xf32>
    %c0_40 = arith.constant 0 : index
    %c0_41 = arith.constant 0 : index
    %c0_42 = arith.constant 0 : index
    %71 = vector.load %arg10[%c0_40, %c0_41, %c0_42] : memref<2x1x64xf32, #tpu.memory_space<vmem>>, vector<1x1x64xf32>
    %72 = vector.shape_cast %71 : vector<1x1x64xf32> to vector<1x64xf32>
    %c0_43 = arith.constant 0 : index
    %c0_44 = arith.constant 0 : index
    %c0_45 = arith.constant 0 : index
    %73 = vector.load %arg11[%c0_43, %c0_44, %c0_45] : memref<2x1x64xf32, #tpu.memory_space<vmem>>, vector<1x1x64xf32>
    %74 = vector.shape_cast %73 : vector<1x1x64xf32> to vector<1x64xf32>
    %cst_46 = arith.constant dense<0.000000e+00> : vector<5xf32>
    %75 = vector.multi_reduction <add>, %70, %cst_46 [1] : vector<5x64xf32> to vector<5xf32>
    %76 = vector.shape_cast %75 : vector<5xf32> to vector<5x1xf32>
    %cst_47 = arith.constant 6.400000e+01 : f32
    %77 = vector.broadcast %cst_47 : f32 to vector<5x1xf32>
    %78 = arith.divf %76, %77 : vector<5x1xf32>
    %79 = vector.broadcast %78 : vector<5x1xf32> to vector<5x64xf32>
    %80 = arith.subf %70, %79 : vector<5x64xf32>
    %81 = arith.mulf %80, %80 : vector<5x64xf32>
    %cst_48 = arith.constant dense<0.000000e+00> : vector<5xf32>
    %82 = vector.multi_reduction <add>, %81, %cst_48 [1] : vector<5x64xf32> to vector<5xf32>
    %83 = vector.shape_cast %82 : vector<5xf32> to vector<5x1xf32>
    %cst_49 = arith.constant 6.400000e+01 : f32
    %84 = vector.broadcast %cst_49 : f32 to vector<5x1xf32>
    %85 = arith.divf %83, %84 : vector<5x1xf32>
    %cst_50 = arith.constant 9.99999996E-13 : f32
    %86 = vector.broadcast %cst_50 : f32 to vector<5x1xf32>
    %87 = arith.addf %85, %86 : vector<5x1xf32>
    %88 = math.rsqrt %87 : vector<5x1xf32>
    %89 = vector.broadcast %88 : vector<5x1xf32> to vector<5x64xf32>
    %90 = arith.mulf %80, %89 : vector<5x64xf32>
    %91 = vector.broadcast %72 : vector<1x64xf32> to vector<5x64xf32>
    %92 = arith.mulf %90, %91 : vector<5x64xf32>
    %93 = vector.broadcast %74 : vector<1x64xf32> to vector<5x64xf32>
    %94 = arith.addf %92, %93 : vector<5x64xf32>
    %95 = arith.truncf %94 : vector<5x64xf32> to vector<5x64xbf16>
    %c0_51 = arith.constant 0 : index
    %c0_52 = arith.constant 0 : index
    %c0_53 = arith.constant 0 : index
    %96 = vector.load %arg12[%c0_51, %c0_52, %c0_53] : memref<2x64x256xbf16, #tpu.memory_space<vmem>>, vector<1x64x256xbf16>
    %97 = vector.shape_cast %96 : vector<1x64x256xbf16> to vector<64x256xbf16>
    %cst_54 = arith.constant dense<0.000000e+00> : vector<5x256xf32>
    %98 = tpu.matmul %95, %97, %cst_54 {dimension_numbers = #tpu.dot_dimension_numbers<[1], [0], [0], [1], [0, 0, 1, 1], [], []>} : vector<5x64xbf16>, vector<64x256xbf16>, vector<5x256xf32> -> vector<5x256xf32>
    %c0_55 = arith.constant 0 : index
    %c0_56 = arith.constant 0 : index
    %c0_57 = arith.constant 0 : index
    %99 = vector.load %arg13[%c0_55, %c0_56, %c0_57] : memref<2x1x256xf32, #tpu.memory_space<vmem>>, vector<1x1x256xf32>
    %100 = vector.shape_cast %99 : vector<1x1x256xf32> to vector<1x256xf32>
    %101 = vector.broadcast %100 : vector<1x256xf32> to vector<5x256xf32>
    %102 = arith.addf %98, %101 : vector<5x256xf32>
    %cst_58 = arith.constant 5.000000e-01 : f32
    %103 = vector.broadcast %cst_58 : f32 to vector<5x256xf32>
    %104 = arith.mulf %103, %102 : vector<5x256xf32>
    %cst_59 = arith.constant 4.471500e-02 : f32
    %105 = vector.broadcast %cst_59 : f32 to vector<5x256xf32>
    %106 = arith.mulf %105, %102 : vector<5x256xf32>
    %107 = arith.mulf %106, %102 : vector<5x256xf32>
    %108 = arith.mulf %107, %102 : vector<5x256xf32>
    %109 = arith.addf %102, %108 : vector<5x256xf32>
    %cst_60 = arith.constant 0.797884583 : f32
    %110 = vector.broadcast %cst_60 : f32 to vector<5x256xf32>
    %111 = arith.mulf %110, %109 : vector<5x256xf32>
    %112 = math.tanh %111 : vector<5x256xf32>
    %cst_61 = arith.constant 1.000000e+00 : f32
    %113 = vector.broadcast %cst_61 : f32 to vector<5x256xf32>
    %114 = arith.addf %113, %112 : vector<5x256xf32>
    %115 = arith.mulf %104, %114 : vector<5x256xf32>
    %116 = arith.truncf %115 : vector<5x256xf32> to vector<5x256xbf16>
    %c0_62 = arith.constant 0 : index
    %c0_63 = arith.constant 0 : index
    %c0_64 = arith.constant 0 : index
    %117 = vector.load %arg14[%c0_62, %c0_63, %c0_64] : memref<2x256x64xbf16, #tpu.memory_space<vmem>>, vector<1x256x64xbf16>
    %118 = vector.shape_cast %117 : vector<1x256x64xbf16> to vector<256x64xbf16>
    %cst_65 = arith.constant dense<0.000000e+00> : vector<5x64xf32>
    %119 = tpu.matmul %116, %118, %cst_65 {dimension_numbers = #tpu.dot_dimension_numbers<[1], [0], [0], [1], [0, 0, 1, 1], [], []>} : vector<5x256xbf16>, vector<256x64xbf16>, vector<5x64xf32> -> vector<5x64xf32>
    %120 = arith.addf %70, %119 : vector<5x64xf32>
    %c0_66 = arith.constant 0 : index
    %c0_67 = arith.constant 0 : index
    %c0_68 = arith.constant 0 : index
    %121 = vector.load %arg15[%c0_66, %c0_67, %c0_68] : memref<2x1x64xf32, #tpu.memory_space<vmem>>, vector<1x1x64xf32>
    %122 = vector.shape_cast %121 : vector<1x1x64xf32> to vector<1x64xf32>
    %123 = vector.broadcast %122 : vector<1x64xf32> to vector<5x64xf32>
    %124 = arith.addf %120, %123 : vector<5x64xf32>
    %c1 = arith.constant 1 : index
    %c0_69 = arith.constant 0 : index
    %c0_70 = arith.constant 0 : index
    %125 = vector.load %arg4[%c1, %c0_69, %c0_70] : memref<2x1x64xf32, #tpu.memory_space<vmem>>, vector<1x1x64xf32>
    %126 = vector.shape_cast %125 : vector<1x1x64xf32> to vector<1x64xf32>
    %c1_71 = arith.constant 1 : index
    %c0_72 = arith.constant 0 : index
    %c0_73 = arith.constant 0 : index
    %127 = vector.load %arg5[%c1_71, %c0_72, %c0_73] : memref<2x1x64xf32, #tpu.memory_space<vmem>>, vector<1x1x64xf32>
    %128 = vector.shape_cast %127 : vector<1x1x64xf32> to vector<1x64xf32>
    %cst_74 = arith.constant dense<0.000000e+00> : vector<5xf32>
    %129 = vector.multi_reduction <add>, %124, %cst_74 [1] : vector<5x64xf32> to vector<5xf32>
    %130 = vector.shape_cast %129 : vector<5xf32> to vector<5x1xf32>
    %cst_75 = arith.constant 6.400000e+01 : f32
    %131 = vector.broadcast %cst_75 : f32 to vector<5x1xf32>
    %132 = arith.divf %130, %131 : vector<5x1xf32>
    %133 = vector.broadcast %132 : vector<5x1xf32> to vector<5x64xf32>
    %134 = arith.subf %124, %133 : vector<5x64xf32>
    %135 = arith.mulf %134, %134 : vector<5x64xf32>
    %cst_76 = arith.constant dense<0.000000e+00> : vector<5xf32>
    %136 = vector.multi_reduction <add>, %135, %cst_76 [1] : vector<5x64xf32> to vector<5xf32>
    %137 = vector.shape_cast %136 : vector<5xf32> to vector<5x1xf32>
    %cst_77 = arith.constant 6.400000e+01 : f32
    %138 = vector.broadcast %cst_77 : f32 to vector<5x1xf32>
    %139 = arith.divf %137, %138 : vector<5x1xf32>
    %cst_78 = arith.constant 9.99999996E-13 : f32
    %140 = vector.broadcast %cst_78 : f32 to vector<5x1xf32>
    %141 = arith.addf %139, %140 : vector<5x1xf32>
    %142 = math.rsqrt %141 : vector<5x1xf32>
    %143 = vector.broadcast %142 : vector<5x1xf32> to vector<5x64xf32>
    %144 = arith.mulf %134, %143 : vector<5x64xf32>
    %145 = vector.broadcast %126 : vector<1x64xf32> to vector<5x64xf32>
    %146 = arith.mulf %144, %145 : vector<5x64xf32>
    %147 = vector.broadcast %128 : vector<1x64xf32> to vector<5x64xf32>
    %148 = arith.addf %146, %147 : vector<5x64xf32>
    %149 = arith.truncf %148 : vector<5x64xf32> to vector<5x64xbf16>
    %150 = vector.shape_cast %149 : vector<5x64xbf16> to vector<1x5x64xbf16>
    %151 = vector.broadcast %150 : vector<1x5x64xbf16> to vector<4x5x64xbf16>
    %c1_79 = arith.constant 1 : index
    %c0_80 = arith.constant 0 : index
    %c0_81 = arith.constant 0 : index
    %c0_82 = arith.constant 0 : index
    %152 = vector.load %arg6[%c1_79, %c0_80, %c0_81, %c0_82] : memref<2x4x64x48xbf16, #tpu.memory_space<vmem>>, vector<1x4x64x48xbf16>
    %153 = vector.shape_cast %152 : vector<1x4x64x48xbf16> to vector<4x64x48xbf16>
    %cst_83 = arith.constant dense<0.000000e+00> : vector<4x5x48xf32>
    %154 = tpu.matmul %151, %153, %cst_83 {dimension_numbers = #tpu.dot_dimension_numbers<[2], [1], [1], [2], [0, 0, 0, 1, 1, 2], [0], [0]>} : vector<4x5x64xbf16>, vector<4x64x48xbf16>, vector<4x5x48xf32> -> vector<4x5x48xf32>
    %c1_84 = arith.constant 1 : index
    %c0_85 = arith.constant 0 : index
    %c0_86 = arith.constant 0 : index
    %c0_87 = arith.constant 0 : index
    %155 = vector.load %arg7[%c1_84, %c0_85, %c0_86, %c0_87] : memref<2x4x1x48xf32, #tpu.memory_space<vmem>>, vector<1x4x1x48xf32>
    %156 = vector.shape_cast %155 : vector<1x4x1x48xf32> to vector<4x1x48xf32>
    %157 = vector.broadcast %156 : vector<4x1x48xf32> to vector<4x5x48xf32>
    %158 = arith.addf %154, %157 : vector<4x5x48xf32>
    %159 = vector.extract_strided_slice %158 {offsets = [0, 0, 0], sizes = [4, 5, 16], strides = [1, 1, 1]} : vector<4x5x48xf32> to vector<4x5x16xf32>
    %160 = arith.truncf %159 : vector<4x5x16xf32> to vector<4x5x16xbf16>
    %161 = vector.extract_strided_slice %158 {offsets = [0, 0, 16], sizes = [4, 5, 16], strides = [1, 1, 1]} : vector<4x5x48xf32> to vector<4x5x16xf32>
    %162 = arith.truncf %161 : vector<4x5x16xf32> to vector<4x5x16xbf16>
    %163 = vector.extract_strided_slice %158 {offsets = [0, 0, 32], sizes = [4, 5, 16], strides = [1, 1, 1]} : vector<4x5x48xf32> to vector<4x5x16xf32>
    %164 = arith.truncf %163 : vector<4x5x16xf32> to vector<4x5x16xbf16>
    %cst_88 = arith.constant dense<0.000000e+00> : vector<4x5x5xf32>
    %165 = tpu.matmul %160, %162, %cst_88 {dimension_numbers = #tpu.dot_dimension_numbers<[2], [2], [1], [1], [0, 0, 0, 1, 1, 1], [0], [0]>} : vector<4x5x16xbf16>, vector<4x5x16xbf16>, vector<4x5x5xf32> -> vector<4x5x5xf32>
    %cst_89 = arith.constant 2.500000e-01 : f32
    %166 = vector.broadcast %cst_89 : f32 to vector<4x5x5xf32>
    %167 = arith.mulf %165, %166 : vector<4x5x5xf32>
    %cst_90 = arith.constant dense<0xFF800000> : vector<4x5xf32>
    %168 = vector.multi_reduction <maximumf>, %167, %cst_90 [2] : vector<4x5x5xf32> to vector<4x5xf32>
    %169 = vector.shape_cast %168 : vector<4x5xf32> to vector<4x5x1xf32>
    %170 = vector.broadcast %169 : vector<4x5x1xf32> to vector<4x5x5xf32>
    %171 = arith.subf %167, %170 : vector<4x5x5xf32>
    %172 = math.exp %171 : vector<4x5x5xf32>
    %cst_91 = arith.constant dense<0.000000e+00> : vector<4x5xf32>
    %173 = vector.multi_reduction <add>, %172, %cst_91 [2] : vector<4x5x5xf32> to vector<4x5xf32>
    %174 = vector.shape_cast %173 : vector<4x5xf32> to vector<4x5x1xf32>
    %175 = tpu.reciprocal %174 {approx = true} : vector<4x5x1xf32> -> vector<4x5x1xf32>
    %176 = vector.broadcast %175 : vector<4x5x1xf32> to vector<4x5x5xf32>
    %177 = arith.mulf %172, %176 : vector<4x5x5xf32>
    %178 = arith.truncf %177 : vector<4x5x5xf32> to vector<4x5x5xbf16>
    %cst_92 = arith.constant dense<0.000000e+00> : vector<4x5x16xf32>
    %179 = tpu.matmul %178, %164, %cst_92 {dimension_numbers = #tpu.dot_dimension_numbers<[2], [1], [1], [2], [0, 0, 0, 1, 1, 2], [0], [0]>} : vector<4x5x5xbf16>, vector<4x5x16xbf16>, vector<4x5x16xf32> -> vector<4x5x16xf32>
    %180 = arith.truncf %179 : vector<4x5x16xf32> to vector<4x5x16xbf16>
    %c1_93 = arith.constant 1 : index
    %c0_94 = arith.constant 0 : index
    %c0_95 = arith.constant 0 : index
    %c0_96 = arith.constant 0 : index
    %181 = vector.load %arg8[%c1_93, %c0_94, %c0_95, %c0_96] : memref<2x4x16x64xbf16, #tpu.memory_space<vmem>>, vector<1x4x16x64xbf16>
    %182 = vector.shape_cast %181 : vector<1x4x16x64xbf16> to vector<4x16x64xbf16>
    %cst_97 = arith.constant dense<0.000000e+00> : vector<4x5x64xf32>
    %183 = tpu.matmul %180, %182, %cst_97 {dimension_numbers = #tpu.dot_dimension_numbers<[2], [1], [1], [2], [0, 0, 0, 1, 1, 2], [0], [0]>} : vector<4x5x16xbf16>, vector<4x16x64xbf16>, vector<4x5x64xf32> -> vector<4x5x64xf32>
    %cst_98 = arith.constant dense<0.000000e+00> : vector<5x64xf32>
    %184 = vector.multi_reduction <add>, %183, %cst_98 [0] : vector<4x5x64xf32> to vector<5x64xf32>
    %185 = arith.addf %124, %184 : vector<5x64xf32>
    %c1_99 = arith.constant 1 : index
    %c0_100 = arith.constant 0 : index
    %c0_101 = arith.constant 0 : index
    %186 = vector.load %arg9[%c1_99, %c0_100, %c0_101] : memref<2x1x64xf32, #tpu.memory_space<vmem>>, vector<1x1x64xf32>
    %187 = vector.shape_cast %186 : vector<1x1x64xf32> to vector<1x64xf32>
    %188 = vector.broadcast %187 : vector<1x64xf32> to vector<5x64xf32>
    %189 = arith.addf %185, %188 : vector<5x64xf32>
    %c1_102 = arith.constant 1 : index
    %c0_103 = arith.constant 0 : index
    %c0_104 = arith.constant 0 : index
    %190 = vector.load %arg10[%c1_102, %c0_103, %c0_104] : memref<2x1x64xf32, #tpu.memory_space<vmem>>, vector<1x1x64xf32>
    %191 = vector.shape_cast %190 : vector<1x1x64xf32> to vector<1x64xf32>
    %c1_105 = arith.constant 1 : index
    %c0_106 = arith.constant 0 : index
    %c0_107 = arith.constant 0 : index
    %192 = vector.load %arg11[%c1_105, %c0_106, %c0_107] : memref<2x1x64xf32, #tpu.memory_space<vmem>>, vector<1x1x64xf32>
    %193 = vector.shape_cast %192 : vector<1x1x64xf32> to vector<1x64xf32>
    %cst_108 = arith.constant dense<0.000000e+00> : vector<5xf32>
    %194 = vector.multi_reduction <add>, %189, %cst_108 [1] : vector<5x64xf32> to vector<5xf32>
    %195 = vector.shape_cast %194 : vector<5xf32> to vector<5x1xf32>
    %cst_109 = arith.constant 6.400000e+01 : f32
    %196 = vector.broadcast %cst_109 : f32 to vector<5x1xf32>
    %197 = arith.divf %195, %196 : vector<5x1xf32>
    %198 = vector.broadcast %197 : vector<5x1xf32> to vector<5x64xf32>
    %199 = arith.subf %189, %198 : vector<5x64xf32>
    %200 = arith.mulf %199, %199 : vector<5x64xf32>
    %cst_110 = arith.constant dense<0.000000e+00> : vector<5xf32>
    %201 = vector.multi_reduction <add>, %200, %cst_110 [1] : vector<5x64xf32> to vector<5xf32>
    %202 = vector.shape_cast %201 : vector<5xf32> to vector<5x1xf32>
    %cst_111 = arith.constant 6.400000e+01 : f32
    %203 = vector.broadcast %cst_111 : f32 to vector<5x1xf32>
    %204 = arith.divf %202, %203 : vector<5x1xf32>
    %cst_112 = arith.constant 9.99999996E-13 : f32
    %205 = vector.broadcast %cst_112 : f32 to vector<5x1xf32>
    %206 = arith.addf %204, %205 : vector<5x1xf32>
    %207 = math.rsqrt %206 : vector<5x1xf32>
    %208 = vector.broadcast %207 : vector<5x1xf32> to vector<5x64xf32>
    %209 = arith.mulf %199, %208 : vector<5x64xf32>
    %210 = vector.broadcast %191 : vector<1x64xf32> to vector<5x64xf32>
    %211 = arith.mulf %209, %210 : vector<5x64xf32>
    %212 = vector.broadcast %193 : vector<1x64xf32> to vector<5x64xf32>
    %213 = arith.addf %211, %212 : vector<5x64xf32>
    %214 = arith.truncf %213 : vector<5x64xf32> to vector<5x64xbf16>
    %c1_113 = arith.constant 1 : index
    %c0_114 = arith.constant 0 : index
    %c0_115 = arith.constant 0 : index
    %215 = vector.load %arg12[%c1_113, %c0_114, %c0_115] : memref<2x64x256xbf16, #tpu.memory_space<vmem>>, vector<1x64x256xbf16>
    %216 = vector.shape_cast %215 : vector<1x64x256xbf16> to vector<64x256xbf16>
    %cst_116 = arith.constant dense<0.000000e+00> : vector<5x256xf32>
    %217 = tpu.matmul %214, %216, %cst_116 {dimension_numbers = #tpu.dot_dimension_numbers<[1], [0], [0], [1], [0, 0, 1, 1], [], []>} : vector<5x64xbf16>, vector<64x256xbf16>, vector<5x256xf32> -> vector<5x256xf32>
    %c1_117 = arith.constant 1 : index
    %c0_118 = arith.constant 0 : index
    %c0_119 = arith.constant 0 : index
    %218 = vector.load %arg13[%c1_117, %c0_118, %c0_119] : memref<2x1x256xf32, #tpu.memory_space<vmem>>, vector<1x1x256xf32>
    %219 = vector.shape_cast %218 : vector<1x1x256xf32> to vector<1x256xf32>
    %220 = vector.broadcast %219 : vector<1x256xf32> to vector<5x256xf32>
    %221 = arith.addf %217, %220 : vector<5x256xf32>
    %cst_120 = arith.constant 5.000000e-01 : f32
    %222 = vector.broadcast %cst_120 : f32 to vector<5x256xf32>
    %223 = arith.mulf %222, %221 : vector<5x256xf32>
    %cst_121 = arith.constant 4.471500e-02 : f32
    %224 = vector.broadcast %cst_121 : f32 to vector<5x256xf32>
    %225 = arith.mulf %224, %221 : vector<5x256xf32>
    %226 = arith.mulf %225, %221 : vector<5x256xf32>
    %227 = arith.mulf %226, %221 : vector<5x256xf32>
    %228 = arith.addf %221, %227 : vector<5x256xf32>
    %cst_122 = arith.constant 0.797884583 : f32
    %229 = vector.broadcast %cst_122 : f32 to vector<5x256xf32>
    %230 = arith.mulf %229, %228 : vector<5x256xf32>
    %231 = math.tanh %230 : vector<5x256xf32>
    %cst_123 = arith.constant 1.000000e+00 : f32
    %232 = vector.broadcast %cst_123 : f32 to vector<5x256xf32>
    %233 = arith.addf %232, %231 : vector<5x256xf32>
    %234 = arith.mulf %223, %233 : vector<5x256xf32>
    %235 = arith.truncf %234 : vector<5x256xf32> to vector<5x256xbf16>
    %c1_124 = arith.constant 1 : index
    %c0_125 = arith.constant 0 : index
    %c0_126 = arith.constant 0 : index
    %236 = vector.load %arg14[%c1_124, %c0_125, %c0_126] : memref<2x256x64xbf16, #tpu.memory_space<vmem>>, vector<1x256x64xbf16>
    %237 = vector.shape_cast %236 : vector<1x256x64xbf16> to vector<256x64xbf16>
    %cst_127 = arith.constant dense<0.000000e+00> : vector<5x64xf32>
    %238 = tpu.matmul %235, %237, %cst_127 {dimension_numbers = #tpu.dot_dimension_numbers<[1], [0], [0], [1], [0, 0, 1, 1], [], []>} : vector<5x256xbf16>, vector<256x64xbf16>, vector<5x64xf32> -> vector<5x64xf32>
    %239 = arith.addf %189, %238 : vector<5x64xf32>
    %c1_128 = arith.constant 1 : index
    %c0_129 = arith.constant 0 : index
    %c0_130 = arith.constant 0 : index
    %240 = vector.load %arg15[%c1_128, %c0_129, %c0_130] : memref<2x1x64xf32, #tpu.memory_space<vmem>>, vector<1x1x64xf32>
    %241 = vector.shape_cast %240 : vector<1x1x64xf32> to vector<1x64xf32>
    %242 = vector.broadcast %241 : vector<1x64xf32> to vector<5x64xf32>
    %243 = arith.addf %239, %242 : vector<5x64xf32>
    %244 = vector.extract_strided_slice %243 {offsets = [0, 0], sizes = [1, 64], strides = [1, 1]} : vector<5x64xf32> to vector<1x64xf32>
    %c0_131 = arith.constant 0 : index
    %c0_132 = arith.constant 0 : index
    %245 = vector.load %arg16[%c0_131, %c0_132] : memref<1x64xf32, #tpu.memory_space<vmem>>, vector<1x64xf32>
    %c0_133 = arith.constant 0 : index
    %c0_134 = arith.constant 0 : index
    %246 = vector.load %arg17[%c0_133, %c0_134] : memref<1x64xf32, #tpu.memory_space<vmem>>, vector<1x64xf32>
    %cst_135 = arith.constant dense<0.000000e+00> : vector<1xf32>
    %247 = vector.multi_reduction <add>, %244, %cst_135 [1] : vector<1x64xf32> to vector<1xf32>
    %248 = vector.shape_cast %247 : vector<1xf32> to vector<1x1xf32>
    %cst_136 = arith.constant 6.400000e+01 : f32
    %249 = vector.broadcast %cst_136 : f32 to vector<1x1xf32>
    %250 = arith.divf %248, %249 : vector<1x1xf32>
    %251 = vector.broadcast %250 : vector<1x1xf32> to vector<1x64xf32>
    %252 = arith.subf %244, %251 : vector<1x64xf32>
    %253 = arith.mulf %252, %252 : vector<1x64xf32>
    %cst_137 = arith.constant dense<0.000000e+00> : vector<1xf32>
    %254 = vector.multi_reduction <add>, %253, %cst_137 [1] : vector<1x64xf32> to vector<1xf32>
    %255 = vector.shape_cast %254 : vector<1xf32> to vector<1x1xf32>
    %cst_138 = arith.constant 6.400000e+01 : f32
    %256 = vector.broadcast %cst_138 : f32 to vector<1x1xf32>
    %257 = arith.divf %255, %256 : vector<1x1xf32>
    %cst_139 = arith.constant 9.99999996E-13 : f32
    %258 = vector.broadcast %cst_139 : f32 to vector<1x1xf32>
    %259 = arith.addf %257, %258 : vector<1x1xf32>
    %260 = math.rsqrt %259 : vector<1x1xf32>
    %261 = vector.broadcast %260 : vector<1x1xf32> to vector<1x64xf32>
    %262 = arith.mulf %252, %261 : vector<1x64xf32>
    %263 = arith.mulf %262, %245 : vector<1x64xf32>
    %264 = arith.addf %263, %246 : vector<1x64xf32>
    %cst_140 = arith.constant 0.000000e+00 : f32
    %265 = vector.broadcast %cst_140 : f32 to vector<1x64xf32>
    %266 = tpu.concatenate %264, %265 in 1 : vector<1x64xf32>, vector<1x64xf32> -> vector<1x128xf32>
    %c0_141 = arith.constant 0 : index
    %c0_142 = arith.constant 0 : index
    %c0_143 = arith.constant 0 : index
    %267 = vector.load %arg20[%c0_141, %c0_142, %c0_143] : memref<1x1x128xf32, #tpu.memory_space<vmem>>, vector<1x1x128xf32>
    %268 = vector.shape_cast %267 : vector<1x1x128xf32> to vector<1x128xf32>
    %269 = vector.shape_cast %266 : vector<1x128xf32> to vector<1x1x128xf32>
    tpu.vector_store %arg20[%c0_141, %c0_142, %c0_143], %269 {strides = array<i32>} : memref<1x1x128xf32, #tpu.memory_space<vmem>>, vector<1x1x128xf32>,
    %270 = arith.truncf %264 : vector<1x64xf32> to vector<1x64xbf16>
    %c0_144 = arith.constant 0 : index
    %c0_145 = arith.constant 0 : index
    %271 = vector.load %arg18[%c0_144, %c0_145] : memref<64x128xbf16, #tpu.memory_space<vmem>>, vector<64x128xbf16>
    %cst_146 = arith.constant dense<0.000000e+00> : vector<1x128xf32>
    %272 = tpu.matmul %270, %271, %cst_146 {dimension_numbers = #tpu.dot_dimension_numbers<[1], [0], [0], [1], [0, 0, 1, 1], [], []>} : vector<1x64xbf16>, vector<64x128xbf16>, vector<1x128xf32> -> vector<1x128xf32>
    %c0_147 = arith.constant 0 : index
    %c0_148 = arith.constant 0 : index
    %273 = vector.load %arg19[%c0_147, %c0_148] : memref<1x128xf32, #tpu.memory_space<vmem>>, vector<1x128xf32>
    %274 = arith.addf %272, %273 : vector<1x128xf32>
    %c0_149 = arith.constant 0 : index
    %c0_150 = arith.constant 0 : index
    %c0_151 = arith.constant 0 : index
    %275 = vector.load %arg21[%c0_149, %c0_150, %c0_151] : memref<1x1x128xf32, #tpu.memory_space<vmem>>, vector<1x1x128xf32>
    %276 = vector.shape_cast %275 : vector<1x1x128xf32> to vector<1x128xf32>
    %277 = vector.shape_cast %274 : vector<1x128xf32> to vector<1x1x128xf32>
    tpu.vector_store %arg21[%c0_149, %c0_150, %c0_151], %277 {strides = array<i32>} : memref<1x1x128xf32, #tpu.memory_space<vmem>>, vector<1x1x128xf32>,
    return
  }
  func.func @transform_0(%arg0: i32) -> (i32, i32, i32) {
    %c0_i32 = arith.constant 0 : i32
    %c0_i32_0 = arith.constant 0 : i32
    %c0_i32_1 = arith.constant 0 : i32
    return %arg0, %c0_i32, %c0_i32_0 : i32, i32, i32
  }
  func.func @transform_1(%arg0: i32) -> (i32, i32) {
    %c0_i32 = arith.constant 0 : i32
    %c0_i32_0 = arith.constant 0 : i32
    %c0_i32_1 = arith.constant 0 : i32
    return %c0_i32, %c0_i32_0 : i32, i32
  }
  func.func @transform_2(%arg0: i32) -> (i32, i32) {
    %c0_i32 = arith.constant 0 : i32
    %c0_i32_0 = arith.constant 0 : i32
    %c0_i32_1 = arith.constant 0 : i32
    return %c0_i32, %c0_i32_0 : i32, i32
  }
  func.func @transform_3(%arg0: i32) -> (i32, i32, i32) {
    %c0_i32 = arith.constant 0 : i32
    %c0_i32_0 = arith.constant 0 : i32
    %c0_i32_1 = arith.constant 0 : i32
    %c0_i32_2 = arith.constant 0 : i32
    return %c0_i32, %c0_i32_0, %c0_i32_1 : i32, i32, i32
  }
  func.func @transform_4(%arg0: i32) -> (i32, i32, i32) {
    %c0_i32 = arith.constant 0 : i32
    %c0_i32_0 = arith.constant 0 : i32
    %c0_i32_1 = arith.constant 0 : i32
    %c0_i32_2 = arith.constant 0 : i32
    return %c0_i32, %c0_i32_0, %c0_i32_1 : i32, i32, i32
  }
  func.func @transform_5(%arg0: i32) -> (i32, i32, i32, i32) {
    %c0_i32 = arith.constant 0 : i32
    %c0_i32_0 = arith.constant 0 : i32
    %c0_i32_1 = arith.constant 0 : i32
    %c0_i32_2 = arith.constant 0 : i32
    %c0_i32_3 = arith.constant 0 : i32
    return %c0_i32, %c0_i32_0, %c0_i32_1, %c0_i32_2 : i32, i32, i32, i32
  }
  func.func @transform_6(%arg0: i32) -> (i32, i32, i32, i32) {
    %c0_i32 = arith.constant 0 : i32
    %c0_i32_0 = arith.constant 0 : i32
    %c0_i32_1 = arith.constant 0 : i32
    %c0_i32_2 = arith.constant 0 : i32
    %c0_i32_3 = arith.constant 0 : i32
    return %c0_i32, %c0_i32_0, %c0_i32_1, %c0_i32_2 : i32, i32, i32, i32
  }
  func.func @transform_7(%arg0: i32) -> (i32, i32, i32, i32) {
    %c0_i32 = arith.constant 0 : i32
    %c0_i32_0 = arith.constant 0 : i32
    %c0_i32_1 = arith.constant 0 : i32
    %c0_i32_2 = arith.constant 0 : i32
    %c0_i32_3 = arith.constant 0 : i32
    return %c0_i32, %c0_i32_0, %c0_i32_1, %c0_i32_2 : i32, i32, i32, i32
  }
  func.func @transform_8(%arg0: i32) -> (i32, i32, i32) {
    %c0_i32 = arith.constant 0 : i32
    %c0_i32_0 = arith.constant 0 : i32
    %c0_i32_1 = arith.constant 0 : i32
    %c0_i32_2 = arith.constant 0 : i32
    return %c0_i32, %c0_i32_0, %c0_i32_1 : i32, i32, i32
  }
  func.func @transform_9(%arg0: i32) -> (i32, i32, i32) {
    %c0_i32 = arith.constant 0 : i32
    %c0_i32_0 = arith.constant 0 : i32
    %c0_i32_1 = arith.constant 0 : i32
    %c0_i32_2 = arith.constant 0 : i32
    return %c0_i32, %c0_i32_0, %c0_i32_1 : i32, i32, i32
  }
  func.func @transform_10(%arg0: i32) -> (i32, i32, i32) {
    %c0_i32 = arith.constant 0 : i32
    %c0_i32_0 = arith.constant 0 : i32
    %c0_i32_1 = arith.constant 0 : i32
    %c0_i32_2 = arith.constant 0 : i32
    return %c0_i32, %c0_i32_0, %c0_i32_1 : i32, i32, i32
  }
  func.func @transform_11(%arg0: i32) -> (i32, i32, i32) {
    %c0_i32 = arith.constant 0 : i32
    %c0_i32_0 = arith.constant 0 : i32
    %c0_i32_1 = arith.constant 0 : i32
    %c0_i32_2 = arith.constant 0 : i32
    return %c0_i32, %c0_i32_0, %c0_i32_1 : i32, i32, i32
  }
  func.func @transform_12(%arg0: i32) -> (i32, i32, i32) {
    %c0_i32 = arith.constant 0 : i32
    %c0_i32_0 = arith.constant 0 : i32
    %c0_i32_1 = arith.constant 0 : i32
    %c0_i32_2 = arith.constant 0 : i32
    return %c0_i32, %c0_i32_0, %c0_i32_1 : i32, i32, i32
  }
  func.func @transform_13(%arg0: i32) -> (i32, i32, i32) {
    %c0_i32 = arith.constant 0 : i32
    %c0_i32_0 = arith.constant 0 : i32
    %c0_i32_1 = arith.constant 0 : i32
    %c0_i32_2 = arith.constant 0 : i32
    return %c0_i32, %c0_i32_0, %c0_i32_1 : i32, i32, i32
  }
  func.func @transform_14(%arg0: i32) -> (i32, i32, i32) {
    %c0_i32 = arith.constant 0 : i32
    %c0_i32_0 = arith.constant 0 : i32
    %c0_i32_1 = arith.constant 0 : i32
    %c0_i32_2 = arith.constant 0 : i32
    return %c0_i32, %c0_i32_0, %c0_i32_1 : i32, i32, i32
  }
  func.func @transform_15(%arg0: i32) -> (i32, i32) {
    %c0_i32 = arith.constant 0 : i32
    %c0_i32_0 = arith.constant 0 : i32
    %c0_i32_1 = arith.constant 0 : i32
    return %c0_i32, %c0_i32_0 : i32, i32
  }
  func.func @transform_16(%arg0: i32) -> (i32, i32) {
    %c0_i32 = arith.constant 0 : i32
    %c0_i32_0 = arith.constant 0 : i32
    %c0_i32_1 = arith.constant 0 : i32
    return %c0_i32, %c0_i32_0 : i32, i32
  }
  func.func @transform_17(%arg0: i32) -> (i32, i32) {
    %c0_i32 = arith.constant 0 : i32
    %c0_i32_0 = arith.constant 0 : i32
    %c0_i32_1 = arith.constant 0 : i32
    return %c0_i32, %c0_i32_0 : i32, i32
  }
  func.func @transform_18(%arg0: i32) -> (i32, i32) {
    %c0_i32 = arith.constant 0 : i32
    %c0_i32_0 = arith.constant 0 : i32
    %c0_i32_1 = arith.constant 0 : i32
    return %c0_i32, %c0_i32_0 : i32, i32
  }
  func.func @transform_19(%arg0: i32) -> (i32, i32, i32) {
    %c0_i32 = arith.constant 0 : i32
    %c0_i32_0 = arith.constant 0 : i32
    %c0_i32_1 = arith.constant 0 : i32
    return %arg0, %c0_i32, %c0_i32_0 : i32, i32, i32
  }
  func.func @transform_20(%arg0: i32) -> (i32, i32, i32) {
    %c0_i32 = arith.constant 0 : i32
    %c0_i32_0 = arith.constant 0 : i32
    %c0_i32_1 = arith.constant 0 : i32
    return %arg0, %c0_i32, %c0_i32_0 : i32, i32, i32
  }
}

</mosaic_0001>

<llo_original>
// kernel: vit_forward.1
$region0: #{vit_forward.1}
  #allocation0 [shape = 'u32[]', space=smem, size = 0x4, offset = 0x4, fixed_abs, tag = 'smem constant byte address 0x4 - core index']
  #allocation1 [shape = 'u32[72,128]{1,0:T(1,128)}', space=vmem, size = 0x9000, scoped, tag = 'internal scratch']
  %s0 = inlined_call_operand.vmem [shape: bf16[2,5,768], index: 0, kind: input, shape index: {}]
  %s1 = inlined_call_operand.vmem [shape: f32[5,64], index: 1, kind: input, shape index: {}]
  %s2 = inlined_call_operand.vmem [shape: bf16[768,64], index: 2, kind: input, shape index: {}]
  %s3 = inlined_call_operand.vmem [shape: f32[2,1,64], index: 3, kind: input, shape index: {}]
  %s4 = inlined_call_operand.vmem [shape: f32[2,1,64], index: 4, kind: input, shape index: {}]
  %s5 = inlined_call_operand.vmem [shape: bf16[2,4,64,48], index: 5, kind: input, shape index: {}]
  %s6 = inlined_call_operand.vmem [shape: f32[2,4,1,48], index: 6, kind: input, shape index: {}]
  %s7 = inlined_call_operand.vmem [shape: bf16[2,4,16,64], index: 7, kind: input, shape index: {}]
  %s8 = inlined_call_operand.vmem [shape: f32[2,1,64], index: 8, kind: input, shape index: {}]
  %s9 = inlined_call_operand.vmem [shape: f32[2,1,64], index: 9, kind: input, shape index: {}]
  %s10 = inlined_call_operand.vmem [shape: f32[2,1,64], index: 10, kind: input, shape index: {}]
  %s11 = inlined_call_operand.vmem [shape: bf16[2,64,256], index: 11, kind: input, shape index: {}]
  %s12 = inlined_call_operand.vmem [shape: f32[2,1,256], index: 12, kind: input, shape index: {}]
  %s13 = inlined_call_operand.vmem [shape: bf16[2,256,64], index: 13, kind: input, shape index: {}]
  %s14 = inlined_call_operand.vmem [shape: f32[2,1,64], index: 14, kind: input, shape index: {}]
  %s15 = inlined_call_operand.vmem [shape: f32[1,64], index: 15, kind: input, shape index: {}]
  %s16 = inlined_call_operand.vmem [shape: f32[1,64], index: 16, kind: input, shape index: {}]
  %s17 = inlined_call_operand.vmem [shape: bf16[64,128], index: 17, kind: input, shape index: {}]
  %s18 = inlined_call_operand.vmem [shape: f32[1,128], index: 18, kind: input, shape index: {}]
  %s19 = inlined_call_operand.hbm [shape: f32[2,1,128], index: 19, kind: output, shape index: {0}]
  %s20 = inlined_call_operand.hbm [shape: f32[2,1,128], index: 20, kind: output, shape index: {1}]
  %21 = xla_tuple %s19, %s20
  %s22 = sld [smem:[#allocation0]]
  $region117: #{vit_forward.1} parent=0
    _
  %s24 = ssub.s32 1, %s22
  %s25 = scalar_select 0, %s24, %s22
  $region1: #{vit_forward.1} parent=0
    #allocation2 [shape = 'u8[1024]{0}', space=vmem, size = 0x400, scoped, tag = 'output window, operand 0']
    #allocation3 [shape = 's32[2]{0}', space=sflag, size = 0x8, scoped, tag = 'scoped memory for vit_forward.1']
    #allocation4 [shape = 'u8[1024]{0}', space=vmem, size = 0x400, scoped, tag = 'output window, operand 1']
    #allocation5 [shape = 's32[2]{0}', space=sflag, size = 0x8, scoped, tag = 'scoped memory for vit_forward.1']
    %26 = vsyncpa [#allocation3], 0
    %s27 = scalar_lea.sflag [#allocation3], 1
    %28 = vsyncpa %s27, 0
    %29 = vsyncpa [#allocation5], 0
    %s30 = scalar_lea.sflag [#allocation5], 1
    %31 = vsyncpa %s30, 0
    loop: start=0, step=1, limit=4
    $region2: #{vit_forward.1} parent=1 // loop_pre_header
      _
    $region3: #{vit_forward.1} parent=1 // loop_header
      %s33 = sphi 0, %s37
      %p34 = scmp.ge.s32.totalorder %s33, 4
      %s43 = sphi 0, %s45
      %s46 = sphi 0, %s43
      %s47 = sphi 0, %s46
      %s63 = sphi 0, %s47
      %s67 = sphi 0, %s67
      %s69 = sphi 0, %s67
      %s70 = sphi 0, %s69
      %s84 = sphi 0, %s70
      %s88 = sphi 0, %s88
      %s90 = sphi 0, %s88
      %s91 = sphi 0, %s90
      %s105 = sphi 0, %s91
      %s109 = sphi 0, %s109
      %s111 = sphi 0, %s109
      %s112 = sphi 0, %s111
      %s126 = sphi 0, %s112
      %s130 = sphi 0, %s130
      %s132 = sphi 0, %s130
      %s133 = sphi 0, %s132
      %s147 = sphi 0, %s133
      %s151 = sphi 0, %s151
      %s153 = sphi 0, %s151
      %s154 = sphi 0, %s153
      %s168 = sphi 0, %s154
      %s172 = sphi 0, %s172
      %s174 = sphi 0, %s172
      %s175 = sphi 0, %s174
      %s189 = sphi 0, %s175
      %s193 = sphi 0, %s193
      %s195 = sphi 0, %s193
      %s196 = sphi 0, %s195
      %s210 = sphi 0, %s196
      %s214 = sphi 0, %s214
      %s216 = sphi 0, %s214
      %s217 = sphi 0, %s216
      %s231 = sphi 0, %s217
      %s235 = sphi 0, %s235
      %s237 = sphi 0, %s235
      %s238 = sphi 0, %s237
      %s252 = sphi 0, %s238
      %s256 = sphi 0, %s256
      %s258 = sphi 0, %s256
      %s259 = sphi 0, %s258
      %s273 = sphi 0, %s259
      %s277 = sphi 0, %s277
      %s279 = sphi 0, %s277
      %s280 = sphi 0, %s279
      %s294 = sphi 0, %s280
      %s298 = sphi 0, %s298
      %s300 = sphi 0, %s298
      %s301 = sphi 0, %s300
      %s315 = sphi 0, %s301
      %s319 = sphi 0, %s319
      %s321 = sphi 0, %s319
      %s322 = sphi 0, %s321
      %s336 = sphi 0, %s322
      %s340 = sphi 0, %s340
      %s342 = sphi 0, %s340
      %s343 = sphi 0, %s342
      %s357 = sphi 0, %s343
      %s361 = sphi 0, %s361
      %s363 = sphi 0, %s361
      %s364 = sphi 0, %s363
      %s378 = sphi 0, %s364
      %s382 = sphi 0, %s382
      %s384 = sphi 0, %s382
      %s385 = sphi 0, %s384
      %s399 = sphi 0, %s385
      %s403 = sphi 0, %s403
      %s405 = sphi 0, %s403
      %s406 = sphi 0, %s405
      %s420 = sphi 0, %s406
      %s424 = sphi 0, %s424
      %s426 = sphi 0, %s424
      %s427 = sphi 0, %s426
      %s441 = sphi 0, %s427
      %s447 = sphi 0, %s449
      %s450 = sphi 0, %s447
      %s451 = sphi 0, %s450
      %s467 = sphi 0, %s451
      %s473 = sphi 0, %s475
      %s476 = sphi 0, %s473
      %s477 = sphi 0, %s476
      %s493 = sphi 0, %s477
    $region4: #{vit_forward.1} parent=1 // loop_header_branch
      %36 = sbr.rel (%p34) target = $region8
    $region5: #{vit_forward.1} parent=1 // loop_body
      %s38 = ssub.s32 %s33, 1
      %s39 = ssub.s32 %s33, 2
      %s40 = sadd.s32 %s33, 1
      %s41 = ssub.s32 %s33, %s40
      %p42 = scmp.eq.s32.totalorder %s41, 0
      %s44 = sadd.s32 %s43, 1
      %s45 = scalar_select %p42, %s43, %s44
      %p48 = pneg %p42
      %p49 = scmp.eq.s32.totalorder %s33, 1
      %p50 = por %p48, %p49
      %p51 = scmp.ne.s32.totalorder %s43, %s46
      %p52 = scmp.eq.s32.totalorder %s33, 0
      %p53 = por %p51, %p52
      %p54 = scmp.ne.s32.totalorder %s43, %s46
      %p55 = scmp.eq.s32.totalorder %s38, 1
      %p56 = por %p54, %p55
      %p57 = scmp.ne.s32.totalorder %s46, %s47
      %p58 = scmp.eq.s32.totalorder %s38, 0
      %p59 = por %p57, %p58
      %p60 = scmp.ne.s32.totalorder %s46, %s47
      %p61 = scmp.eq.s32.totalorder %s39, 1
      %p62 = por %p60, %p61
      %p64 = scmp.ne.s32.totalorder %s47, %s63
      %p65 = scmp.eq.s32.totalorder %s39, 0
      %p66 = por %p64, %p65
      %s68 = sadd.s32 %s67, 1
      %p71 = scmp.eq.s32.totalorder %s33, 1
      %p72 = scmp.ne.s32.totalorder %s67, %s69
      %p73 = scmp.eq.s32.totalorder %s33, 0
      %p74 = por %p72, %p73
      %p75 = scmp.ne.s32.totalorder %s67, %s69
      %p76 = scmp.eq.s32.totalorder %s38, 1
      %p77 = por %p75, %p76
      %p78 = scmp.ne.s32.totalorder %s69, %s70
      %p79 = scmp.eq.s32.totalorder %s38, 0
      %p80 = por %p78, %p79
      %p81 = scmp.ne.s32.totalorder %s69, %s70
      %p82 = scmp.eq.s32.totalorder %s39, 1
      %p83 = por %p81, %p82
      %p85 = scmp.ne.s32.totalorder %s70, %s84
      %p86 = scmp.eq.s32.totalorder %s39, 0
      %p87 = por %p85, %p86
      %s89 = sadd.s32 %s88, 1
      %p92 = scmp.eq.s32.totalorder %s33, 1
      %p93 = scmp.ne.s32.totalorder %s88, %s90
      %p94 = scmp.eq.s32.totalorder %s33, 0
      %p95 = por %p93, %p94
      %p96 = scmp.ne.s32.totalorder %s88, %s90
      %p97 = scmp.eq.s32.totalorder %s38, 1
      %p98 = por %p96, %p97
      %p99 = scmp.ne.s32.totalorder %s90, %s91
      %p100 = scmp.eq.s32.totalorder %s38, 0
      %p101 = por %p99, %p100
      %p102 = scmp.ne.s32.totalorder %s90, %s91
      %p103 = scmp.eq.s32.totalorder %s39, 1
      %p104 = por %p102, %p103
      %p106 = scmp.ne.s32.totalorder %s91, %s105
      %p107 = scmp.eq.s32.totalorder %s39, 0
      %p108 = por %p106, %p107
      %s110 = sadd.s32 %s109, 1
      %p113 = scmp.eq.s32.totalorder %s33, 1
      %p114 = scmp.ne.s32.totalorder %s109, %s111
      %p115 = scmp.eq.s32.totalorder %s33, 0
      %p116 = por %p114, %p115
      %p117 = scmp.ne.s32.totalorder %s109, %s111
      %p118 = scmp.eq.s32.totalorder %s38, 1
      %p119 = por %p117, %p118
      %p120 = scmp.ne.s32.totalorder %s111, %s112
      %p121 = scmp.eq.s32.totalorder %s38, 0
      %p122 = por %p120, %p121
      %p123 = scmp.ne.s32.totalorder %s111, %s112
      %p124 = scmp.eq.s32.totalorder %s39, 1
      %p125 = por %p123, %p124
      %p127 = scmp.ne.s32.totalorder %s112, %s126
      %p128 = scmp.eq.s32.totalorder %s39, 0
      %p129 = por %p127, %p128
      %s131 = sadd.s32 %s130, 1
      %p134 = scmp.eq.s32.totalorder %s33, 1
      %p135 = scmp.ne.s32.totalorder %s130, %s132
      %p136 = scmp.eq.s32.totalorder %s33, 0
      %p137 = por %p135, %p136
      %p138 = scmp.ne.s32.totalorder %s130, %s132
      %p139 = scmp.eq.s32.totalorder %s38, 1
      %p140 = por %p138, %p139
      %p141 = scmp.ne.s32.totalorder %s132, %s133
      %p142 = scmp.eq.s32.totalorder %s38, 0
      %p143 = por %p141, %p142
      %p144 = scmp.ne.s32.totalorder %s132, %s133
      %p145 = scmp.eq.s32.totalorder %s39, 1
      %p146 = por %p144, %p145
      %p148 = scmp.ne.s32.totalorder %s133, %s147
      %p149 = scmp.eq.s32.totalorder %s39, 0
      %p150 = por %p148, %p149
      %s152 = sadd.s32 %s151, 1
      %p155 = scmp.eq.s32.totalorder %s33, 1
      %p156 = scmp.ne.s32.totalorder %s151, %s153
      %p157 = scmp.eq.s32.totalorder %s33, 0
      %p158 = por %p156, %p157
      %p159 = scmp.ne.s32.totalorder %s151, %s153
      %p160 = scmp.eq.s32.totalorder %s38, 1
      %p161 = por %p159, %p160
      %p162 = scmp.ne.s32.totalorder %s153, %s154
      %p163 = scmp.eq.s32.totalorder %s38, 0
      %p164 = por %p162, %p163
      %p165 = scmp.ne.s32.totalorder %s153, %s154
      %p166 = scmp.eq.s32.totalorder %s39, 1
      %p167 = por %p165, %p166
      %p169 = scmp.ne.s32.totalorder %s154, %s168
      %p170 = scmp.eq.s32.totalorder %s39, 0
      %p171 = por %p169, %p170
      %s173 = sadd.s32 %s172, 1
      %p176 = scmp.eq.s32.totalorder %s33, 1
      %p177 = scmp.ne.s32.totalorder %s172, %s174
      %p178 = scmp.eq.s32.totalorder %s33, 0
      %p179 = por %p177, %p178
      %p180 = scmp.ne.s32.totalorder %s172, %s174
      %p181 = scmp.eq.s32.totalorder %s38, 1
      %p182 = por %p180, %p181
      %p183 = scmp.ne.s32.totalorder %s174, %s175
      %p184 = scmp.eq.s32.totalorder %s38, 0
      %p185 = por %p183, %p184
      %p186 = scmp.ne.s32.totalorder %s174, %s175
      %p187 = scmp.eq.s32.totalorder %s39, 1
      %p188 = por %p186, %p187
      %p190 = scmp.ne.s32.totalorder %s175, %s189
      %p191 = scmp.eq.s32.totalorder %s39, 0
      %p192 = por %p190, %p191
      %s194 = sadd.s32 %s193, 1
      %p197 = scmp.eq.s32.totalorder %s33, 1
      %p198 = scmp.ne.s32.totalorder %s193, %s195
      %p199 = scmp.eq.s32.totalorder %s33, 0
      %p200 = por %p198, %p199
      %p201 = scmp.ne.s32.totalorder %s193, %s195
      %p202 = scmp.eq.s32.totalorder %s38, 1
      %p203 = por %p201, %p202
      %p204 = scmp.ne.s32.totalorder %s195, %s196
      %p205 = scmp.eq.s32.totalorder %s38, 0
      %p206 = por %p204, %p205
      %p207 = scmp.ne.s32.totalorder %s195, %s196
      %p208 = scmp.eq.s32.totalorder %s39, 1
      %p209 = por %p207, %p208
      %p211 = scmp.ne.s32.totalorder %s196, %s210
      %p212 = scmp.eq.s32.totalorder %s39, 0
      %p213 = por %p211, %p212
      %s215 = sadd.s32 %s214, 1
      %p218 = scmp.eq.s32.totalorder %s33, 1
      %p219 = scmp.ne.s32.totalorder %s214, %s216
      %p220 = scmp.eq.s32.totalorder %s33, 0
      %p221 = por %p219, %p220
      %p222 = scmp.ne.s32.totalorder %s214, %s216
      %p223 = scmp.eq.s32.totalorder %s38, 1
      %p224 = por %p222, %p223
      %p225 = scmp.ne.s32.totalorder %s216, %s217
      %p226 = scmp.eq.s32.totalorder %s38, 0
      %p227 = por %p225, %p226
      %p228 = scmp.ne.s32.totalorder %s216, %s217
      %p229 = scmp.eq.s32.totalorder %s39, 1
      %p230 = por %p228, %p229
      %p232 = scmp.ne.s32.totalorder %s217, %s231
      %p233 = scmp.eq.s32.totalorder %s39, 0
      %p234 = por %p232, %p233
      %s236 = sadd.s32 %s235, 1
      %p239 = scmp.eq.s32.totalorder %s33, 1
      %p240 = scmp.ne.s32.totalorder %s235, %s237
      %p241 = scmp.eq.s32.totalorder %s33, 0
      %p242 = por %p240, %p241
      %p243 = scmp.ne.s32.totalorder %s235, %s237
      %p244 = scmp.eq.s32.totalorder %s38, 1
      %p245 = por %p243, %p244
      %p246 = scmp.ne.s32.totalorder %s237, %s238
      %p247 = scmp.eq.s32.totalorder %s38, 0
      %p248 = por %p246, %p247
      %p249 = scmp.ne.s32.totalorder %s237, %s238
      %p250 = scmp.eq.s32.totalorder %s39, 1
      %p251 = por %p249, %p250
      %p253 = scmp.ne.s32.totalorder %s238, %s252
      %p254 = scmp.eq.s32.totalorder %s39, 0
      %p255 = por %p253, %p254
      %s257 = sadd.s32 %s256, 1
      %p260 = scmp.eq.s32.totalorder %s33, 1
      %p261 = scmp.ne.s32.totalorder %s256, %s258
      %p262 = scmp.eq.s32.totalorder %s33, 0
      %p263 = por %p261, %p262
      %p264 = scmp.ne.s32.totalorder %s256, %s258
      %p265 = scmp.eq.s32.totalorder %s38, 1
      %p266 = por %p264, %p265
      %p267 = scmp.ne.s32.totalorder %s258, %s259
      %p268 = scmp.eq.s32.totalorder %s38, 0
      %p269 = por %p267, %p268
      %p270 = scmp.ne.s32.totalorder %s258, %s259
      %p271 = scmp.eq.s32.totalorder %s39, 1
      %p272 = por %p270, %p271
      %p274 = scmp.ne.s32.totalorder %s259, %s273
      %p275 = scmp.eq.s32.totalorder %s39, 0
      %p276 = por %p274, %p275
      %s278 = sadd.s32 %s277, 1
      %p281 = scmp.eq.s32.totalorder %s33, 1
      %p282 = scmp.ne.s32.totalorder %s277, %s279
      %p283 = scmp.eq.s32.totalorder %s33, 0
      %p284 = por %p282, %p283
      %p285 = scmp.ne.s32.totalorder %s277, %s279
      %p286 = scmp.eq.s32.totalorder %s38, 1
      %p287 = por %p285, %p286
      %p288 = scmp.ne.s32.totalorder %s279, %s280
      %p289 = scmp.eq.s32.totalorder %s38, 0
      %p290 = por %p288, %p289
      %p291 = scmp.ne.s32.totalorder %s279, %s280
      %p292 = scmp.eq.s32.totalorder %s39, 1
      %p293 = por %p291, %p292
      %p295 = scmp.ne.s32.totalorder %s280, %s294
      %p296 = scmp.eq.s32.totalorder %s39, 0
      %p297 = por %p295, %p296
      %s299 = sadd.s32 %s298, 1
      %p302 = scmp.eq.s32.totalorder %s33, 1
      %p303 = scmp.ne.s32.totalorder %s298, %s300
      %p304 = scmp.eq.s32.totalorder %s33, 0
      %p305 = por %p303, %p304
      %p306 = scmp.ne.s32.totalorder %s298, %s300
      %p307 = scmp.eq.s32.totalorder %s38, 1
      %p308 = por %p306, %p307
      %p309 = scmp.ne.s32.totalorder %s300, %s301
      %p310 = scmp.eq.s32.totalorder %s38, 0
      %p311 = por %p309, %p310
      %p312 = scmp.ne.s32.totalorder %s300, %s301
      %p313 = scmp.eq.s32.totalorder %s39, 1
      %p314 = por %p312, %p313
      %p316 = scmp.ne.s32.totalorder %s301, %s315
      %p317 = scmp.eq.s32.totalorder %s39, 0
      %p318 = por %p316, %p317
      %s320 = sadd.s32 %s319, 1
      %p323 = scmp.eq.s32.totalorder %s33, 1
      %p324 = scmp.ne.s32.totalorder %s319, %s321
      %p325 = scmp.eq.s32.totalorder %s33, 0
      %p326 = por %p324, %p325
      %p327 = scmp.ne.s32.totalorder %s319, %s321
      %p328 = scmp.eq.s32.totalorder %s38, 1
      %p329 = por %p327, %p328
      %p330 = scmp.ne.s32.totalorder %s321, %s322
      %p331 = scmp.eq.s32.totalorder %s38, 0
      %p332 = por %p330, %p331
      %p333 = scmp.ne.s32.totalorder %s321, %s322
      %p334 = scmp.eq.s32.totalorder %s39, 1
      %p335 = por %p333, %p334
      %p337 = scmp.ne.s32.totalorder %s322, %s336
      %p338 = scmp.eq.s32.totalorder %s39, 0
      %p339 = por %p337, %p338
      %s341 = sadd.s32 %s340, 1
      %p344 = scmp.eq.s32.totalorder %s33, 1
      %p345 = scmp.ne.s32.totalorder %s340, %s342
      %p346 = scmp.eq.s32.totalorder %s33, 0
      %p347 = por %p345, %p346
      %p348 = scmp.ne.s32.totalorder %s340, %s342
      %p349 = scmp.eq.s32.totalorder %s38, 1
      %p350 = por %p348, %p349
      %p351 = scmp.ne.s32.totalorder %s342, %s343
      %p352 = scmp.eq.s32.totalorder %s38, 0
      %p353 = por %p351, %p352
      %p354 = scmp.ne.s32.totalorder %s342, %s343
      %p355 = scmp.eq.s32.totalorder %s39, 1
      %p356 = por %p354, %p355
      %p358 = scmp.ne.s32.totalorder %s343, %s357
      %p359 = scmp.eq.s32.totalorder %s39, 0
      %p360 = por %p358, %p359
      %s362 = sadd.s32 %s361, 1
      %p365 = scmp.eq.s32.totalorder %s33, 1
      %p366 = scmp.ne.s32.totalorder %s361, %s363
      %p367 = scmp.eq.s32.totalorder %s33, 0
      %p368 = por %p366, %p367
      %p369 = scmp.ne.s32.totalorder %s361, %s363
      %p370 = scmp.eq.s32.totalorder %s38, 1
      %p371 = por %p369, %p370
      %p372 = scmp.ne.s32.totalorder %s363, %s364
      %p373 = scmp.eq.s32.totalorder %s38, 0
      %p374 = por %p372, %p373
      %p375 = scmp.ne.s32.totalorder %s363, %s364
      %p376 = scmp.eq.s32.totalorder %s39, 1
      %p377 = por %p375, %p376
      %p379 = scmp.ne.s32.totalorder %s364, %s378
      %p380 = scmp.eq.s32.totalorder %s39, 0
      %p381 = por %p379, %p380
      %s383 = sadd.s32 %s382, 1
      %p386 = scmp.eq.s32.totalorder %s33, 1
      %p387 = scmp.ne.s32.totalorder %s382, %s384
      %p388 = scmp.eq.s32.totalorder %s33, 0
      %p389 = por %p387, %p388
      %p390 = scmp.ne.s32.totalorder %s382, %s384
      %p391 = scmp.eq.s32.totalorder %s38, 1
      %p392 = por %p390, %p391
      %p393 = scmp.ne.s32.totalorder %s384, %s385
      %p394 = scmp.eq.s32.totalorder %s38, 0
      %p395 = por %p393, %p394
      %p396 = scmp.ne.s32.totalorder %s384, %s385
      %p397 = scmp.eq.s32.totalorder %s39, 1
      %p398 = por %p396, %p397
      %p400 = scmp.ne.s32.totalorder %s385, %s399
      %p401 = scmp.eq.s32.totalorder %s39, 0
      %p402 = por %p400, %p401
      %s404 = sadd.s32 %s403, 1
      %p407 = scmp.eq.s32.totalorder %s33, 1
      %p408 = scmp.ne.s32.totalorder %s403, %s405
      %p409 = scmp.eq.s32.totalorder %s33, 0
      %p410 = por %p408, %p409
      %p411 = scmp.ne.s32.totalorder %s403, %s405
      %p412 = scmp.eq.s32.totalorder %s38, 1
      %p413 = por %p411, %p412
      %p414 = scmp.ne.s32.totalorder %s405, %s406
      %p415 = scmp.eq.s32.totalorder %s38, 0
      %p416 = por %p414, %p415
      %p417 = scmp.ne.s32.totalorder %s405, %s406
      %p418 = scmp.eq.s32.totalorder %s39, 1
      %p419 = por %p417, %p418
      %p421 = scmp.ne.s32.totalorder %s406, %s420
      %p422 = scmp.eq.s32.totalorder %s39, 0
      %p423 = por %p421, %p422
      %s425 = sadd.s32 %s424, 1
      %p428 = scmp.eq.s32.totalorder %s33, 1
      %p429 = scmp.ne.s32.totalorder %s424, %s426
      %p430 = scmp.eq.s32.totalorder %s33, 0
      %p431 = por %p429, %p430
      %p432 = scmp.ne.s32.totalorder %s424, %s426
      %p433 = scmp.eq.s32.totalorder %s38, 1
      %p434 = por %p432, %p433
      %p435 = scmp.ne.s32.totalorder %s426, %s427
      %p436 = scmp.eq.s32.totalorder %s38, 0
      %p437 = por %p435, %p436
      %p438 = scmp.ne.s32.totalorder %s426, %s427
      %p439 = scmp.eq.s32.totalorder %s39, 1
      %p440 = por %p438, %p439
      %p442 = scmp.ne.s32.totalorder %s427, %s441
      %p443 = scmp.eq.s32.totalorder %s39, 0
      %p444 = por %p442, %p443
      %s445 = ssub.s32 %s33, %s40
      %p446 = scmp.eq.s32.totalorder %s445, 0
      %s448 = sadd.s32 %s447, 1
      %s449 = scalar_select %p446, %s447, %s448
      %p452 = pneg %p446
      %p453 = scmp.eq.s32.totalorder %s33, 1
      %p454 = por %p452, %p453
      %p455 = scmp.ne.s32.totalorder %s447, %s450
      %p456 = scmp.eq.s32.totalorder %s33, 0
      %p457 = por %p455, %p456
      %p458 = scmp.ne.s32.totalorder %s447, %s450
      %p459 = scmp.eq.s32.totalorder %s38, 1
      %p460 = por %p458, %p459
      %p461 = scmp.ne.s32.totalorder %s450, %s451
      %p462 = scmp.eq.s32.totalorder %s38, 0
      %p463 = por %p461, %p462
      %p464 = scmp.ne.s32.totalorder %s450, %s451
      %p465 = scmp.eq.s32.totalorder %s39, 1
      %p466 = por %p464, %p465
      %p468 = scmp.ne.s32.totalorder %s451, %s467
      %p469 = scmp.eq.s32.totalorder %s39, 0
      %p470 = por %p468, %p469
      %s471 = ssub.s32 %s33, %s40
      %p472 = scmp.eq.s32.totalorder %s471, 0
      %s474 = sadd.s32 %s473, 1
      %s475 = scalar_select %p472, %s473, %s474
      %p478 = pneg %p472
      %p479 = scmp.eq.s32.totalorder %s33, 1
      %p480 = por %p478, %p479
      %p481 = scmp.ne.s32.totalorder %s473, %s476
      %p482 = scmp.eq.s32.totalorder %s33, 0
      %p483 = por %p481, %p482
      %p484 = scmp.ne.s32.totalorder %s473, %s476
      %p485 = scmp.eq.s32.totalorder %s38, 1
      %p486 = por %p484, %p485
      %p487 = scmp.ne.s32.totalorder %s476, %s477
      %p488 = scmp.eq.s32.totalorder %s38, 0
      %p489 = por %p487, %p488
      %p490 = scmp.ne.s32.totalorder %s476, %s477
      %p491 = scmp.eq.s32.totalorder %s39, 1
      %p492 = por %p490, %p491
      %p494 = scmp.ne.s32.totalorder %s477, %s493
      %p495 = scmp.eq.s32.totalorder %s39, 0
      %p496 = por %p494, %p495
      %p497 = scmp.le.s32.totalorder 1, %s33
      %p498 = scmp.lt.s32.totalorder %s33, 3
      %p499 = pnand %p497, %p498
      %p500 = pneg %p499
      // Predicated region
      $region9: #{vit_forward.1} parent=5 // pred_check
        _
      $region10: #{vit_forward.1} parent=5 // pred_check_branch
        %502 = sbr.rel (%p499) target = $region12
      $region11: #{vit_forward.1} parent=5 // pred_region
        %s503 = ssub.s32 %s33, 1
        // Predicated region
        $region13: #{vit_forward.1} parent=11 // pred_check
          %p504 = pneg %p80
        $region14: #{vit_forward.1} parent=11 // pred_check_branch
          %506 = sbr.rel (%p504) target = $region16
        $region15: #{vit_forward.1} parent=11 // pred_region
          _
        $region16: #{vit_forward.1} parent=11 // pred_fallthru
          _
        // Predicated region
        $region17: #{vit_forward.1} parent=11 // pred_check
          %p507 = pneg %p101
        $region18: #{vit_forward.1} parent=11 // pred_check_branch
          %509 = sbr.rel (%p507) target = $region20
        $region19: #{vit_forward.1} parent=11 // pred_region
          _
        $region20: #{vit_forward.1} parent=11 // pred_fallthru
          _
        // Predicated region
        $region21: #{vit_forward.1} parent=11 // pred_check
          %p510 = pneg %p122
        $region22: #{vit_forward.1} parent=11 // pred_check_branch
          %512 = sbr.rel (%p510) target = $region24
        $region23: #{vit_forward.1} parent=11 // pred_region
          _
        $region24: #{vit_forward.1} parent=11 // pred_fallthru
          _
        // Predicated region
        $region25: #{vit_forward.1} parent=11 // pred_check
          %p513 = pneg %p143
        $region26: #{vit_forward.1} parent=11 // pred_check_branch
          %515 = sbr.rel (%p513) target = $region28
        $region27: #{vit_forward.1} parent=11 // pred_region
          _
        $region28: #{vit_forward.1} parent=11 // pred_fallthru
          _
        // Predicated region
        $region29: #{vit_forward.1} parent=11 // pred_check
          %p516 = pneg %p164
        $region30: #{vit_forward.1} parent=11 // pred_check_branch
          %518 = sbr.rel (%p516) target = $region32
        $region31: #{vit_forward.1} parent=11 // pred_region
          _
        $region32: #{vit_forward.1} parent=11 // pred_fallthru
          _
        // Predicated region
        $region33: #{vit_forward.1} parent=11 // pred_check
          %p519 = pneg %p185
        $region34: #{vit_forward.1} parent=11 // pred_check_branch
          %521 = sbr.rel (%p519) target = $region36
        $region35: #{vit_forward.1} parent=11 // pred_region
          _
        $region36: #{vit_forward.1} parent=11 // pred_fallthru
          _
        // Predicated region
        $region37: #{vit_forward.1} parent=11 // pred_check
          %p522 = pneg %p206
        $region38: #{vit_forward.1} parent=11 // pred_check_branch
          %524 = sbr.rel (%p522) target = $region40
        $region39: #{vit_forward.1} parent=11 // pred_region
          _
        $region40: #{vit_forward.1} parent=11 // pred_fallthru
          _
        // Predicated region
        $region41: #{vit_forward.1} parent=11 // pred_check
          %p525 = pneg %p227
        $region42: #{vit_forward.1} parent=11 // pred_check_branch
          %527 = sbr.rel (%p525) target = $region44
        $region43: #{vit_forward.1} parent=11 // pred_region
          _
        $region44: #{vit_forward.1} parent=11 // pred_fallthru
          _
        // Predicated region
        $region45: #{vit_forward.1} parent=11 // pred_check
          %p528 = pneg %p248
        $region46: #{vit_forward.1} parent=11 // pred_check_branch
          %530 = sbr.rel (%p528) target = $region48
        $region47: #{vit_forward.1} parent=11 // pred_region
          _
        $region48: #{vit_forward.1} parent=11 // pred_fallthru
          _
        // Predicated region
        $region49: #{vit_forward.1} parent=11 // pred_check
          %p531 = pneg %p269
        $region50: #{vit_forward.1} parent=11 // pred_check_branch
          %533 = sbr.rel (%p531) target = $region52
        $region51: #{vit_forward.1} parent=11 // pred_region
          _
        $region52: #{vit_forward.1} parent=11 // pred_fallthru
          _
        // Predicated region
        $region53: #{vit_forward.1} parent=11 // pred_check
          %p534 = pneg %p290
        $region54: #{vit_forward.1} parent=11 // pred_check_branch
          %536 = sbr.rel (%p534) target = $region56
        $region55: #{vit_forward.1} parent=11 // pred_region
          _
        $region56: #{vit_forward.1} parent=11 // pred_fallthru
          _
        // Predicated region
        $region57: #{vit_forward.1} parent=11 // pred_check
          %p537 = pneg %p311
        $region58: #{vit_forward.1} parent=11 // pred_check_branch
          %539 = sbr.rel (%p537) target = $region60
        $region59: #{vit_forward.1} parent=11 // pred_region
          _
        $region60: #{vit_forward.1} parent=11 // pred_fallthru
          _
        // Predicated region
        $region61: #{vit_forward.1} parent=11 // pred_check
          %p540 = pneg %p332
        $region62: #{vit_forward.1} parent=11 // pred_check_branch
          %542 = sbr.rel (%p540) target = $region64
        $region63: #{vit_forward.1} parent=11 // pred_region
          _
        $region64: #{vit_forward.1} parent=11 // pred_fallthru
          _
        // Predicated region
        $region65: #{vit_forward.1} parent=11 // pred_check
          %p543 = pneg %p353
        $region66: #{vit_forward.1} parent=11 // pred_check_branch
          %545 = sbr.rel (%p543) target = $region68
        $region67: #{vit_forward.1} parent=11 // pred_region
          _
        $region68: #{vit_forward.1} parent=11 // pred_fallthru
          _
        // Predicated region
        $region69: #{vit_forward.1} parent=11 // pred_check
          %p546 = pneg %p374
        $region70: #{vit_forward.1} parent=11 // pred_check_branch
          %548 = sbr.rel (%p546) target = $region72
        $region71: #{vit_forward.1} parent=11 // pred_region
          _
        $region72: #{vit_forward.1} parent=11 // pred_fallthru
          _
        // Predicated region
        $region73: #{vit_forward.1} parent=11 // pred_check
          %p549 = pneg %p395
        $region74: #{vit_forward.1} parent=11 // pred_check_branch
          %551 = sbr.rel (%p549) target = $region76
        $region75: #{vit_forward.1} parent=11 // pred_region
          _
        $region76: #{vit_forward.1} parent=11 // pred_fallthru
          _
        // Predicated region
        $region77: #{vit_forward.1} parent=11 // pred_check
          %p552 = pneg %p416
        $region78: #{vit_forward.1} parent=11 // pred_check_branch
          %554 = sbr.rel (%p552) target = $region80
        $region79: #{vit_forward.1} parent=11 // pred_region
          _
        $region80: #{vit_forward.1} parent=11 // pred_fallthru
          _
        // Predicated region
        $region81: #{vit_forward.1} parent=11 // pred_check
          %p555 = pneg %p437
        $region82: #{vit_forward.1} parent=11 // pred_check_branch
          %557 = sbr.rel (%p555) target = $region84
        $region83: #{vit_forward.1} parent=11 // pred_region
          _
        $region84: #{vit_forward.1} parent=11 // pred_fallthru
          _
      $region12: #{vit_forward.1} parent=5 // pred_fallthru
        _
      %p558 = scmp.lt.s32.totalorder %s33, 2
      // Predicated region
      $region85: #{vit_forward.1} parent=5 // pred_check
        %p559 = pneg %p558
      $region86: #{vit_forward.1} parent=5 // pred_check_branch
        %561 = sbr.rel (%p559) target = $region88
      $region87: #{vit_forward.1} parent=5 // pred_region
        // Predicated region
        $region89: #{vit_forward.1} parent=87 // pred_check
          %p562 = pneg %p53
        $region90: #{vit_forward.1} parent=87 // pred_check_branch
          %564 = sbr.rel (%p562) target = $region92
        $region91: #{vit_forward.1} parent=87 // pred_region
          %p565 = scmp.lt.s32.totalorder %s33, 1
          %s566 = scalar_select %p565, %s33, 1
          %s567 = smul.addr %s566, 6
          %s568 = smul.addr %s567, 4
          %s569 = scalar_lea.vmem %s0, %s568
        $region92: #{vit_forward.1} parent=87 // pred_fallthru
          _
      $region88: #{vit_forward.1} parent=5 // pred_fallthru
        _
      %p570 = scmp.le.s32.totalorder 1, %s33
      %p571 = scmp.lt.s32.totalorder %s33, 3
      %p572 = pnand %p570, %p571
      %p573 = pneg %p572
      // Predicated region
      $region93: #{vit_forward.1} parent=5 // pred_check
        _
      $region94: #{vit_forward.1} parent=5 // pred_check_branch
        %575 = sbr.rel (%p572) target = $region96
      $region95: #{vit_forward.1} parent=5 // pred_region
        %s576 = ssub.s32 %s33, 1
        %p577 = scmp.lt.s32.totalorder %s38, 1
        %s578 = scalar_select %p577, %s38, 1
        %s579 = smul.addr %s578, 6
        %s580 = smul.addr %s579, 4
        %s581 = scalar_lea.vmem %s0, %s580
        %p582 = pneg %p59
        %p583 = pneg %p56
        %p584 = pneg %p80
        %p585 = pneg %p77
        %p586 = pneg %p101
        %p587 = pneg %p98
        %p588 = pneg %p122
        %p589 = pneg %p119
        %p590 = pneg %p143
        %p591 = pneg %p140
        %p592 = pneg %p164
        %p593 = pneg %p161
        %p594 = pneg %p185
        %p595 = pneg %p182
        %p596 = pneg %p206
        %p597 = pneg %p203
        %p598 = pneg %p227
        %p599 = pneg %p224
        %p600 = pneg %p248
        %p601 = pneg %p245
        %p602 = pneg %p269
        %p603 = pneg %p266
        %p604 = pneg %p290
        %p605 = pneg %p287
        %p606 = pneg %p311
        %p607 = pneg %p308
        %p608 = pneg %p332
        %p609 = pneg %p329
        %p610 = pneg %p353
        %p611 = pneg %p350
        %p612 = pneg %p374
        %p613 = pneg %p371
        %p614 = pneg %p395
        %p615 = pneg %p392
        %p616 = pneg %p416
        %p617 = pneg %p413
        %p618 = pneg %p437
        %p619 = pneg %p434
        %p620 = pneg %p463
        %p621 = pneg %p460
        %s622 = sand.u32 %s450, 1
        %s623 = scalar_lea.sflag [#allocation3], %s622
        %s624 = sand.u32 %s450, 1
        %s625 = scalar_lea.vmem [#allocation2], %s624
        %p626 = pneg %p489
        %p627 = pneg %p486
        %s628 = sand.u32 %s476, 1
        %s629 = scalar_lea.sflag [#allocation5], %s628
        %s630 = sand.u32 %s476, 1
        %s631 = scalar_lea.vmem [#allocation4], %s630
        %p632 = scmp.lt.s32.totalorder %s38, 1
        %s633 = scalar_select %p632, %s38, 1
        %s634 = smul.addr %s633, 6
        %s635 = smul.addr %s634, 4
        %s636 = scalar_lea.vmem %s0, %s635
        %v638 = vld [vmem:[%s636] sm:$0x77]
        %v639 = vld [vmem:[%s636 + $0x8] sm:$0x77]
        %v640 = vld [vmem:[%s636 + $0x10] sm:$0x77]
        %v641 = vld [vmem:[%s2] sm:$0xf]
        %v642 = vld [vmem:[%s2 + $0x4] sm:$0xf]
        %v643 = vld [vmem:[%s2 + $0x8] sm:$0xf]
        %v644 = vld [vmem:[%s2 + $0xc] sm:$0xf]
        %v645 = vld [vmem:[%s2 + $0x10] sm:$0xf]
        %v646 = vld [vmem:[%s2 + $0x14] sm:$0xf]
        %v647 = vld [vmem:[%s2 + $0x18] sm:$0xf]
        %v648 = vld [vmem:[%s2 + $0x1c] sm:$0xf]
        %v649 = vld [vmem:[%s2 + $0x20] sm:$0xf]
        %v650 = vld [vmem:[%s2 + $0x24] sm:$0xf]
        %v651 = vld [vmem:[%s2 + $0x28] sm:$0xf]
        %v652 = vld [vmem:[%s2 + $0x2c] sm:$0xf]
        %v653 = vld [vmem:[%s2 + $0x30] sm:$0xf]
        %v654 = vld [vmem:[%s2 + $0x34] sm:$0xf]
        %v655 = vld [vmem:[%s2 + $0x38] sm:$0xf]
        %v656 = vld [vmem:[%s2 + $0x3c] sm:$0xf]
        %v657 = vld [vmem:[%s2 + $0x40] sm:$0xf]
        %v658 = vld [vmem:[%s2 + $0x44] sm:$0xf]
        %v659 = vld [vmem:[%s2 + $0x48] sm:$0xf]
        %v660 = vld [vmem:[%s2 + $0x4c] sm:$0xf]
        %v661 = vld [vmem:[%s2 + $0x50] sm:$0xf]
        %v662 = vld [vmem:[%s2 + $0x54] sm:$0xf]
        %v663 = vld [vmem:[%s2 + $0x58] sm:$0xf]
        %v664 = vld [vmem:[%s2 + $0x5c] sm:$0xf]
        %v665 = vld [vmem:[%s2 + $0x60] sm:$0xf]
        %v666 = vld [vmem:[%s2 + $0x64] sm:$0xf]
        %v667 = vld [vmem:[%s2 + $0x68] sm:$0xf]
        %v668 = vld [vmem:[%s2 + $0x6c] sm:$0xf]
        %v669 = vld [vmem:[%s2 + $0x70] sm:$0xf]
        %v670 = vld [vmem:[%s2 + $0x74] sm:$0xf]
        %v671 = vld [vmem:[%s2 + $0x78] sm:$0xf]
        %v672 = vld [vmem:[%s2 + $0x7c] sm:$0xf]
        %v673 = vld [vmem:[%s2 + $0x80] sm:$0xf]
        %v674 = vld [vmem:[%s2 + $0x84] sm:$0xf]
        %v675 = vld [vmem:[%s2 + $0x88] sm:$0xf]
        %v676 = vld [vmem:[%s2 + $0x8c] sm:$0xf]
        %v677 = vld [vmem:[%s2 + $0x90] sm:$0xf]
        %v678 = vld [vmem:[%s2 + $0x94] sm:$0xf]
        %v679 = vld [vmem:[%s2 + $0x98] sm:$0xf]
        %v680 = vld [vmem:[%s2 + $0x9c] sm:$0xf]
        %v681 = vld [vmem:[%s2 + $0xa0] sm:$0xf]
        %v682 = vld [vmem:[%s2 + $0xa4] sm:$0xf]
        %v683 = vld [vmem:[%s2 + $0xa8] sm:$0xf]
        %v684 = vld [vmem:[%s2 + $0xac] sm:$0xf]
        %v685 = vld [vmem:[%s2 + $0xb0] sm:$0xf]
        %v686 = vld [vmem:[%s2 + $0xb4] sm:$0xf]
        %v687 = vld [vmem:[%s2 + $0xb8] sm:$0xf]
        %v688 = vld [vmem:[%s2 + $0xbc] sm:$0xf]
        %v689 = vld [vmem:[%s2 + $0xc0] sm:$0xf]
        %v690 = vld [vmem:[%s2 + $0xc4] sm:$0xf]
        %v691 = vld [vmem:[%s2 + $0xc8] sm:$0xf]
        %v692 = vld [vmem:[%s2 + $0xcc] sm:$0xf]
        %v693 = vld [vmem:[%s2 + $0xd0] sm:$0xf]
        %v694 = vld [vmem:[%s2 + $0xd4] sm:$0xf]
        %v695 = vld [vmem:[%s2 + $0xd8] sm:$0xf]
        %v696 = vld [vmem:[%s2 + $0xdc] sm:$0xf]
        %v697 = vld [vmem:[%s2 + $0xe0] sm:$0xf]
        %v698 = vld [vmem:[%s2 + $0xe4] sm:$0xf]
        %v699 = vld [vmem:[%s2 + $0xe8] sm:$0xf]
        %v700 = vld [vmem:[%s2 + $0xec] sm:$0xf]
        %v701 = vld [vmem:[%s2 + $0xf0] sm:$0xf]
        %v702 = vld [vmem:[%s2 + $0xf4] sm:$0xf]
        %v703 = vld [vmem:[%s2 + $0xf8] sm:$0xf]
        %v704 = vld [vmem:[%s2 + $0xfc] sm:$0xf]
        %v705 = vld [vmem:[%s2 + $0x100] sm:$0xf]
        %v706 = vld [vmem:[%s2 + $0x104] sm:$0xf]
        %v707 = vld [vmem:[%s2 + $0x108] sm:$0xf]
        %v708 = vld [vmem:[%s2 + $0x10c] sm:$0xf]
        %v709 = vld [vmem:[%s2 + $0x110] sm:$0xf]
        %v710 = vld [vmem:[%s2 + $0x114] sm:$0xf]
        %v711 = vld [vmem:[%s2 + $0x118] sm:$0xf]
        %v712 = vld [vmem:[%s2 + $0x11c] sm:$0xf]
        %v713 = vld [vmem:[%s2 + $0x120] sm:$0xf]
        %v714 = vld [vmem:[%s2 + $0x124] sm:$0xf]
        %v715 = vld [vmem:[%s2 + $0x128] sm:$0xf]
        %v716 = vld [vmem:[%s2 + $0x12c] sm:$0xf]
        %v717 = vld [vmem:[%s2 + $0x130] sm:$0xf]
        %v718 = vld [vmem:[%s2 + $0x134] sm:$0xf]
        %v719 = vld [vmem:[%s2 + $0x138] sm:$0xf]
        %v720 = vld [vmem:[%s2 + $0x13c] sm:$0xf]
        %v721 = vld [vmem:[%s2 + $0x140] sm:$0xf]
        %v722 = vld [vmem:[%s2 + $0x144] sm:$0xf]
        %v723 = vld [vmem:[%s2 + $0x148] sm:$0xf]
        %v724 = vld [vmem:[%s2 + $0x14c] sm:$0xf]
        %v725 = vld [vmem:[%s2 + $0x150] sm:$0xf]
        %v726 = vld [vmem:[%s2 + $0x154] sm:$0xf]
        %v727 = vld [vmem:[%s2 + $0x158] sm:$0xf]
        %v728 = vld [vmem:[%s2 + $0x15c] sm:$0xf]
        %v729 = vld [vmem:[%s2 + $0x160] sm:$0xf]
        %v730 = vld [vmem:[%s2 + $0x164] sm:$0xf]
        %v731 = vld [vmem:[%s2 + $0x168] sm:$0xf]
        %v732 = vld [vmem:[%s2 + $0x16c] sm:$0xf]
        %v733 = vld [vmem:[%s2 + $0x170] sm:$0xf]
        %v734 = vld [vmem:[%s2 + $0x174] sm:$0xf]
        %v735 = vld [vmem:[%s2 + $0x178] sm:$0xf]
        %v736 = vld [vmem:[%s2 + $0x17c] sm:$0xf]
        %v737 = vld [vmem:[%s1] sm:$0x1f]
        %v741 = vunpack.c.l.b16 %v638
        %v742 = vunpack.c.h.b16 %v638
        %v743 = vunpack.c.l.b16 %v639
        %v744 = vunpack.c.h.b16 %v639
        %v745 = vunpack.c.l.b16 %v640
        %v746 = vunpack.c.h.b16 %v640
        %v747 = vpack.c.b16 %v741, %v741
        %v748 = vpack.c.b16 %v742, %v742
        %v749 = vpack.c.b16 %v743, %v743
        %v750 = vpack.c.b16 %v744, %v744
        %v751 = vpack.c.b16 %v745, %v745
        %v752 = vpack.c.b16 %v746, %v746
        %v855 = vunpack.c.l.b16 %v641
        %v856 = vunpack.c.l.b16 %v642
        %v857 = vunpack.c.l.b16 %v643
        %v858 = vunpack.c.l.b16 %v644
        %v859 = vunpack.c.l.b16 %v645
        %v860 = vunpack.c.l.b16 %v646
        %v861 = vunpack.c.l.b16 %v647
        %v862 = vunpack.c.l.b16 %v648
        %v863 = vunpack.c.l.b16 %v649
        %v864 = vunpack.c.l.b16 %v650
        %v865 = vunpack.c.l.b16 %v651
        %v866 = vunpack.c.l.b16 %v652
        %v867 = vunpack.c.l.b16 %v653
        %v868 = vunpack.c.l.b16 %v654
        %v869 = vunpack.c.l.b16 %v655
        %v870 = vunpack.c.l.b16 %v656
        %v871 = vunpack.c.l.b16 %v657
        %v872 = vunpack.c.l.b16 %v658
        %v873 = vunpack.c.l.b16 %v659
        %v874 = vunpack.c.l.b16 %v660
        %v875 = vunpack.c.l.b16 %v661
        %v876 = vunpack.c.l.b16 %v662
        %v877 = vunpack.c.l.b16 %v663
        %v878 = vunpack.c.l.b16 %v664
        %v879 = vunpack.c.l.b16 %v665
        %v880 = vunpack.c.l.b16 %v666
        %v881 = vunpack.c.l.b16 %v667
        %v882 = vunpack.c.l.b16 %v668
        %v883 = vunpack.c.l.b16 %v669
        %v884 = vunpack.c.l.b16 %v670
        %v885 = vunpack.c.l.b16 %v671
        %v886 = vunpack.c.l.b16 %v672
        %v887 = vunpack.c.l.b16 %v673
        %v888 = vunpack.c.l.b16 %v674
        %v889 = vunpack.c.l.b16 %v675
        %v890 = vunpack.c.l.b16 %v676
        %v891 = vunpack.c.l.b16 %v677
        %v892 = vunpack.c.l.b16 %v678
        %v893 = vunpack.c.l.b16 %v679
        %v894 = vunpack.c.l.b16 %v680
        %v895 = vunpack.c.l.b16 %v681
        %v896 = vunpack.c.l.b16 %v682
        %v897 = vunpack.c.l.b16 %v683
        %v898 = vunpack.c.l.b16 %v684
        %v899 = vunpack.c.l.b16 %v685
        %v900 = vunpack.c.l.b16 %v686
        %v901 = vunpack.c.l.b16 %v687
        %v902 = vunpack.c.l.b16 %v688
        %v903 = vunpack.c.l.b16 %v689
        %v904 = vunpack.c.l.b16 %v690
        %v905 = vunpack.c.l.b16 %v691
        %v906 = vunpack.c.l.b16 %v692
        %v907 = vunpack.c.l.b16 %v693
        %v908 = vunpack.c.l.b16 %v694
        %v909 = vunpack.c.l.b16 %v695
        %v910 = vunpack.c.l.b16 %v696
        %v911 = vunpack.c.l.b16 %v697
        %v912 = vunpack.c.l.b16 %v698
        %v913 = vunpack.c.l.b16 %v699
        %v914 = vunpack.c.l.b16 %v700
        %v915 = vunpack.c.l.b16 %v701
        %v916 = vunpack.c.l.b16 %v702
        %v917 = vunpack.c.l.b16 %v703
        %v918 = vunpack.c.l.b16 %v704
        %v919 = vunpack.c.l.b16 %v705
        %v920 = vunpack.c.l.b16 %v706
        %v921 = vunpack.c.l.b16 %v707
        %v922 = vunpack.c.l.b16 %v708
        %v923 = vunpack.c.l.b16 %v709
        %v924 = vunpack.c.l.b16 %v710
        %v925 = vunpack.c.l.b16 %v711
        %v926 = vunpack.c.l.b16 %v712
        %v927 = vunpack.c.l.b16 %v713
        %v928 = vunpack.c.l.b16 %v714
        %v929 = vunpack.c.l.b16 %v715
        %v930 = vunpack.c.l.b16 %v716
        %v931 = vunpack.c.l.b16 %v717
        %v932 = vunpack.c.l.b16 %v718
        %v933 = vunpack.c.l.b16 %v719
        %v934 = vunpack.c.l.b16 %v720
        %v935 = vunpack.c.l.b16 %v721
        %v936 = vunpack.c.l.b16 %v722
        %v937 = vunpack.c.l.b16 %v723
        %v938 = vunpack.c.l.b16 %v724
        %v939 = vunpack.c.l.b16 %v725
        %v940 = vunpack.c.l.b16 %v726
        %v941 = vunpack.c.l.b16 %v727
        %v942 = vunpack.c.l.b16 %v728
        %v943 = vunpack.c.l.b16 %v729
        %v944 = vunpack.c.l.b16 %v730
        %v945 = vunpack.c.l.b16 %v731
        %v946 = vunpack.c.l.b16 %v732
        %v947 = vunpack.c.l.b16 %v733
        %v948 = vunpack.c.l.b16 %v734
        %v949 = vunpack.c.l.b16 %v735
        %v950 = vunpack.c.l.b16 %v736
        %v951 = vpack.c.b16 %v856, %v855
        %v952 = vpack.c.b16 %v858, %v857
        %v953 = vpack.c.b16 %v860, %v859
        %v954 = vpack.c.b16 %v862, %v861
        %v955 = vpack.c.b16 %v864, %v863
        %v956 = vpack.c.b16 %v866, %v865
        %v957 = vpack.c.b16 %v868, %v867
        %v958 = vpack.c.b16 %v870, %v869
        %v959 = vpack.c.b16 %v872, %v871
        %v960 = vpack.c.b16 %v874, %v873
        %v961 = vpack.c.b16 %v876, %v875
        %v962 = vpack.c.b16 %v878, %v877
        %v963 = vpack.c.b16 %v880, %v879
        %v964 = vpack.c.b16 %v882, %v881
        %v965 = vpack.c.b16 %v884, %v883
        %v966 = vpack.c.b16 %v886, %v885
        %v967 = vpack.c.b16 %v888, %v887
        %v968 = vpack.c.b16 %v890, %v889
        %v969 = vpack.c.b16 %v892, %v891
        %v970 = vpack.c.b16 %v894, %v893
        %v971 = vpack.c.b16 %v896, %v895
        %v972 = vpack.c.b16 %v898, %v897
        %v973 = vpack.c.b16 %v900, %v899
        %v974 = vpack.c.b16 %v902, %v901
        %v975 = vpack.c.b16 %v904, %v903
        %v976 = vpack.c.b16 %v906, %v905
        %v977 = vpack.c.b16 %v908, %v907
        %v978 = vpack.c.b16 %v910, %v909
        %v979 = vpack.c.b16 %v912, %v911
        %v980 = vpack.c.b16 %v914, %v913
        %v981 = vpack.c.b16 %v916, %v915
        %v982 = vpack.c.b16 %v918, %v917
        %v983 = vpack.c.b16 %v920, %v919
        %v984 = vpack.c.b16 %v922, %v921
        %v985 = vpack.c.b16 %v924, %v923
        %v986 = vpack.c.b16 %v926, %v925
        %v987 = vpack.c.b16 %v928, %v927
        %v988 = vpack.c.b16 %v930, %v929
        %v989 = vpack.c.b16 %v932, %v931
        %v990 = vpack.c.b16 %v934, %v933
        %v991 = vpack.c.b16 %v936, %v935
        %v992 = vpack.c.b16 %v938, %v937
        %v993 = vpack.c.b16 %v940, %v939
        %v994 = vpack.c.b16 %v942, %v941
        %v995 = vpack.c.b16 %v944, %v943
        %v996 = vpack.c.b16 %v946, %v945
        %v997 = vpack.c.b16 %v948, %v947
        %v998 = vpack.c.b16 %v950, %v949
        %1047 = vmatpush.bf16.msra.mxu0 %v958
        %1048 = vmatpush.bf16.msra.mxu0 %v957
        %1049 = vmatpush.bf16.msra.mxu0 %v956
        %1050 = vmatpush.bf16.msra.mxu0 %v955
        %1051 = vmatpush.bf16.msra.mxu0 %v954
        %1052 = vmatpush.bf16.msra.mxu0 %v953
        %1053 = vmatpush.bf16.msra.mxu0 %v952
        %1054 = vmatpush.bf16.msra.mxu0 %v951
        %1055 = vmatmul.bf16.gmra.mxu0 %v747
        %v1056 = vpop.f32.mrf.mxu0
        %v1057 = vadd.f32 %v737, %v1056
        %v1058 = vpop.f32.mrf.mxu0
        %1059 = vdwg.mxu0
        %1060 = vmatpush.bf16.msra.mxu0 %v966
        %1061 = vmatpush.bf16.msra.mxu0 %v965
        %1062 = vmatpush.bf16.msra.mxu0 %v964
        %1063 = vmatpush.bf16.msra.mxu0 %v963
        %1064 = vmatpush.bf16.msra.mxu0 %v962
        %1065 = vmatpush.bf16.msra.mxu0 %v961
        %1066 = vmatpush.bf16.msra.mxu0 %v960
        %1067 = vmatpush.bf16.msra.mxu0 %v959
        %1068 = vmatmul.bf16.gmra.mxu0 %v748
        %v1069 = vpop.f32.mrf.mxu0
        %v1070 = vadd.f32 %v1057, %v1069
        %v1071 = vpop.f32.mrf.mxu0
        %1072 = vdwg.mxu0
        %1073 = vmatpush.bf16.msra.mxu0 %v974
        %1074 = vmatpush.bf16.msra.mxu0 %v973
        %1075 = vmatpush.bf16.msra.mxu0 %v972
        %1076 = vmatpush.bf16.msra.mxu0 %v971
        %1077 = vmatpush.bf16.msra.mxu0 %v970
        %1078 = vmatpush.bf16.msra.mxu0 %v969
        %1079 = vmatpush.bf16.msra.mxu0 %v968
        %1080 = vmatpush.bf16.msra.mxu0 %v967
        %1081 = vmatmul.bf16.gmra.mxu0 %v749
        %v1082 = vpop.f32.mrf.mxu0
        %v1083 = vadd.f32 %v1070, %v1082
        %v1084 = vpop.f32.mrf.mxu0
        %1085 = vdwg.mxu0
        %1086 = vmatpush.bf16.msra.mxu0 %v982
        %1087 = vmatpush.bf16.msra.mxu0 %v981
        %1088 = vmatpush.bf16.msra.mxu0 %v980
        %1089 = vmatpush.bf16.msra.mxu0 %v979
        %1090 = vmatpush.bf16.msra.mxu0 %v978
        %1091 = vmatpush.bf16.msra.mxu0 %v977
        %1092 = vmatpush.bf16.msra.mxu0 %v976
        %1093 = vmatpush.bf16.msra.mxu0 %v975
        %1094 = vmatmul.bf16.gmra.mxu0 %v750
        %v1095 = vpop.f32.mrf.mxu0
        %v1096 = vadd.f32 %v1083, %v1095
        %v1097 = vpop.f32.mrf.mxu0
        %1098 = vdwg.mxu0
        %1099 = vmatpush.bf16.msra.mxu0 %v990
        %1100 = vmatpush.bf16.msra.mxu0 %v989
        %1101 = vmatpush.bf16.msra.mxu0 %v988
        %1102 = vmatpush.bf16.msra.mxu0 %v987
        %1103 = vmatpush.bf16.msra.mxu0 %v986
        %1104 = vmatpush.bf16.msra.mxu0 %v985
        %1105 = vmatpush.bf16.msra.mxu0 %v984
        %1106 = vmatpush.bf16.msra.mxu0 %v983
        %1107 = vmatmul.bf16.gmra.mxu0 %v751
        %v1108 = vpop.f32.mrf.mxu0
        %v1109 = vadd.f32 %v1096, %v1108
        %v1110 = vpop.f32.mrf.mxu0
        %1111 = vdwg.mxu0
        %1112 = vmatpush.bf16.msra.mxu0 %v998
        %1113 = vmatpush.bf16.msra.mxu0 %v997
        %1114 = vmatpush.bf16.msra.mxu0 %v996
        %1115 = vmatpush.bf16.msra.mxu0 %v995
        %1116 = vmatpush.bf16.msra.mxu0 %v994
        %1117 = vmatpush.bf16.msra.mxu0 %v993
        %1118 = vmatpush.bf16.msra.mxu0 %v992
        %1119 = vmatpush.bf16.msra.mxu0 %v991
        %1120 = vmatmul.bf16.gmra.mxu0 %v752
        %v1121 = vpop.f32.mrf.mxu0
        %v1122 = vadd.f32 %v1109, %v1121
        %v1123 = vpop.f32.mrf.mxu0
        %1124 = vdwg.mxu0
        %v1125 = vld [vmem:[%s3] sm:$0x1]
        %v1126 = vld [vmem:[%s4] sm:$0x1]
        %vm1127 = vcmask 520192
        %v1128 = vsel %vm1127, %v1122, 0.0
        %1129 = vadd.xlane.f32.xlu0 %v1128
        %v1130 = vpop.xlane.xlu0 %1129
        %v1131 = vrcp.pop 64.0
        %v1132 = vmul.f32 64.0, %v1131
        %v1133 = vsub.f32 1.0, %v1132
        %v1134 = vmul.f32 %v1131, %v1133
        %v1135 = vadd.f32 %v1131, %v1134
        %vm1136 = vweird.f32 %v1131
        %v1137 = vsel %vm1136, %v1131, %v1135
        %v1138 = vmul.f32 %v1130, %v1137
        %v1139 = vsub.f32 %v1122, %v1138
        %v1140 = vmul.f32 %v1139, %v1139
        %v1141 = vsel %vm1127, %v1140, 0.0
        %1142 = vadd.xlane.f32.xlu0 %v1141
        %v1143 = vpop.xlane.xlu0 %1142
        %v1144 = vmul.f32 %v1143, %v1137
        %v1145 = vadd.f32 %v1144, 1e-12
        %v1146 = vrsqrt.pop %v1145
        %v1147 = vmul.f32 %v1146, %v1145
        %v1148 = vmul.f32 %v1147, %v1146
        %v1149 = vmul.f32 0.5, %v1148
        %v1150 = vsub.f32 1.5, %v1149
        %v1151 = vmul.f32 %v1146, %v1150
        %vm1152 = vweird.f32 %v1145
        %vm1153 = vweird.f32 %v1146
        %vm1154 = vmor %vm1152, %vm1153
        %v1155 = vsel %vm1154, %v1146, %v1151
        %v1156 = vmul.f32 %v1139, %v1155
        %v1158 = vperm.slane %v1125, 0
        %v1160 = vmul.f32 %v1156, %v1158
        %v1162 = vperm.slane %v1126, 0
        %v1164 = vadd.f32 %v1160, %v1162
        %v1165 = vpack.c.bf16 %v1164, %v1164
        %v1166 = vld [vmem:[%s5] sm:$0xf]
        %v1167 = vld [vmem:[%s5 + $0x4] sm:$0xf]
        %v1168 = vld [vmem:[%s5 + $0x8] sm:$0xf]
        %v1169 = vld [vmem:[%s5 + $0xc] sm:$0xf]
        %v1170 = vld [vmem:[%s5 + $0x10] sm:$0xf]
        %v1171 = vld [vmem:[%s5 + $0x14] sm:$0xf]
        %v1172 = vld [vmem:[%s5 + $0x18] sm:$0xf]
        %v1173 = vld [vmem:[%s5 + $0x1c] sm:$0xf]
        %v1174 = vld [vmem:[%s5 + $0x20] sm:$0xf]
        %v1175 = vld [vmem:[%s5 + $0x24] sm:$0xf]
        %v1176 = vld [vmem:[%s5 + $0x28] sm:$0xf]
        %v1177 = vld [vmem:[%s5 + $0x2c] sm:$0xf]
        %v1178 = vld [vmem:[%s5 + $0x30] sm:$0xf]
        %v1179 = vld [vmem:[%s5 + $0x34] sm:$0xf]
        %v1180 = vld [vmem:[%s5 + $0x38] sm:$0xf]
        %v1181 = vld [vmem:[%s5 + $0x3c] sm:$0xf]
        %v1182 = vld [vmem:[%s5 + $0x40] sm:$0xf]
        %v1183 = vld [vmem:[%s5 + $0x44] sm:$0xf]
        %v1184 = vld [vmem:[%s5 + $0x48] sm:$0xf]
        %v1185 = vld [vmem:[%s5 + $0x4c] sm:$0xf]
        %v1186 = vld [vmem:[%s5 + $0x50] sm:$0xf]
        %v1187 = vld [vmem:[%s5 + $0x54] sm:$0xf]
        %v1188 = vld [vmem:[%s5 + $0x58] sm:$0xf]
        %v1189 = vld [vmem:[%s5 + $0x5c] sm:$0xf]
        %v1190 = vld [vmem:[%s5 + $0x60] sm:$0xf]
        %v1191 = vld [vmem:[%s5 + $0x64] sm:$0xf]
        %v1192 = vld [vmem:[%s5 + $0x68] sm:$0xf]
        %v1193 = vld [vmem:[%s5 + $0x6c] sm:$0xf]
        %v1194 = vld [vmem:[%s5 + $0x70] sm:$0xf]
        %v1195 = vld [vmem:[%s5 + $0x74] sm:$0xf]
        %v1196 = vld [vmem:[%s5 + $0x78] sm:$0xf]
        %v1197 = vld [vmem:[%s5 + $0x7c] sm:$0xf]
        %v1198 = vld [vmem:[%s6] sm:$0x1]
        %v1199 = vld [vmem:[%s6 + $0x1] sm:$0x1]
        %v1200 = vld [vmem:[%s6 + $0x2] sm:$0x1]
        %v1201 = vld [vmem:[%s6 + $0x3] sm:$0x1]
        %v1206 = vperm.slane %v1198, 0
        %v1207 = vperm.slane %v1199, 0
        %v1208 = vperm.slane %v1200, 0
        %v1209 = vperm.slane %v1201, 0
        %v1222 = vunpack.c.l.b16 %v1166
        %v1223 = vunpack.c.l.b16 %v1167
        %v1224 = vunpack.c.l.b16 %v1168
        %v1225 = vunpack.c.l.b16 %v1169
        %v1226 = vunpack.c.l.b16 %v1170
        %v1227 = vunpack.c.l.b16 %v1171
        %v1228 = vunpack.c.l.b16 %v1172
        %v1229 = vunpack.c.l.b16 %v1173
        %v1230 = vpack.c.b16 %v1223, %v1222
        %v1231 = vpack.c.b16 %v1225, %v1224
        %v1232 = vpack.c.b16 %v1227, %v1226
        %v1233 = vpack.c.b16 %v1229, %v1228
        %vm1238 = vcmask 523264
        %v1240 = vsel %vm1238, %v1165, 0
        %1242 = vmatpush.bf16.msra.mxu0 0
        %1243 = vmatpush.bf16.msra.mxu0 0
        %1244 = vmatpush.bf16.msra.mxu0 0
        %1245 = vmatpush.bf16.msra.mxu0 0
        %1246 = vmatpush.bf16.msra.mxu0 %v1233
        %1247 = vmatpush.bf16.msra.mxu0 %v1232
        %1248 = vmatpush.bf16.msra.mxu0 %v1231
        %1249 = vmatpush.bf16.msra.mxu0 %v1230
        %1250 = vmatmul.bf16.gmra.mxu0 %v1240
        %v1251 = vpop.f32.mrf.mxu0
        %v1252 = vadd.f32 %v1206, %v1251
        %v1253 = vpop.f32.mrf.mxu0
        %1254 = vdwg.mxu0
        %v1263 = vunpack.c.l.b16 %v1174
        %v1264 = vunpack.c.l.b16 %v1175
        %v1265 = vunpack.c.l.b16 %v1176
        %v1266 = vunpack.c.l.b16 %v1177
        %v1267 = vunpack.c.l.b16 %v1178
        %v1268 = vunpack.c.l.b16 %v1179
        %v1269 = vunpack.c.l.b16 %v1180
        %v1270 = vunpack.c.l.b16 %v1181
        %v1271 = vpack.c.b16 %v1264, %v1263
        %v1272 = vpack.c.b16 %v1266, %v1265
        %v1273 = vpack.c.b16 %v1268, %v1267
        %v1274 = vpack.c.b16 %v1270, %v1269
        %1279 = vmatpush.bf16.msra.mxu0 0
        %1280 = vmatpush.bf16.msra.mxu0 0
        %1281 = vmatpush.bf16.msra.mxu0 0
        %1282 = vmatpush.bf16.msra.mxu0 0
        %1283 = vmatpush.bf16.msra.mxu0 %v1274
        %1284 = vmatpush.bf16.msra.mxu0 %v1273
        %1285 = vmatpush.bf16.msra.mxu0 %v1272
        %1286 = vmatpush.bf16.msra.mxu0 %v1271
        %1287 = vmatmul.bf16.gmra.mxu0 %v1240
        %v1288 = vpop.f32.mrf.mxu0
        %v1289 = vadd.f32 %v1207, %v1288
        %v1290 = vpop.f32.mrf.mxu0
        %1291 = vdwg.mxu0
        %v1300 = vunpack.c.l.b16 %v1182
        %v1301 = vunpack.c.l.b16 %v1183
        %v1302 = vunpack.c.l.b16 %v1184
        %v1303 = vunpack.c.l.b16 %v1185
        %v1304 = vunpack.c.l.b16 %v1186
        %v1305 = vunpack.c.l.b16 %v1187
        %v1306 = vunpack.c.l.b16 %v1188
        %v1307 = vunpack.c.l.b16 %v1189
        %v1308 = vpack.c.b16 %v1301, %v1300
        %v1309 = vpack.c.b16 %v1303, %v1302
        %v1310 = vpack.c.b16 %v1305, %v1304
        %v1311 = vpack.c.b16 %v1307, %v1306
        %1316 = vmatpush.bf16.msra.mxu0 0
        %1317 = vmatpush.bf16.msra.mxu0 0
        %1318 = vmatpush.bf16.msra.mxu0 0
        %1319 = vmatpush.bf16.msra.mxu0 0
        %1320 = vmatpush.bf16.msra.mxu0 %v1311
        %1321 = vmatpush.bf16.msra.mxu0 %v1310
        %1322 = vmatpush.bf16.msra.mxu0 %v1309
        %1323 = vmatpush.bf16.msra.mxu0 %v1308
        %1324 = vmatmul.bf16.gmra.mxu0 %v1240
        %v1325 = vpop.f32.mrf.mxu0
        %v1326 = vadd.f32 %v1208, %v1325
        %v1327 = vpop.f32.mrf.mxu0
        %1328 = vdwg.mxu0
        %v1337 = vunpack.c.l.b16 %v1190
        %v1338 = vunpack.c.l.b16 %v1191
        %v1339 = vunpack.c.l.b16 %v1192
        %v1340 = vunpack.c.l.b16 %v1193
        %v1341 = vunpack.c.l.b16 %v1194
        %v1342 = vunpack.c.l.b16 %v1195
        %v1343 = vunpack.c.l.b16 %v1196
        %v1344 = vunpack.c.l.b16 %v1197
        %v1345 = vpack.c.b16 %v1338, %v1337
        %v1346 = vpack.c.b16 %v1340, %v1339
        %v1347 = vpack.c.b16 %v1342, %v1341
        %v1348 = vpack.c.b16 %v1344, %v1343
        %1353 = vmatpush.bf16.msra.mxu0 0
        %1354 = vmatpush.bf16.msra.mxu0 0
        %1355 = vmatpush.bf16.msra.mxu0 0
        %1356 = vmatpush.bf16.msra.mxu0 0
        %1357 = vmatpush.bf16.msra.mxu0 %v1348
        %1358 = vmatpush.bf16.msra.mxu0 %v1347
        %1359 = vmatpush.bf16.msra.mxu0 %v1346
        %1360 = vmatpush.bf16.msra.mxu0 %v1345
        %1361 = vmatmul.bf16.gmra.mxu0 %v1240
        %v1362 = vpop.f32.mrf.mxu0
        %v1363 = vadd.f32 %v1209, %v1362
        %v1364 = vpop.f32.mrf.mxu0
        %1365 = vdwg.mxu0
        %v1366 = vpack.c.bf16 %v1252, %v1252
        %v1367 = vpack.c.bf16 %v1289, %v1289
        %v1368 = vpack.c.bf16 %v1326, %v1326
        %v1369 = vpack.c.bf16 %v1363, %v1363
        %v1371 = vunpack.c.l.b16 %v1366
        %v1372 = vpack.c.b16 %v1371, %v1371
        %1373 = vrot.lane.b32.xlu0 %v1372, 112
        %v1374 = vpop.permute.xlu0 %1373
        %vm1375 = vcmask 130048
        %v1377 = vsel %vm1375, %v1366, 0
        %v1380 = vsel %vm1375, %v1374, 0
        %1382 = vmatpush.bf16.xpose.msra.mxu0 0
        %1383 = vmatpush.bf16.xpose.msra.mxu0 0
        %1384 = vmatpush.bf16.xpose.msra.mxu0 0
        %1385 = vmatpush.bf16.xpose.msra.mxu0 0
        %1386 = vmatpush.bf16.xpose.msra.mxu0 0
        %1387 = vmatpush.bf16.xpose.msra.mxu0 0
        %1388 = vmatpush.bf16.xpose.msra.mxu0 0
        %1389 = vmatpush.bf16.xpose.msra.mxu0 %v1380
        %1390 = vmatmul.bf16.gmra.mxu0 %v1377
        %v1391 = vpop.f32.mrf.mxu0
        %v1392 = vadd.f32 0.0, %v1391
        %v1393 = vpop.f32.mrf.mxu0
        %1394 = vdwg.mxu0
        %v1396 = vunpack.c.l.b16 %v1367
        %v1397 = vpack.c.b16 %v1396, %v1396
        %1398 = vrot.lane.b32.xlu0 %v1397, 112
        %v1399 = vpop.permute.xlu0 %1398
        %v1401 = vsel %vm1375, %v1367, 0
        %v1404 = vsel %vm1375, %v1399, 0
        %1406 = vmatpush.bf16.xpose.msra.mxu0 0
        %1407 = vmatpush.bf16.xpose.msra.mxu0 0
        %1408 = vmatpush.bf16.xpose.msra.mxu0 0
        %1409 = vmatpush.bf16.xpose.msra.mxu0 0
        %1410 = vmatpush.bf16.xpose.msra.mxu0 0
        %1411 = vmatpush.bf16.xpose.msra.mxu0 0
        %1412 = vmatpush.bf16.xpose.msra.mxu0 0
        %1413 = vmatpush.bf16.xpose.msra.mxu0 %v1404
        %1414 = vmatmul.bf16.gmra.mxu0 %v1401
        %v1415 = vpop.f32.mrf.mxu0
        %v1416 = vadd.f32 0.0, %v1415
        %v1417 = vpop.f32.mrf.mxu0
        %1418 = vdwg.mxu0
        %v1420 = vunpack.c.l.b16 %v1368
        %v1421 = vpack.c.b16 %v1420, %v1420
        %1422 = vrot.lane.b32.xlu0 %v1421, 112
        %v1423 = vpop.permute.xlu0 %1422
        %v1425 = vsel %vm1375, %v1368, 0
        %v1428 = vsel %vm1375, %v1423, 0
        %1430 = vmatpush.bf16.xpose.msra.mxu0 0
        %1431 = vmatpush.bf16.xpose.msra.mxu0 0
        %1432 = vmatpush.bf16.xpose.msra.mxu0 0
        %1433 = vmatpush.bf16.xpose.msra.mxu0 0
        %1434 = vmatpush.bf16.xpose.msra.mxu0 0
        %1435 = vmatpush.bf16.xpose.msra.mxu0 0
        %1436 = vmatpush.bf16.xpose.msra.mxu0 0
        %1437 = vmatpush.bf16.xpose.msra.mxu0 %v1428
        %1438 = vmatmul.bf16.gmra.mxu0 %v1425
        %v1439 = vpop.f32.mrf.mxu0
        %v1440 = vadd.f32 0.0, %v1439
        %v1441 = vpop.f32.mrf.mxu0
        %1442 = vdwg.mxu0
        %v1444 = vunpack.c.l.b16 %v1369
        %v1445 = vpack.c.b16 %v1444, %v1444
        %1446 = vrot.lane.b32.xlu0 %v1445, 112
        %v1447 = vpop.permute.xlu0 %1446
        %v1449 = vsel %vm1375, %v1369, 0
        %v1452 = vsel %vm1375, %v1447, 0
        %1454 = vmatpush.bf16.xpose.msra.mxu0 0
        %1455 = vmatpush.bf16.xpose.msra.mxu0 0
        %1456 = vmatpush.bf16.xpose.msra.mxu0 0
        %1457 = vmatpush.bf16.xpose.msra.mxu0 0
        %1458 = vmatpush.bf16.xpose.msra.mxu0 0
        %1459 = vmatpush.bf16.xpose.msra.mxu0 0
        %1460 = vmatpush.bf16.xpose.msra.mxu0 0
        %1461 = vmatpush.bf16.xpose.msra.mxu0 %v1452
        %1462 = vmatmul.bf16.gmra.mxu0 %v1449
        %v1463 = vpop.f32.mrf.mxu0
        %v1464 = vadd.f32 0.0, %v1463
        %v1465 = vpop.f32.mrf.mxu0
        %1466 = vdwg.mxu0
        %v1467 = vmul.f32 %v1392, 0.25
        %v1468 = vmul.f32 %v1416, 0.25
        %v1469 = vmul.f32 %v1440, 0.25
        %v1470 = vmul.f32 %v1464, 0.25
        %vm1471 = vcmask 36864
        %v1472 = vsel %vm1471, %v1467, -inf
        %1473 = vmax.xlane.f32.xlu0 %v1472
        %v1474 = vpop.xlane.xlu0 %1473
        %v1475 = vsel %vm1471, %v1468, -inf
        %1476 = vmax.xlane.f32.xlu0 %v1475
        %v1477 = vpop.xlane.xlu0 %1476
        %v1478 = vsel %vm1471, %v1469, -inf
        %1479 = vmax.xlane.f32.xlu0 %v1478
        %v1480 = vpop.xlane.xlu0 %1479
        %v1481 = vsel %vm1471, %v1470, -inf
        %1482 = vmax.xlane.f32.xlu0 %v1481
        %v1483 = vpop.xlane.xlu0 %1482
        %v1484 = vsub.f32 %v1467, %v1474
        %v1485 = vsub.f32 %v1468, %v1477
        %v1486 = vsub.f32 %v1469, %v1480
        %v1487 = vsub.f32 %v1470, %v1483
        %v1488 = vmul.f32 %v1484, 1.442695
        %v1489 = vpow.pop %v1488
        %v1490 = vmul.f32 %v1485, 1.442695
        %v1491 = vpow.pop %v1490
        %v1492 = vmul.f32 %v1486, 1.442695
        %v1493 = vpow.pop %v1492
        %v1494 = vmul.f32 %v1487, 1.442695
        %v1495 = vpow.pop %v1494
        %v1496 = vsel %vm1471, %v1489, 0.0
        %1497 = vadd.xlane.f32.xlu0 %v1496
        %v1498 = vpop.xlane.xlu0 %1497
        %v1499 = vsel %vm1471, %v1491, 0.0
        %1500 = vadd.xlane.f32.xlu0 %v1499
        %v1501 = vpop.xlane.xlu0 %1500
        %v1502 = vsel %vm1471, %v1493, 0.0
        %1503 = vadd.xlane.f32.xlu0 %v1502
        %v1504 = vpop.xlane.xlu0 %1503
        %v1505 = vsel %vm1471, %v1495, 0.0
        %1506 = vadd.xlane.f32.xlu0 %v1505
        %v1507 = vpop.xlane.xlu0 %1506
        %v1508 = vrcp.pop %v1498
        %v1509 = vrcp.pop %v1501
        %v1510 = vrcp.pop %v1504
        %v1511 = vrcp.pop %v1507
        %v1512 = vmul.f32 %v1489, %v1508
        %v1513 = vmul.f32 %v1491, %v1509
        %v1514 = vmul.f32 %v1493, %v1510
        %v1515 = vmul.f32 %v1495, %v1511
        %v1516 = vpack.c.bf16 %v1512, %v1512
        %v1517 = vpack.c.bf16 %v1513, %v1513
        %v1518 = vpack.c.bf16 %v1514, %v1514
        %v1519 = vpack.c.bf16 %v1515, %v1515
        %1520 = vrot.lane.b32.xlu0 %v1372, 96
        %v1521 = vpop.permute.xlu0 %1520
        %vm1522 = vcmask 39936
        %v1524 = vsel %vm1522, %v1516, 0
        %vm1526 = vcmask 1041408
        %vm1527 = vcmask 1042432
        %v1528 = vsel %vm1526, 4294967295, 65535
        %v1529 = vsel %vm1527, %v1528, 0
        %v1531 = vand.u32 %v1521, %v1529
        %1533 = vmatpush.bf16.msra.mxu0 0
        %1534 = vmatpush.bf16.msra.mxu0 0
        %1535 = vmatpush.bf16.msra.mxu0 0
        %1536 = vmatpush.bf16.msra.mxu0 0
        %1537 = vmatpush.bf16.msra.mxu0 0
        %1538 = vmatpush.bf16.msra.mxu0 0
        %1539 = vmatpush.bf16.msra.mxu0 0
        %1540 = vmatpush.bf16.msra.mxu0 %v1531
        %1541 = vmatmul.bf16.gmra.mxu0 %v1524
        %v1542 = vpop.f32.mrf.mxu0
        %v1543 = vadd.f32 0.0, %v1542
        %v1544 = vpop.f32.mrf.mxu0
        %1545 = vdwg.mxu0
        %1546 = vrot.lane.b32.xlu0 %v1397, 96
        %v1547 = vpop.permute.xlu0 %1546
        %v1549 = vsel %vm1522, %v1517, 0
        %v1552 = vand.u32 %v1547, %v1529
        %1554 = vmatpush.bf16.msra.mxu0 0
        %1555 = vmatpush.bf16.msra.mxu0 0
        %1556 = vmatpush.bf16.msra.mxu0 0
        %1557 = vmatpush.bf16.msra.mxu0 0
        %1558 = vmatpush.bf16.msra.mxu0 0
        %1559 = vmatpush.bf16.msra.mxu0 0
        %1560 = vmatpush.bf16.msra.mxu0 0
        %1561 = vmatpush.bf16.msra.mxu0 %v1552
        %1562 = vmatmul.bf16.gmra.mxu0 %v1549
        %v1563 = vpop.f32.mrf.mxu0
        %v1564 = vadd.f32 0.0, %v1563
        %v1565 = vpop.f32.mrf.mxu0
        %1566 = vdwg.mxu0
        %1567 = vrot.lane.b32.xlu0 %v1421, 96
        %v1568 = vpop.permute.xlu0 %1567
        %v1570 = vsel %vm1522, %v1518, 0
        %v1573 = vand.u32 %v1568, %v1529
        %1575 = vmatpush.bf16.msra.mxu0 0
        %1576 = vmatpush.bf16.msra.mxu0 0
        %1577 = vmatpush.bf16.msra.mxu0 0
        %1578 = vmatpush.bf16.msra.mxu0 0
        %1579 = vmatpush.bf16.msra.mxu0 0
        %1580 = vmatpush.bf16.msra.mxu0 0
        %1581 = vmatpush.bf16.msra.mxu0 0
        %1582 = vmatpush.bf16.msra.mxu0 %v1573
        %1583 = vmatmul.bf16.gmra.mxu0 %v1570
        %v1584 = vpop.f32.mrf.mxu0
        %v1585 = vadd.f32 0.0, %v1584
        %v1586 = vpop.f32.mrf.mxu0
        %1587 = vdwg.mxu0
        %1588 = vrot.lane.b32.xlu0 %v1445, 96
        %v1589 = vpop.permute.xlu0 %1588
        %v1591 = vsel %vm1522, %v1519, 0
        %v1594 = vand.u32 %v1589, %v1529
        %1596 = vmatpush.bf16.msra.mxu0 0
        %1597 = vmatpush.bf16.msra.mxu0 0
        %1598 = vmatpush.bf16.msra.mxu0 0
        %1599 = vmatpush.bf16.msra.mxu0 0
        %1600 = vmatpush.bf16.msra.mxu0 0
        %1601 = vmatpush.bf16.msra.mxu0 0
        %1602 = vmatpush.bf16.msra.mxu0 0
        %1603 = vmatpush.bf16.msra.mxu0 %v1594
        %1604 = vmatmul.bf16.gmra.mxu0 %v1591
        %v1605 = vpop.f32.mrf.mxu0
        %v1606 = vadd.f32 0.0, %v1605
        %v1607 = vpop.f32.mrf.mxu0
        %1608 = vdwg.mxu0
        %v1609 = vpack.c.bf16 %v1543, %v1543
        %v1610 = vpack.c.bf16 %v1564, %v1564
        %v1611 = vpack.c.bf16 %v1585, %v1585
        %v1612 = vpack.c.bf16 %v1606, %v1606
        %v1613 = vld [vmem:[%s7] sm:$0xf]
        %v1614 = vld [vmem:[%s7 + $0x4] sm:$0xf]
        %v1615 = vld [vmem:[%s7 + $0x8] sm:$0xf]
        %v1616 = vld [vmem:[%s7 + $0xc] sm:$0xf]
        %v1617 = vld [vmem:[%s7 + $0x10] sm:$0xf]
        %v1618 = vld [vmem:[%s7 + $0x14] sm:$0xf]
        %v1619 = vld [vmem:[%s7 + $0x18] sm:$0xf]
        %v1620 = vld [vmem:[%s7 + $0x1c] sm:$0xf]
        %v1623 = vunpack.c.l.b16 %v1613
        %v1624 = vunpack.c.l.b16 %v1614
        %v1625 = vpack.c.b16 %v1624, %v1623
        %v1628 = vsel %vm1375, %v1609, 0
        %1630 = vmatpush.bf16.msra.mxu0 0
        %1631 = vmatpush.bf16.msra.mxu0 0
        %1632 = vmatpush.bf16.msra.mxu0 0
        %1633 = vmatpush.bf16.msra.mxu0 0
        %1634 = vmatpush.bf16.msra.mxu0 0
        %1635 = vmatpush.bf16.msra.mxu0 0
        %1636 = vmatpush.bf16.msra.mxu0 0
        %1637 = vmatpush.bf16.msra.mxu0 %v1625
        %1638 = vmatmul.bf16.gmra.mxu0 %v1628
        %v1639 = vpop.f32.mrf.mxu0
        %v1640 = vadd.f32 0.0, %v1639
        %v1641 = vpop.f32.mrf.mxu0
        %1642 = vdwg.mxu0
        %v1645 = vunpack.c.l.b16 %v1615
        %v1646 = vunpack.c.l.b16 %v1616
        %v1647 = vpack.c.b16 %v1646, %v1645
        %v1650 = vsel %vm1375, %v1610, 0
        %1652 = vmatpush.bf16.msra.mxu0 0
        %1653 = vmatpush.bf16.msra.mxu0 0
        %1654 = vmatpush.bf16.msra.mxu0 0
        %1655 = vmatpush.bf16.msra.mxu0 0
        %1656 = vmatpush.bf16.msra.mxu0 0
        %1657 = vmatpush.bf16.msra.mxu0 0
        %1658 = vmatpush.bf16.msra.mxu0 0
        %1659 = vmatpush.bf16.msra.mxu0 %v1647
        %1660 = vmatmul.bf16.gmra.mxu0 %v1650
        %v1661 = vpop.f32.mrf.mxu0
        %v1662 = vadd.f32 0.0, %v1661
        %v1663 = vpop.f32.mrf.mxu0
        %1664 = vdwg.mxu0
        %v1667 = vunpack.c.l.b16 %v1617
        %v1668 = vunpack.c.l.b16 %v1618
        %v1669 = vpack.c.b16 %v1668, %v1667
        %v1672 = vsel %vm1375, %v1611, 0
        %1674 = vmatpush.bf16.msra.mxu0 0
        %1675 = vmatpush.bf16.msra.mxu0 0
        %1676 = vmatpush.bf16.msra.mxu0 0
        %1677 = vmatpush.bf16.msra.mxu0 0
        %1678 = vmatpush.bf16.msra.mxu0 0
        %1679 = vmatpush.bf16.msra.mxu0 0
        %1680 = vmatpush.bf16.msra.mxu0 0
        %1681 = vmatpush.bf16.msra.mxu0 %v1669
        %1682 = vmatmul.bf16.gmra.mxu0 %v1672
        %v1683 = vpop.f32.mrf.mxu0
        %v1684 = vadd.f32 0.0, %v1683
        %v1685 = vpop.f32.mrf.mxu0
        %1686 = vdwg.mxu0
        %v1689 = vunpack.c.l.b16 %v1619
        %v1690 = vunpack.c.l.b16 %v1620
        %v1691 = vpack.c.b16 %v1690, %v1689
        %v1694 = vsel %vm1375, %v1612, 0
        %1696 = vmatpush.bf16.msra.mxu0 0
        %1697 = vmatpush.bf16.msra.mxu0 0
        %1698 = vmatpush.bf16.msra.mxu0 0
        %1699 = vmatpush.bf16.msra.mxu0 0
        %1700 = vmatpush.bf16.msra.mxu0 0
        %1701 = vmatpush.bf16.msra.mxu0 0
        %1702 = vmatpush.bf16.msra.mxu0 0
        %1703 = vmatpush.bf16.msra.mxu0 %v1691
        %1704 = vmatmul.bf16.gmra.mxu0 %v1694
        %v1705 = vpop.f32.mrf.mxu0
        %v1706 = vadd.f32 0.0, %v1705
        %v1707 = vpop.f32.mrf.mxu0
        %1708 = vdwg.mxu0
        %v1709 = vsel %vm1127, %v1640, 0.0
        %v1710 = vsel %vm1127, %v1662, 0.0
        %v1711 = vadd.f32 %v1709, %v1710
        %v1712 = vsel %vm1127, %v1684, 0.0
        %v1713 = vadd.f32 %v1711, %v1712
        %v1714 = vsel %vm1127, %v1706, 0.0
        %v1715 = vadd.f32 %v1713, %v1714
        %v1716 = vadd.f32 %v1122, %v1715
        %v1717 = vld [vmem:[%s8] sm:$0x1]
        %v1719 = vperm.slane %v1717, 0
        %v1721 = vadd.f32 %v1716, %v1719
        %v1722 = vld [vmem:[%s9] sm:$0x1]
        %v1723 = vld [vmem:[%s10] sm:$0x1]
        %v1724 = vsel %vm1127, %v1721, 0.0
        %1725 = vadd.xlane.f32.xlu0 %v1724
        %v1726 = vpop.xlane.xlu0 %1725
        %v1727 = vmul.f32 %v1726, %v1137
        %v1728 = vsub.f32 %v1721, %v1727
        %v1729 = vmul.f32 %v1728, %v1728
        %v1730 = vsel %vm1127, %v1729, 0.0
        %1731 = vadd.xlane.f32.xlu0 %v1730
        %v1732 = vpop.xlane.xlu0 %1731
        %v1733 = vmul.f32 %v1732, %v1137
        %v1734 = vadd.f32 %v1733, 1e-12
        %v1735 = vrsqrt.pop %v1734
        %v1736 = vmul.f32 %v1735, %v1734
        %v1737 = vmul.f32 %v1736, %v1735
        %v1738 = vmul.f32 0.5, %v1737
        %v1739 = vsub.f32 1.5, %v1738
        %v1740 = vmul.f32 %v1735, %v1739
        %vm1741 = vweird.f32 %v1734
        %vm1742 = vweird.f32 %v1735
        %vm1743 = vmor %vm1741, %vm1742
        %v1744 = vsel %vm1743, %v1735, %v1740
        %v1745 = vmul.f32 %v1728, %v1744
        %v1747 = vperm.slane %v1722, 0
        %v1749 = vmul.f32 %v1745, %v1747
        %v1751 = vperm.slane %v1723, 0
        %v1753 = vadd.f32 %v1749, %v1751
        %v1754 = vpack.c.bf16 %v1753, %v1753
        %v1755 = vld [vmem:[%s11] sm:$0xff]
        %v1756 = vld [vmem:[%s11 + $0x8] sm:$0xff]
        %v1757 = vld [vmem:[%s11 + $0x10] sm:$0xff]
        %v1758 = vld [vmem:[%s11 + $0x18] sm:$0xff]
        %v1759 = vld [vmem:[%s11 + $0x20] sm:$0xff]
        %v1760 = vld [vmem:[%s11 + $0x28] sm:$0xff]
        %v1761 = vld [vmem:[%s11 + $0x30] sm:$0xff]
        %v1762 = vld [vmem:[%s11 + $0x38] sm:$0xff]
        %v1763 = vld [vmem:[%s12] sm:$0x3]
        %v1765 = vperm.slane %v1763, 0
        %v1766 = vperm.slane %v1763, 1
        %v1777 = vunpack.c.l.b16 %v1755
        %v1778 = vunpack.c.h.b16 %v1755
        %v1779 = vunpack.c.l.b16 %v1756
        %v1780 = vunpack.c.h.b16 %v1756
        %v1781 = vunpack.c.l.b16 %v1757
        %v1782 = vunpack.c.h.b16 %v1757
        %v1783 = vunpack.c.l.b16 %v1758
        %v1784 = vunpack.c.h.b16 %v1758
        %v1785 = vunpack.c.l.b16 %v1759
        %v1786 = vunpack.c.h.b16 %v1759
        %v1787 = vunpack.c.l.b16 %v1760
        %v1788 = vunpack.c.h.b16 %v1760
        %v1789 = vunpack.c.l.b16 %v1761
        %v1790 = vunpack.c.h.b16 %v1761
        %v1791 = vunpack.c.l.b16 %v1762
        %v1792 = vunpack.c.h.b16 %v1762
        %v1793 = vpack.c.b16 %v1779, %v1777
        %v1794 = vpack.c.b16 %v1780, %v1778
        %v1795 = vpack.c.b16 %v1783, %v1781
        %v1796 = vpack.c.b16 %v1784, %v1782
        %v1797 = vpack.c.b16 %v1787, %v1785
        %v1798 = vpack.c.b16 %v1788, %v1786
        %v1799 = vpack.c.b16 %v1791, %v1789
        %v1800 = vpack.c.b16 %v1792, %v1790
        %v1810 = vsel %vm1238, %v1754, 0
        %1812 = vmatpush.bf16.msra.mxu0 0
        %1813 = vmatpush.bf16.msra.mxu0 0
        %1814 = vmatpush.bf16.msra.mxu0 0
        %1815 = vmatpush.bf16.msra.mxu0 0
        %1816 = vmatpush.bf16.msra.mxu0 %v1799
        %1817 = vmatpush.bf16.msra.mxu0 %v1797
        %1818 = vmatpush.bf16.msra.mxu0 %v1795
        %1819 = vmatpush.bf16.msra.mxu0 %v1793
        %1820 = vmatmul.bf16.gmra.mxu0 %v1810
        %v1821 = vpop.f32.mrf.mxu0
        %v1822 = vadd.f32 %v1765, %v1821
        %v1823 = vpop.f32.mrf.mxu0
        %1824 = vdwg.mxu0
        %1825 = vmatpush.bf16.msra.mxu0 0
        %1826 = vmatpush.bf16.msra.mxu0 0
        %1827 = vmatpush.bf16.msra.mxu0 0
        %1828 = vmatpush.bf16.msra.mxu0 0
        %1829 = vmatpush.bf16.msra.mxu0 %v1800
        %1830 = vmatpush.bf16.msra.mxu0 %v1798
        %1831 = vmatpush.bf16.msra.mxu0 %v1796
        %1832 = vmatpush.bf16.msra.mxu0 %v1794
        %1833 = vmatmul.bf16.gmra.mxu0 %v1810
        %v1834 = vpop.f32.mrf.mxu0
        %v1835 = vadd.f32 %v1766, %v1834
        %v1836 = vpop.f32.mrf.mxu0
        %1837 = vdwg.mxu0
        %v1838 = vmul.f32 %v1822, 0.5
        %v1839 = vmul.f32 %v1835, 0.5
        %v1840 = vmul.f32 %v1822, 0.044715
        %v1841 = vmul.f32 %v1835, 0.044715
        %v1842 = vmul.f32 %v1840, %v1822
        %v1843 = vmul.f32 %v1841, %v1835
        %v1844 = vmul.f32 %v1842, %v1822
        %v1845 = vmul.f32 %v1843, %v1835
        %v1846 = vadd.f32 %v1822, %v1844
        %v1847 = vadd.f32 %v1835, %v1845
        %v1848 = vmul.f32 %v1846, 0.7978846
        %v1849 = vmul.f32 %v1847, 0.7978846
        %v1850 = vtanh.pop %v1848
        %v1851 = vtanh.pop %v1849
        %v1852 = vadd.f32 %v1850, 1.0
        %v1853 = vadd.f32 %v1851, 1.0
        %v1854 = vmul.f32 %v1838, %v1852
        %v1855 = vmul.f32 %v1839, %v1853
        %v1856 = vpack.c.bf16 %v1854, %v1854
        %v1857 = vpack.c.bf16 %v1855, %v1855
        %v1858 = vld [vmem:[%s13] sm:$0xf]
        %v1859 = vld [vmem:[%s13 + $0x4] sm:$0xf]
        %v1860 = vld [vmem:[%s13 + $0x8] sm:$0xf]
        %v1861 = vld [vmem:[%s13 + $0xc] sm:$0xf]
        %v1862 = vld [vmem:[%s13 + $0x10] sm:$0xf]
        %v1863 = vld [vmem:[%s13 + $0x14] sm:$0xf]
        %v1864 = vld [vmem:[%s13 + $0x18] sm:$0xf]
        %v1865 = vld [vmem:[%s13 + $0x1c] sm:$0xf]
        %v1866 = vld [vmem:[%s13 + $0x20] sm:$0xf]
        %v1867 = vld [vmem:[%s13 + $0x24] sm:$0xf]
        %v1868 = vld [vmem:[%s13 + $0x28] sm:$0xf]
        %v1869 = vld [vmem:[%s13 + $0x2c] sm:$0xf]
        %v1870 = vld [vmem:[%s13 + $0x30] sm:$0xf]
        %v1871 = vld [vmem:[%s13 + $0x34] sm:$0xf]
        %v1872 = vld [vmem:[%s13 + $0x38] sm:$0xf]
        %v1873 = vld [vmem:[%s13 + $0x3c] sm:$0xf]
        %v1874 = vld [vmem:[%s13 + $0x40] sm:$0xf]
        %v1875 = vld [vmem:[%s13 + $0x44] sm:$0xf]
        %v1876 = vld [vmem:[%s13 + $0x48] sm:$0xf]
        %v1877 = vld [vmem:[%s13 + $0x4c] sm:$0xf]
        %v1878 = vld [vmem:[%s13 + $0x50] sm:$0xf]
        %v1879 = vld [vmem:[%s13 + $0x54] sm:$0xf]
        %v1880 = vld [vmem:[%s13 + $0x58] sm:$0xf]
        %v1881 = vld [vmem:[%s13 + $0x5c] sm:$0xf]
        %v1882 = vld [vmem:[%s13 + $0x60] sm:$0xf]
        %v1883 = vld [vmem:[%s13 + $0x64] sm:$0xf]
        %v1884 = vld [vmem:[%s13 + $0x68] sm:$0xf]
        %v1885 = vld [vmem:[%s13 + $0x6c] sm:$0xf]
        %v1886 = vld [vmem:[%s13 + $0x70] sm:$0xf]
        %v1887 = vld [vmem:[%s13 + $0x74] sm:$0xf]
        %v1888 = vld [vmem:[%s13 + $0x78] sm:$0xf]
        %v1889 = vld [vmem:[%s13 + $0x7c] sm:$0xf]
        %v1922 = vunpack.c.l.b16 %v1858
        %v1923 = vunpack.c.l.b16 %v1859
        %v1924 = vunpack.c.l.b16 %v1860
        %v1925 = vunpack.c.l.b16 %v1861
        %v1926 = vunpack.c.l.b16 %v1862
        %v1927 = vunpack.c.l.b16 %v1863
        %v1928 = vunpack.c.l.b16 %v1864
        %v1929 = vunpack.c.l.b16 %v1865
        %v1930 = vunpack.c.l.b16 %v1866
        %v1931 = vunpack.c.l.b16 %v1867
        %v1932 = vunpack.c.l.b16 %v1868
        %v1933 = vunpack.c.l.b16 %v1869
        %v1934 = vunpack.c.l.b16 %v1870
        %v1935 = vunpack.c.l.b16 %v1871
        %v1936 = vunpack.c.l.b16 %v1872
        %v1937 = vunpack.c.l.b16 %v1873
        %v1938 = vunpack.c.l.b16 %v1874
        %v1939 = vunpack.c.l.b16 %v1875
        %v1940 = vunpack.c.l.b16 %v1876
        %v1941 = vunpack.c.l.b16 %v1877
        %v1942 = vunpack.c.l.b16 %v1878
        %v1943 = vunpack.c.l.b16 %v1879
        %v1944 = vunpack.c.l.b16 %v1880
        %v1945 = vunpack.c.l.b16 %v1881
        %v1946 = vunpack.c.l.b16 %v1882
        %v1947 = vunpack.c.l.b16 %v1883
        %v1948 = vunpack.c.l.b16 %v1884
        %v1949 = vunpack.c.l.b16 %v1885
        %v1950 = vunpack.c.l.b16 %v1886
        %v1951 = vunpack.c.l.b16 %v1887
        %v1952 = vunpack.c.l.b16 %v1888
        %v1953 = vunpack.c.l.b16 %v1889
        %v1954 = vpack.c.b16 %v1923, %v1922
        %v1955 = vpack.c.b16 %v1925, %v1924
        %v1956 = vpack.c.b16 %v1927, %v1926
        %v1957 = vpack.c.b16 %v1929, %v1928
        %v1958 = vpack.c.b16 %v1931, %v1930
        %v1959 = vpack.c.b16 %v1933, %v1932
        %v1960 = vpack.c.b16 %v1935, %v1934
        %v1961 = vpack.c.b16 %v1937, %v1936
        %v1962 = vpack.c.b16 %v1939, %v1938
        %v1963 = vpack.c.b16 %v1941, %v1940
        %v1964 = vpack.c.b16 %v1943, %v1942
        %v1965 = vpack.c.b16 %v1945, %v1944
        %v1966 = vpack.c.b16 %v1947, %v1946
        %v1967 = vpack.c.b16 %v1949, %v1948
        %v1968 = vpack.c.b16 %v1951, %v1950
        %v1969 = vpack.c.b16 %v1953, %v1952
        %1986 = vmatpush.bf16.msra.mxu0 %v1961
        %1987 = vmatpush.bf16.msra.mxu0 %v1960
        %1988 = vmatpush.bf16.msra.mxu0 %v1959
        %1989 = vmatpush.bf16.msra.mxu0 %v1958
        %1990 = vmatpush.bf16.msra.mxu0 %v1957
        %1991 = vmatpush.bf16.msra.mxu0 %v1956
        %1992 = vmatpush.bf16.msra.mxu0 %v1955
        %1993 = vmatpush.bf16.msra.mxu0 %v1954
        %1994 = vmatmul.bf16.gmra.mxu0 %v1856
        %v1995 = vpop.f32.mrf.mxu0
        %v1996 = vadd.f32 0.0, %v1995
        %v1997 = vpop.f32.mrf.mxu0
        %1998 = vdwg.mxu0
        %1999 = vmatpush.bf16.msra.mxu0 %v1969
        %2000 = vmatpush.bf16.msra.mxu0 %v1968
        %2001 = vmatpush.bf16.msra.mxu0 %v1967
        %2002 = vmatpush.bf16.msra.mxu0 %v1966
        %2003 = vmatpush.bf16.msra.mxu0 %v1965
        %2004 = vmatpush.bf16.msra.mxu0 %v1964
        %2005 = vmatpush.bf16.msra.mxu0 %v1963
        %2006 = vmatpush.bf16.msra.mxu0 %v1962
        %2007 = vmatmul.bf16.gmra.mxu0 %v1857
        %v2008 = vpop.f32.mrf.mxu0
        %v2009 = vadd.f32 %v1996, %v2008
        %v2010 = vpop.f32.mrf.mxu0
        %2011 = vdwg.mxu0
        %v2012 = vadd.f32 %v1721, %v2009
        %v2013 = vld [vmem:[%s14] sm:$0x1]
        %v2015 = vperm.slane %v2013, 0
        %v2017 = vadd.f32 %v2012, %v2015
        %s2018 = scalar_lea.vmem %s3, 1
        %v2019 = vld [vmem:[%s2018] sm:$0x1]
        %s2020 = scalar_lea.vmem %s4, 1
        %v2021 = vld [vmem:[%s2020] sm:$0x1]
        %v2022 = vsel %vm1127, %v2017, 0.0
        %2023 = vadd.xlane.f32.xlu0 %v2022
        %v2024 = vpop.xlane.xlu0 %2023
        %v2025 = vmul.f32 %v2024, %v1137
        %v2026 = vsub.f32 %v2017, %v2025
        %v2027 = vmul.f32 %v2026, %v2026
        %v2028 = vsel %vm1127, %v2027, 0.0
        %2029 = vadd.xlane.f32.xlu0 %v2028
        %v2030 = vpop.xlane.xlu0 %2029
        %v2031 = vmul.f32 %v2030, %v1137
        %v2032 = vadd.f32 %v2031, 1e-12
        %v2033 = vrsqrt.pop %v2032
        %v2034 = vmul.f32 %v2033, %v2032
        %v2035 = vmul.f32 %v2034, %v2033
        %v2036 = vmul.f32 0.5, %v2035
        %v2037 = vsub.f32 1.5, %v2036
        %v2038 = vmul.f32 %v2033, %v2037
        %vm2039 = vweird.f32 %v2032
        %vm2040 = vweird.f32 %v2033
        %vm2041 = vmor %vm2039, %vm2040
        %v2042 = vsel %vm2041, %v2033, %v2038
        %v2043 = vmul.f32 %v2026, %v2042
        %v2045 = vperm.slane %v2019, 0
        %v2047 = vmul.f32 %v2043, %v2045
        %v2049 = vperm.slane %v2021, 0
        %v2051 = vadd.f32 %v2047, %v2049
        %v2052 = vpack.c.bf16 %v2051, %v2051
        %s2053 = scalar_lea.vmem %s5, 128
        %v2054 = vld [vmem:[%s2053] sm:$0xf]
        %v2055 = vld [vmem:[%s2053 + $0x4] sm:$0xf]
        %v2056 = vld [vmem:[%s2053 + $0x8] sm:$0xf]
        %v2057 = vld [vmem:[%s2053 + $0xc] sm:$0xf]
        %v2058 = vld [vmem:[%s2053 + $0x10] sm:$0xf]
        %v2059 = vld [vmem:[%s2053 + $0x14] sm:$0xf]
        %v2060 = vld [vmem:[%s2053 + $0x18] sm:$0xf]
        %v2061 = vld [vmem:[%s2053 + $0x1c] sm:$0xf]
        %v2062 = vld [vmem:[%s2053 + $0x20] sm:$0xf]
        %v2063 = vld [vmem:[%s2053 + $0x24] sm:$0xf]
        %v2064 = vld [vmem:[%s2053 + $0x28] sm:$0xf]
        %v2065 = vld [vmem:[%s2053 + $0x2c] sm:$0xf]
        %v2066 = vld [vmem:[%s2053 + $0x30] sm:$0xf]
        %v2067 = vld [vmem:[%s2053 + $0x34] sm:$0xf]
        %v2068 = vld [vmem:[%s2053 + $0x38] sm:$0xf]
        %v2069 = vld [vmem:[%s2053 + $0x3c] sm:$0xf]
        %v2070 = vld [vmem:[%s2053 + $0x40] sm:$0xf]
        %v2071 = vld [vmem:[%s2053 + $0x44] sm:$0xf]
        %v2072 = vld [vmem:[%s2053 + $0x48] sm:$0xf]
        %v2073 = vld [vmem:[%s2053 + $0x4c] sm:$0xf]
        %v2074 = vld [vmem:[%s2053 + $0x50] sm:$0xf]
        %v2075 = vld [vmem:[%s2053 + $0x54] sm:$0xf]
        %v2076 = vld [vmem:[%s2053 + $0x58] sm:$0xf]
        %v2077 = vld [vmem:[%s2053 + $0x5c] sm:$0xf]
        %v2078 = vld [vmem:[%s2053 + $0x60] sm:$0xf]
        %v2079 = vld [vmem:[%s2053 + $0x64] sm:$0xf]
        %v2080 = vld [vmem:[%s2053 + $0x68] sm:$0xf]
        %v2081 = vld [vmem:[%s2053 + $0x6c] sm:$0xf]
        %v2082 = vld [vmem:[%s2053 + $0x70] sm:$0xf]
        %v2083 = vld [vmem:[%s2053 + $0x74] sm:$0xf]
        %v2084 = vld [vmem:[%s2053 + $0x78] sm:$0xf]
        %v2085 = vld [vmem:[%s2053 + $0x7c] sm:$0xf]
        %s2086 = scalar_lea.vmem %s6, 4
        %v2087 = vld [vmem:[%s2086] sm:$0x1]
        %v2088 = vld [vmem:[%s2086 + $0x1] sm:$0x1]
        %v2089 = vld [vmem:[%s2086 + $0x2] sm:$0x1]
        %v2090 = vld [vmem:[%s2086 + $0x3] sm:$0x1]
        %v2095 = vperm.slane %v2087, 0
        %v2096 = vperm.slane %v2088, 0
        %v2097 = vperm.slane %v2089, 0
        %v2098 = vperm.slane %v2090, 0
        %v2111 = vunpack.c.l.b16 %v2054
        %v2112 = vunpack.c.l.b16 %v2055
        %v2113 = vunpack.c.l.b16 %v2056
        %v2114 = vunpack.c.l.b16 %v2057
        %v2115 = vunpack.c.l.b16 %v2058
        %v2116 = vunpack.c.l.b16 %v2059
        %v2117 = vunpack.c.l.b16 %v2060
        %v2118 = vunpack.c.l.b16 %v2061
        %v2119 = vpack.c.b16 %v2112, %v2111
        %v2120 = vpack.c.b16 %v2114, %v2113
        %v2121 = vpack.c.b16 %v2116, %v2115
        %v2122 = vpack.c.b16 %v2118, %v2117
        %v2128 = vsel %vm1238, %v2052, 0
        %2130 = vmatpush.bf16.msra.mxu0 0
        %2131 = vmatpush.bf16.msra.mxu0 0
        %2132 = vmatpush.bf16.msra.mxu0 0
        %2133 = vmatpush.bf16.msra.mxu0 0
        %2134 = vmatpush.bf16.msra.mxu0 %v2122
        %2135 = vmatpush.bf16.msra.mxu0 %v2121
        %2136 = vmatpush.bf16.msra.mxu0 %v2120
        %2137 = vmatpush.bf16.msra.mxu0 %v2119
        %2138 = vmatmul.bf16.gmra.mxu0 %v2128
        %v2139 = vpop.f32.mrf.mxu0
        %v2140 = vadd.f32 %v2095, %v2139
        %v2141 = vpop.f32.mrf.mxu0
        %2142 = vdwg.mxu0
        %v2151 = vunpack.c.l.b16 %v2062
        %v2152 = vunpack.c.l.b16 %v2063
        %v2153 = vunpack.c.l.b16 %v2064
        %v2154 = vunpack.c.l.b16 %v2065
        %v2155 = vunpack.c.l.b16 %v2066
        %v2156 = vunpack.c.l.b16 %v2067
        %v2157 = vunpack.c.l.b16 %v2068
        %v2158 = vunpack.c.l.b16 %v2069
        %v2159 = vpack.c.b16 %v2152, %v2151
        %v2160 = vpack.c.b16 %v2154, %v2153
        %v2161 = vpack.c.b16 %v2156, %v2155
        %v2162 = vpack.c.b16 %v2158, %v2157
        %2167 = vmatpush.bf16.msra.mxu0 0
        %2168 = vmatpush.bf16.msra.mxu0 0
        %2169 = vmatpush.bf16.msra.mxu0 0
        %2170 = vmatpush.bf16.msra.mxu0 0
        %2171 = vmatpush.bf16.msra.mxu0 %v2162
        %2172 = vmatpush.bf16.msra.mxu0 %v2161
        %2173 = vmatpush.bf16.msra.mxu0 %v2160
        %2174 = vmatpush.bf16.msra.mxu0 %v2159
        %2175 = vmatmul.bf16.gmra.mxu0 %v2128
        %v2176 = vpop.f32.mrf.mxu0
        %v2177 = vadd.f32 %v2096, %v2176
        %v2178 = vpop.f32.mrf.mxu0
        %2179 = vdwg.mxu0
        %v2188 = vunpack.c.l.b16 %v2070
        %v2189 = vunpack.c.l.b16 %v2071
        %v2190 = vunpack.c.l.b16 %v2072
        %v2191 = vunpack.c.l.b16 %v2073
        %v2192 = vunpack.c.l.b16 %v2074
        %v2193 = vunpack.c.l.b16 %v2075
        %v2194 = vunpack.c.l.b16 %v2076
        %v2195 = vunpack.c.l.b16 %v2077
        %v2196 = vpack.c.b16 %v2189, %v2188
        %v2197 = vpack.c.b16 %v2191, %v2190
        %v2198 = vpack.c.b16 %v2193, %v2192
        %v2199 = vpack.c.b16 %v2195, %v2194
        %2204 = vmatpush.bf16.msra.mxu0 0
        %2205 = vmatpush.bf16.msra.mxu0 0
        %2206 = vmatpush.bf16.msra.mxu0 0
        %2207 = vmatpush.bf16.msra.mxu0 0
        %2208 = vmatpush.bf16.msra.mxu0 %v2199
        %2209 = vmatpush.bf16.msra.mxu0 %v2198
        %2210 = vmatpush.bf16.msra.mxu0 %v2197
        %2211 = vmatpush.bf16.msra.mxu0 %v2196
        %2212 = vmatmul.bf16.gmra.mxu0 %v2128
        %v2213 = vpop.f32.mrf.mxu0
        %v2214 = vadd.f32 %v2097, %v2213
        %v2215 = vpop.f32.mrf.mxu0
        %2216 = vdwg.mxu0
        %v2225 = vunpack.c.l.b16 %v2078
        %v2226 = vunpack.c.l.b16 %v2079
        %v2227 = vunpack.c.l.b16 %v2080
        %v2228 = vunpack.c.l.b16 %v2081
        %v2229 = vunpack.c.l.b16 %v2082
        %v2230 = vunpack.c.l.b16 %v2083
        %v2231 = vunpack.c.l.b16 %v2084
        %v2232 = vunpack.c.l.b16 %v2085
        %v2233 = vpack.c.b16 %v2226, %v2225
        %v2234 = vpack.c.b16 %v2228, %v2227
        %v2235 = vpack.c.b16 %v2230, %v2229
        %v2236 = vpack.c.b16 %v2232, %v2231
        %2241 = vmatpush.bf16.msra.mxu0 0
        %2242 = vmatpush.bf16.msra.mxu0 0
        %2243 = vmatpush.bf16.msra.mxu0 0
        %2244 = vmatpush.bf16.msra.mxu0 0
        %2245 = vmatpush.bf16.msra.mxu0 %v2236
        %2246 = vmatpush.bf16.msra.mxu0 %v2235
        %2247 = vmatpush.bf16.msra.mxu0 %v2234
        %2248 = vmatpush.bf16.msra.mxu0 %v2233
        %2249 = vmatmul.bf16.gmra.mxu0 %v2128
        %v2250 = vpop.f32.mrf.mxu0
        %v2251 = vadd.f32 %v2098, %v2250
        %v2252 = vpop.f32.mrf.mxu0
        %2253 = vdwg.mxu0
        %v2254 = vpack.c.bf16 %v2140, %v2140
        %v2255 = vpack.c.bf16 %v2177, %v2177
        %v2256 = vpack.c.bf16 %v2214, %v2214
        %v2257 = vpack.c.bf16 %v2251, %v2251
        %v2259 = vunpack.c.l.b16 %v2254
        %v2260 = vpack.c.b16 %v2259, %v2259
        %2261 = vrot.lane.b32.xlu0 %v2260, 112
        %v2262 = vpop.permute.xlu0 %2261
        %v2264 = vsel %vm1375, %v2254, 0
        %v2267 = vsel %vm1375, %v2262, 0
        %2269 = vmatpush.bf16.xpose.msra.mxu0 0
        %2270 = vmatpush.bf16.xpose.msra.mxu0 0
        %2271 = vmatpush.bf16.xpose.msra.mxu0 0
        %2272 = vmatpush.bf16.xpose.msra.mxu0 0
        %2273 = vmatpush.bf16.xpose.msra.mxu0 0
        %2274 = vmatpush.bf16.xpose.msra.mxu0 0
        %2275 = vmatpush.bf16.xpose.msra.mxu0 0
        %2276 = vmatpush.bf16.xpose.msra.mxu0 %v2267
        %2277 = vmatmul.bf16.gmra.mxu0 %v2264
        %v2278 = vpop.f32.mrf.mxu0
        %v2279 = vadd.f32 0.0, %v2278
        %v2280 = vpop.f32.mrf.mxu0
        %2281 = vdwg.mxu0
        %v2283 = vunpack.c.l.b16 %v2255
        %v2284 = vpack.c.b16 %v2283, %v2283
        %2285 = vrot.lane.b32.xlu0 %v2284, 112
        %v2286 = vpop.permute.xlu0 %2285
        %v2288 = vsel %vm1375, %v2255, 0
        %v2291 = vsel %vm1375, %v2286, 0
        %2293 = vmatpush.bf16.xpose.msra.mxu0 0
        %2294 = vmatpush.bf16.xpose.msra.mxu0 0
        %2295 = vmatpush.bf16.xpose.msra.mxu0 0
        %2296 = vmatpush.bf16.xpose.msra.mxu0 0
        %2297 = vmatpush.bf16.xpose.msra.mxu0 0
        %2298 = vmatpush.bf16.xpose.msra.mxu0 0
        %2299 = vmatpush.bf16.xpose.msra.mxu0 0
        %2300 = vmatpush.bf16.xpose.msra.mxu0 %v2291
        %2301 = vmatmul.bf16.gmra.mxu0 %v2288
        %v2302 = vpop.f32.mrf.mxu0
        %v2303 = vadd.f32 0.0, %v2302
        %v2304 = vpop.f32.mrf.mxu0
        %2305 = vdwg.mxu0
        %v2307 = vunpack.c.l.b16 %v2256
        %v2308 = vpack.c.b16 %v2307, %v2307
        %2309 = vrot.lane.b32.xlu0 %v2308, 112
        %v2310 = vpop.permute.xlu0 %2309
        %v2312 = vsel %vm1375, %v2256, 0
        %v2315 = vsel %vm1375, %v2310, 0
        %2317 = vmatpush.bf16.xpose.msra.mxu0 0
        %2318 = vmatpush.bf16.xpose.msra.mxu0 0
        %2319 = vmatpush.bf16.xpose.msra.mxu0 0
        %2320 = vmatpush.bf16.xpose.msra.mxu0 0
        %2321 = vmatpush.bf16.xpose.msra.mxu0 0
        %2322 = vmatpush.bf16.xpose.msra.mxu0 0
        %2323 = vmatpush.bf16.xpose.msra.mxu0 0
        %2324 = vmatpush.bf16.xpose.msra.mxu0 %v2315
        %2325 = vmatmul.bf16.gmra.mxu0 %v2312
        %v2326 = vpop.f32.mrf.mxu0
        %v2327 = vadd.f32 0.0, %v2326
        %v2328 = vpop.f32.mrf.mxu0
        %2329 = vdwg.mxu0
        %v2331 = vunpack.c.l.b16 %v2257
        %v2332 = vpack.c.b16 %v2331, %v2331
        %2333 = vrot.lane.b32.xlu0 %v2332, 112
        %v2334 = vpop.permute.xlu0 %2333
        %v2336 = vsel %vm1375, %v2257, 0
        %v2339 = vsel %vm1375, %v2334, 0
        %2341 = vmatpush.bf16.xpose.msra.mxu0 0
        %2342 = vmatpush.bf16.xpose.msra.mxu0 0
        %2343 = vmatpush.bf16.xpose.msra.mxu0 0
        %2344 = vmatpush.bf16.xpose.msra.mxu0 0
        %2345 = vmatpush.bf16.xpose.msra.mxu0 0
        %2346 = vmatpush.bf16.xpose.msra.mxu0 0
        %2347 = vmatpush.bf16.xpose.msra.mxu0 0
        %2348 = vmatpush.bf16.xpose.msra.mxu0 %v2339
        %2349 = vmatmul.bf16.gmra.mxu0 %v2336
        %v2350 = vpop.f32.mrf.mxu0
        %v2351 = vadd.f32 0.0, %v2350
        %v2352 = vpop.f32.mrf.mxu0
        %2353 = vdwg.mxu0
        %v2354 = vmul.f32 %v2279, 0.25
        %v2355 = vmul.f32 %v2303, 0.25
        %v2356 = vmul.f32 %v2327, 0.25
        %v2357 = vmul.f32 %v2351, 0.25
        %v2358 = vsel %vm1471, %v2354, -inf
        %2359 = vmax.xlane.f32.xlu0 %v2358
        %v2360 = vpop.xlane.xlu0 %2359
        %v2361 = vsel %vm1471, %v2355, -inf
        %2362 = vmax.xlane.f32.xlu0 %v2361
        %v2363 = vpop.xlane.xlu0 %2362
        %v2364 = vsel %vm1471, %v2356, -inf
        %2365 = vmax.xlane.f32.xlu0 %v2364
        %v2366 = vpop.xlane.xlu0 %2365
        %v2367 = vsel %vm1471, %v2357, -inf
        %2368 = vmax.xlane.f32.xlu0 %v2367
        %v2369 = vpop.xlane.xlu0 %2368
        %v2370 = vsub.f32 %v2354, %v2360
        %v2371 = vsub.f32 %v2355, %v2363
        %v2372 = vsub.f32 %v2356, %v2366
        %v2373 = vsub.f32 %v2357, %v2369
        %v2374 = vmul.f32 %v2370, 1.442695
        %v2375 = vpow.pop %v2374
        %v2376 = vmul.f32 %v2371, 1.442695
        %v2377 = vpow.pop %v2376
        %v2378 = vmul.f32 %v2372, 1.442695
        %v2379 = vpow.pop %v2378
        %v2380 = vmul.f32 %v2373, 1.442695
        %v2381 = vpow.pop %v2380
        %v2382 = vsel %vm1471, %v2375, 0.0
        %2383 = vadd.xlane.f32.xlu0 %v2382
        %v2384 = vpop.xlane.xlu0 %2383
        %v2385 = vsel %vm1471, %v2377, 0.0
        %2386 = vadd.xlane.f32.xlu0 %v2385
        %v2387 = vpop.xlane.xlu0 %2386
        %v2388 = vsel %vm1471, %v2379, 0.0
        %2389 = vadd.xlane.f32.xlu0 %v2388
        %v2390 = vpop.xlane.xlu0 %2389
        %v2391 = vsel %vm1471, %v2381, 0.0
        %2392 = vadd.xlane.f32.xlu0 %v2391
        %v2393 = vpop.xlane.xlu0 %2392
        %v2394 = vrcp.pop %v2384
        %v2395 = vrcp.pop %v2387
        %v2396 = vrcp.pop %v2390
        %v2397 = vrcp.pop %v2393
        %v2398 = vmul.f32 %v2375, %v2394
        %v2399 = vmul.f32 %v2377, %v2395
        %v2400 = vmul.f32 %v2379, %v2396
        %v2401 = vmul.f32 %v2381, %v2397
        %v2402 = vpack.c.bf16 %v2398, %v2398
        %v2403 = vpack.c.bf16 %v2399, %v2399
        %v2404 = vpack.c.bf16 %v2400, %v2400
        %v2405 = vpack.c.bf16 %v2401, %v2401
        %2406 = vrot.lane.b32.xlu0 %v2260, 96
        %v2407 = vpop.permute.xlu0 %2406
        %v2409 = vsel %vm1522, %v2402, 0
        %v2412 = vand.u32 %v2407, %v1529
        %2414 = vmatpush.bf16.msra.mxu0 0
        %2415 = vmatpush.bf16.msra.mxu0 0
        %2416 = vmatpush.bf16.msra.mxu0 0
        %2417 = vmatpush.bf16.msra.mxu0 0
        %2418 = vmatpush.bf16.msra.mxu0 0
        %2419 = vmatpush.bf16.msra.mxu0 0
        %2420 = vmatpush.bf16.msra.mxu0 0
        %2421 = vmatpush.bf16.msra.mxu0 %v2412
        %2422 = vmatmul.bf16.gmra.mxu0 %v2409
        %v2423 = vpop.f32.mrf.mxu0
        %v2424 = vadd.f32 0.0, %v2423
        %v2425 = vpop.f32.mrf.mxu0
        %2426 = vdwg.mxu0
        %2427 = vrot.lane.b32.xlu0 %v2284, 96
        %v2428 = vpop.permute.xlu0 %2427
        %v2430 = vsel %vm1522, %v2403, 0
        %v2433 = vand.u32 %v2428, %v1529
        %2435 = vmatpush.bf16.msra.mxu0 0
        %2436 = vmatpush.bf16.msra.mxu0 0
        %2437 = vmatpush.bf16.msra.mxu0 0
        %2438 = vmatpush.bf16.msra.mxu0 0
        %2439 = vmatpush.bf16.msra.mxu0 0
        %2440 = vmatpush.bf16.msra.mxu0 0
        %2441 = vmatpush.bf16.msra.mxu0 0
        %2442 = vmatpush.bf16.msra.mxu0 %v2433
        %2443 = vmatmul.bf16.gmra.mxu0 %v2430
        %v2444 = vpop.f32.mrf.mxu0
        %v2445 = vadd.f32 0.0, %v2444
        %v2446 = vpop.f32.mrf.mxu0
        %2447 = vdwg.mxu0
        %2448 = vrot.lane.b32.xlu0 %v2308, 96
        %v2449 = vpop.permute.xlu0 %2448
        %v2451 = vsel %vm1522, %v2404, 0
        %v2454 = vand.u32 %v2449, %v1529
        %2456 = vmatpush.bf16.msra.mxu0 0
        %2457 = vmatpush.bf16.msra.mxu0 0
        %2458 = vmatpush.bf16.msra.mxu0 0
        %2459 = vmatpush.bf16.msra.mxu0 0
        %2460 = vmatpush.bf16.msra.mxu0 0
        %2461 = vmatpush.bf16.msra.mxu0 0
        %2462 = vmatpush.bf16.msra.mxu0 0
        %2463 = vmatpush.bf16.msra.mxu0 %v2454
        %2464 = vmatmul.bf16.gmra.mxu0 %v2451
        %v2465 = vpop.f32.mrf.mxu0
        %v2466 = vadd.f32 0.0, %v2465
        %v2467 = vpop.f32.mrf.mxu0
        %2468 = vdwg.mxu0
        %2469 = vrot.lane.b32.xlu0 %v2332, 96
        %v2470 = vpop.permute.xlu0 %2469
        %v2472 = vsel %vm1522, %v2405, 0
        %v2475 = vand.u32 %v2470, %v1529
        %2477 = vmatpush.bf16.msra.mxu0 0
        %2478 = vmatpush.bf16.msra.mxu0 0
        %2479 = vmatpush.bf16.msra.mxu0 0
        %2480 = vmatpush.bf16.msra.mxu0 0
        %2481 = vmatpush.bf16.msra.mxu0 0
        %2482 = vmatpush.bf16.msra.mxu0 0
        %2483 = vmatpush.bf16.msra.mxu0 0
        %2484 = vmatpush.bf16.msra.mxu0 %v2475
        %2485 = vmatmul.bf16.gmra.mxu0 %v2472
        %v2486 = vpop.f32.mrf.mxu0
        %v2487 = vadd.f32 0.0, %v2486
        %v2488 = vpop.f32.mrf.mxu0
        %2489 = vdwg.mxu0
        %v2490 = vpack.c.bf16 %v2424, %v2424
        %v2491 = vpack.c.bf16 %v2445, %v2445
        %v2492 = vpack.c.bf16 %v2466, %v2466
        %v2493 = vpack.c.bf16 %v2487, %v2487
        %s2494 = scalar_lea.vmem %s7, 32
        %v2495 = vld [vmem:[%s2494] sm:$0xf]
        %v2496 = vld [vmem:[%s2494 + $0x4] sm:$0xf]
        %v2497 = vld [vmem:[%s2494 + $0x8] sm:$0xf]
        %v2498 = vld [vmem:[%s2494 + $0xc] sm:$0xf]
        %v2499 = vld [vmem:[%s2494 + $0x10] sm:$0xf]
        %v2500 = vld [vmem:[%s2494 + $0x14] sm:$0xf]
        %v2501 = vld [vmem:[%s2494 + $0x18] sm:$0xf]
        %v2502 = vld [vmem:[%s2494 + $0x1c] sm:$0xf]
        %v2505 = vunpack.c.l.b16 %v2495
        %v2506 = vunpack.c.l.b16 %v2496
        %v2507 = vpack.c.b16 %v2506, %v2505
        %v2510 = vsel %vm1375, %v2490, 0
        %2512 = vmatpush.bf16.msra.mxu0 0
        %2513 = vmatpush.bf16.msra.mxu0 0
        %2514 = vmatpush.bf16.msra.mxu0 0
        %2515 = vmatpush.bf16.msra.mxu0 0
        %2516 = vmatpush.bf16.msra.mxu0 0
        %2517 = vmatpush.bf16.msra.mxu0 0
        %2518 = vmatpush.bf16.msra.mxu0 0
        %2519 = vmatpush.bf16.msra.mxu0 %v2507
        %2520 = vmatmul.bf16.gmra.mxu0 %v2510
        %v2521 = vpop.f32.mrf.mxu0
        %v2522 = vadd.f32 0.0, %v2521
        %v2523 = vpop.f32.mrf.mxu0
        %2524 = vdwg.mxu0
        %v2527 = vunpack.c.l.b16 %v2497
        %v2528 = vunpack.c.l.b16 %v2498
        %v2529 = vpack.c.b16 %v2528, %v2527
        %v2532 = vsel %vm1375, %v2491, 0
        %2534 = vmatpush.bf16.msra.mxu0 0
        %2535 = vmatpush.bf16.msra.mxu0 0
        %2536 = vmatpush.bf16.msra.mxu0 0
        %2537 = vmatpush.bf16.msra.mxu0 0
        %2538 = vmatpush.bf16.msra.mxu0 0
        %2539 = vmatpush.bf16.msra.mxu0 0
        %2540 = vmatpush.bf16.msra.mxu0 0
        %2541 = vmatpush.bf16.msra.mxu0 %v2529
        %2542 = vmatmul.bf16.gmra.mxu0 %v2532
        %v2543 = vpop.f32.mrf.mxu0
        %v2544 = vadd.f32 0.0, %v2543
        %v2545 = vpop.f32.mrf.mxu0
        %2546 = vdwg.mxu0
        %v2549 = vunpack.c.l.b16 %v2499
        %v2550 = vunpack.c.l.b16 %v2500
        %v2551 = vpack.c.b16 %v2550, %v2549
        %v2554 = vsel %vm1375, %v2492, 0
        %2556 = vmatpush.bf16.msra.mxu0 0
        %2557 = vmatpush.bf16.msra.mxu0 0
        %2558 = vmatpush.bf16.msra.mxu0 0
        %2559 = vmatpush.bf16.msra.mxu0 0
        %2560 = vmatpush.bf16.msra.mxu0 0
        %2561 = vmatpush.bf16.msra.mxu0 0
        %2562 = vmatpush.bf16.msra.mxu0 0
        %2563 = vmatpush.bf16.msra.mxu0 %v2551
        %2564 = vmatmul.bf16.gmra.mxu0 %v2554
        %v2565 = vpop.f32.mrf.mxu0
        %v2566 = vadd.f32 0.0, %v2565
        %v2567 = vpop.f32.mrf.mxu0
        %2568 = vdwg.mxu0
        %v2571 = vunpack.c.l.b16 %v2501
        %v2572 = vunpack.c.l.b16 %v2502
        %v2573 = vpack.c.b16 %v2572, %v2571
        %v2576 = vsel %vm1375, %v2493, 0
        %2578 = vmatpush.bf16.msra.mxu0 0
        %2579 = vmatpush.bf16.msra.mxu0 0
        %2580 = vmatpush.bf16.msra.mxu0 0
        %2581 = vmatpush.bf16.msra.mxu0 0
        %2582 = vmatpush.bf16.msra.mxu0 0
        %2583 = vmatpush.bf16.msra.mxu0 0
        %2584 = vmatpush.bf16.msra.mxu0 0
        %2585 = vmatpush.bf16.msra.mxu0 %v2573
        %2586 = vmatmul.bf16.gmra.mxu0 %v2576
        %v2587 = vpop.f32.mrf.mxu0
        %v2588 = vadd.f32 0.0, %v2587
        %v2589 = vpop.f32.mrf.mxu0
        %2590 = vdwg.mxu0
        %v2591 = vsel %vm1127, %v2522, 0.0
        %v2592 = vsel %vm1127, %v2544, 0.0
        %v2593 = vadd.f32 %v2591, %v2592
        %v2594 = vsel %vm1127, %v2566, 0.0
        %v2595 = vadd.f32 %v2593, %v2594
        %v2596 = vsel %vm1127, %v2588, 0.0
        %v2597 = vadd.f32 %v2595, %v2596
        %v2598 = vadd.f32 %v2017, %v2597
        %s2599 = scalar_lea.vmem %s8, 1
        %v2600 = vld [vmem:[%s2599] sm:$0x1]
        %v2602 = vperm.slane %v2600, 0
        %v2604 = vadd.f32 %v2598, %v2602
        %s2605 = scalar_lea.vmem %s9, 1
        %v2606 = vld [vmem:[%s2605] sm:$0x1]
        %s2607 = scalar_lea.vmem %s10, 1
        %v2608 = vld [vmem:[%s2607] sm:$0x1]
        %v2609 = vsel %vm1127, %v2604, 0.0
        %2610 = vadd.xlane.f32.xlu0 %v2609
        %v2611 = vpop.xlane.xlu0 %2610
        %v2612 = vmul.f32 %v2611, %v1137
        %v2613 = vsub.f32 %v2604, %v2612
        %v2614 = vmul.f32 %v2613, %v2613
        %v2615 = vsel %vm1127, %v2614, 0.0
        %2616 = vadd.xlane.f32.xlu0 %v2615
        %v2617 = vpop.xlane.xlu0 %2616
        %v2618 = vmul.f32 %v2617, %v1137
        %v2619 = vadd.f32 %v2618, 1e-12
        %v2620 = vrsqrt.pop %v2619
        %v2621 = vmul.f32 %v2620, %v2619
        %v2622 = vmul.f32 %v2621, %v2620
        %v2623 = vmul.f32 0.5, %v2622
        %v2624 = vsub.f32 1.5, %v2623
        %v2625 = vmul.f32 %v2620, %v2624
        %vm2626 = vweird.f32 %v2619
        %vm2627 = vweird.f32 %v2620
        %vm2628 = vmor %vm2626, %vm2627
        %v2629 = vsel %vm2628, %v2620, %v2625
        %v2630 = vmul.f32 %v2613, %v2629
        %v2632 = vperm.slane %v2606, 0
        %v2634 = vmul.f32 %v2630, %v2632
        %v2636 = vperm.slane %v2608, 0
        %v2638 = vadd.f32 %v2634, %v2636
        %v2639 = vpack.c.bf16 %v2638, %v2638
        %s2640 = scalar_lea.vmem %s11, 64
        %v2641 = vld [vmem:[%s2640] sm:$0xff]
        %v2642 = vld [vmem:[%s2640 + $0x8] sm:$0xff]
        %v2643 = vld [vmem:[%s2640 + $0x10] sm:$0xff]
        %v2644 = vld [vmem:[%s2640 + $0x18] sm:$0xff]
        %v2645 = vld [vmem:[%s2640 + $0x20] sm:$0xff]
        %v2646 = vld [vmem:[%s2640 + $0x28] sm:$0xff]
        %v2647 = vld [vmem:[%s2640 + $0x30] sm:$0xff]
        %v2648 = vld [vmem:[%s2640 + $0x38] sm:$0xff]
        %s2649 = scalar_lea.vmem %s12, 2
        %v2650 = vld [vmem:[%s2649] sm:$0x3]
        %v2652 = vperm.slane %v2650, 0
        %v2653 = vperm.slane %v2650, 1
        %v2664 = vunpack.c.l.b16 %v2641
        %v2665 = vunpack.c.h.b16 %v2641
        %v2666 = vunpack.c.l.b16 %v2642
        %v2667 = vunpack.c.h.b16 %v2642
        %v2668 = vunpack.c.l.b16 %v2643
        %v2669 = vunpack.c.h.b16 %v2643
        %v2670 = vunpack.c.l.b16 %v2644
        %v2671 = vunpack.c.h.b16 %v2644
        %v2672 = vunpack.c.l.b16 %v2645
        %v2673 = vunpack.c.h.b16 %v2645
        %v2674 = vunpack.c.l.b16 %v2646
        %v2675 = vunpack.c.h.b16 %v2646
        %v2676 = vunpack.c.l.b16 %v2647
        %v2677 = vunpack.c.h.b16 %v2647
        %v2678 = vunpack.c.l.b16 %v2648
        %v2679 = vunpack.c.h.b16 %v2648
        %v2680 = vpack.c.b16 %v2666, %v2664
        %v2681 = vpack.c.b16 %v2667, %v2665
        %v2682 = vpack.c.b16 %v2670, %v2668
        %v2683 = vpack.c.b16 %v2671, %v2669
        %v2684 = vpack.c.b16 %v2674, %v2672
        %v2685 = vpack.c.b16 %v2675, %v2673
        %v2686 = vpack.c.b16 %v2678, %v2676
        %v2687 = vpack.c.b16 %v2679, %v2677
        %v2697 = vsel %vm1238, %v2639, 0
        %2699 = vmatpush.bf16.msra.mxu0 0
        %2700 = vmatpush.bf16.msra.mxu0 0
        %2701 = vmatpush.bf16.msra.mxu0 0
        %2702 = vmatpush.bf16.msra.mxu0 0
        %2703 = vmatpush.bf16.msra.mxu0 %v2686
        %2704 = vmatpush.bf16.msra.mxu0 %v2684
        %2705 = vmatpush.bf16.msra.mxu0 %v2682
        %2706 = vmatpush.bf16.msra.mxu0 %v2680
        %2707 = vmatmul.bf16.gmra.mxu0 %v2697
        %v2708 = vpop.f32.mrf.mxu0
        %v2709 = vadd.f32 %v2652, %v2708
        %v2710 = vpop.f32.mrf.mxu0
        %2711 = vdwg.mxu0
        %2712 = vmatpush.bf16.msra.mxu0 0
        %2713 = vmatpush.bf16.msra.mxu0 0
        %2714 = vmatpush.bf16.msra.mxu0 0
        %2715 = vmatpush.bf16.msra.mxu0 0
        %2716 = vmatpush.bf16.msra.mxu0 %v2687
        %2717 = vmatpush.bf16.msra.mxu0 %v2685
        %2718 = vmatpush.bf16.msra.mxu0 %v2683
        %2719 = vmatpush.bf16.msra.mxu0 %v2681
        %2720 = vmatmul.bf16.gmra.mxu0 %v2697
        %v2721 = vpop.f32.mrf.mxu0
        %v2722 = vadd.f32 %v2653, %v2721
        %v2723 = vpop.f32.mrf.mxu0
        %2724 = vdwg.mxu0
        %v2725 = vmul.f32 %v2709, 0.5
        %v2726 = vmul.f32 %v2722, 0.5
        %v2727 = vmul.f32 %v2709, 0.044715
        %v2728 = vmul.f32 %v2722, 0.044715
        %v2729 = vmul.f32 %v2727, %v2709
        %v2730 = vmul.f32 %v2728, %v2722
        %v2731 = vmul.f32 %v2729, %v2709
        %v2732 = vmul.f32 %v2730, %v2722
        %v2733 = vadd.f32 %v2709, %v2731
        %v2734 = vadd.f32 %v2722, %v2732
        %v2735 = vmul.f32 %v2733, 0.7978846
        %v2736 = vmul.f32 %v2734, 0.7978846
        %v2737 = vtanh.pop %v2735
        %v2738 = vtanh.pop %v2736
        %v2739 = vadd.f32 %v2737, 1.0
        %v2740 = vadd.f32 %v2738, 1.0
        %v2741 = vmul.f32 %v2725, %v2739
        %v2742 = vmul.f32 %v2726, %v2740
        %v2743 = vpack.c.bf16 %v2741, %v2741
        %v2744 = vpack.c.bf16 %v2742, %v2742
        %s2745 = scalar_lea.vmem %s13, 128
        %v2746 = vld [vmem:[%s2745] sm:$0xf]
        %v2747 = vld [vmem:[%s2745 + $0x4] sm:$0xf]
        %v2748 = vld [vmem:[%s2745 + $0x8] sm:$0xf]
        %v2749 = vld [vmem:[%s2745 + $0xc] sm:$0xf]
        %v2750 = vld [vmem:[%s2745 + $0x10] sm:$0xf]
        %v2751 = vld [vmem:[%s2745 + $0x14] sm:$0xf]
        %v2752 = vld [vmem:[%s2745 + $0x18] sm:$0xf]
        %v2753 = vld [vmem:[%s2745 + $0x1c] sm:$0xf]
        %v2754 = vld [vmem:[%s2745 + $0x20] sm:$0xf]
        %v2755 = vld [vmem:[%s2745 + $0x24] sm:$0xf]
        %v2756 = vld [vmem:[%s2745 + $0x28] sm:$0xf]
        %v2757 = vld [vmem:[%s2745 + $0x2c] sm:$0xf]
        %v2758 = vld [vmem:[%s2745 + $0x30] sm:$0xf]
        %v2759 = vld [vmem:[%s2745 + $0x34] sm:$0xf]
        %v2760 = vld [vmem:[%s2745 + $0x38] sm:$0xf]
        %v2761 = vld [vmem:[%s2745 + $0x3c] sm:$0xf]
        %v2762 = vld [vmem:[%s2745 + $0x40] sm:$0xf]
        %v2763 = vld [vmem:[%s2745 + $0x44] sm:$0xf]
        %v2764 = vld [vmem:[%s2745 + $0x48] sm:$0xf]
        %v2765 = vld [vmem:[%s2745 + $0x4c] sm:$0xf]
        %v2766 = vld [vmem:[%s2745 + $0x50] sm:$0xf]
        %v2767 = vld [vmem:[%s2745 + $0x54] sm:$0xf]
        %v2768 = vld [vmem:[%s2745 + $0x58] sm:$0xf]
        %v2769 = vld [vmem:[%s2745 + $0x5c] sm:$0xf]
        %v2770 = vld [vmem:[%s2745 + $0x60] sm:$0xf]
        %v2771 = vld [vmem:[%s2745 + $0x64] sm:$0xf]
        %v2772 = vld [vmem:[%s2745 + $0x68] sm:$0xf]
        %v2773 = vld [vmem:[%s2745 + $0x6c] sm:$0xf]
        %v2774 = vld [vmem:[%s2745 + $0x70] sm:$0xf]
        %v2775 = vld [vmem:[%s2745 + $0x74] sm:$0xf]
        %v2776 = vld [vmem:[%s2745 + $0x78] sm:$0xf]
        %v2777 = vld [vmem:[%s2745 + $0x7c] sm:$0xf]
        %v2810 = vunpack.c.l.b16 %v2746
        %v2811 = vunpack.c.l.b16 %v2747
        %v2812 = vunpack.c.l.b16 %v2748
        %v2813 = vunpack.c.l.b16 %v2749
        %v2814 = vunpack.c.l.b16 %v2750
        %v2815 = vunpack.c.l.b16 %v2751
        %v2816 = vunpack.c.l.b16 %v2752
        %v2817 = vunpack.c.l.b16 %v2753
        %v2818 = vunpack.c.l.b16 %v2754
        %v2819 = vunpack.c.l.b16 %v2755
        %v2820 = vunpack.c.l.b16 %v2756
        %v2821 = vunpack.c.l.b16 %v2757
        %v2822 = vunpack.c.l.b16 %v2758
        %v2823 = vunpack.c.l.b16 %v2759
        %v2824 = vunpack.c.l.b16 %v2760
        %v2825 = vunpack.c.l.b16 %v2761
        %v2826 = vunpack.c.l.b16 %v2762
        %v2827 = vunpack.c.l.b16 %v2763
        %v2828 = vunpack.c.l.b16 %v2764
        %v2829 = vunpack.c.l.b16 %v2765
        %v2830 = vunpack.c.l.b16 %v2766
        %v2831 = vunpack.c.l.b16 %v2767
        %v2832 = vunpack.c.l.b16 %v2768
        %v2833 = vunpack.c.l.b16 %v2769
        %v2834 = vunpack.c.l.b16 %v2770
        %v2835 = vunpack.c.l.b16 %v2771
        %v2836 = vunpack.c.l.b16 %v2772
        %v2837 = vunpack.c.l.b16 %v2773
        %v2838 = vunpack.c.l.b16 %v2774
        %v2839 = vunpack.c.l.b16 %v2775
        %v2840 = vunpack.c.l.b16 %v2776
        %v2841 = vunpack.c.l.b16 %v2777
        %v2842 = vpack.c.b16 %v2811, %v2810
        %v2843 = vpack.c.b16 %v2813, %v2812
        %v2844 = vpack.c.b16 %v2815, %v2814
        %v2845 = vpack.c.b16 %v2817, %v2816
        %v2846 = vpack.c.b16 %v2819, %v2818
        %v2847 = vpack.c.b16 %v2821, %v2820
        %v2848 = vpack.c.b16 %v2823, %v2822
        %v2849 = vpack.c.b16 %v2825, %v2824
        %v2850 = vpack.c.b16 %v2827, %v2826
        %v2851 = vpack.c.b16 %v2829, %v2828
        %v2852 = vpack.c.b16 %v2831, %v2830
        %v2853 = vpack.c.b16 %v2833, %v2832
        %v2854 = vpack.c.b16 %v2835, %v2834
        %v2855 = vpack.c.b16 %v2837, %v2836
        %v2856 = vpack.c.b16 %v2839, %v2838
        %v2857 = vpack.c.b16 %v2841, %v2840
        %2874 = vmatpush.bf16.msra.mxu0 %v2849
        %2875 = vmatpush.bf16.msra.mxu0 %v2848
        %2876 = vmatpush.bf16.msra.mxu0 %v2847
        %2877 = vmatpush.bf16.msra.mxu0 %v2846
        %2878 = vmatpush.bf16.msra.mxu0 %v2845
        %2879 = vmatpush.bf16.msra.mxu0 %v2844
        %2880 = vmatpush.bf16.msra.mxu0 %v2843
        %2881 = vmatpush.bf16.msra.mxu0 %v2842
        %2882 = vmatmul.bf16.gmra.mxu0 %v2743
        %v2883 = vpop.f32.mrf.mxu0
        %v2884 = vadd.f32 0.0, %v2883
        %v2885 = vpop.f32.mrf.mxu0
        %2886 = vdwg.mxu0
        %2887 = vmatpush.bf16.msra.mxu0 %v2857
        %2888 = vmatpush.bf16.msra.mxu0 %v2856
        %2889 = vmatpush.bf16.msra.mxu0 %v2855
        %2890 = vmatpush.bf16.msra.mxu0 %v2854
        %2891 = vmatpush.bf16.msra.mxu0 %v2853
        %2892 = vmatpush.bf16.msra.mxu0 %v2852
        %2893 = vmatpush.bf16.msra.mxu0 %v2851
        %2894 = vmatpush.bf16.msra.mxu0 %v2850
        %2895 = vmatmul.bf16.gmra.mxu0 %v2744
        %v2896 = vpop.f32.mrf.mxu0
        %v2897 = vadd.f32 %v2884, %v2896
        %v2898 = vpop.f32.mrf.mxu0
        %2899 = vdwg.mxu0
        %v2900 = vadd.f32 %v2604, %v2897
        %s2901 = scalar_lea.vmem %s14, 1
        %v2902 = vld [vmem:[%s2901] sm:$0x1]
        %v2904 = vperm.slane %v2902, 0
        %v2906 = vadd.f32 %v2900, %v2904
        %v2907 = vld [vmem:[%s15] sm:$0x1]
        %v2908 = vld [vmem:[%s16] sm:$0x1]
        %vm2909 = vcmask 516096
        %v2910 = vsel %vm2909, %v2906, 0.0
        %2911 = vadd.xlane.f32.xlu0 %v2910
        %v2912 = vpop.xlane.xlu0 %2911
        %v2913 = vmul.f32 %v2912, %v1137
        %v2914 = vsub.f32 %v2906, %v2913
        %v2915 = vmul.f32 %v2914, %v2914
        %v2916 = vsel %vm2909, %v2915, 0.0
        %2917 = vadd.xlane.f32.xlu0 %v2916
        %v2918 = vpop.xlane.xlu0 %2917
        %v2919 = vmul.f32 %v2918, %v1137
        %v2920 = vadd.f32 %v2919, 1e-12
        %v2921 = vrsqrt.pop %v2920
        %v2922 = vmul.f32 %v2921, %v2920
        %v2923 = vmul.f32 %v2922, %v2921
        %v2924 = vmul.f32 0.5, %v2923
        %v2925 = vsub.f32 1.5, %v2924
        %v2926 = vmul.f32 %v2921, %v2925
        %vm2927 = vweird.f32 %v2920
        %vm2928 = vweird.f32 %v2921
        %vm2929 = vmor %vm2927, %vm2928
        %v2930 = vsel %vm2929, %v2921, %v2926
        %v2931 = vmul.f32 %v2914, %v2930
        %v2932 = vmul.f32 %v2931, %v2907
        %v2933 = vadd.f32 %v2932, %v2908
        %v2934 = vsel %vm1238, %v2933, 0.0
        %2935 = vst [vmem:[%s625] sm:$0x1] %v2934
        %v2936 = vpack.c.bf16 %v2933, %v2933
        %v2937 = vld [vmem:[%s17] sm:$0xf]
        %v2938 = vld [vmem:[%s17 + $0x4] sm:$0xf]
        %v2939 = vld [vmem:[%s17 + $0x8] sm:$0xf]
        %v2940 = vld [vmem:[%s17 + $0xc] sm:$0xf]
        %v2941 = vld [vmem:[%s17 + $0x10] sm:$0xf]
        %v2942 = vld [vmem:[%s17 + $0x14] sm:$0xf]
        %v2943 = vld [vmem:[%s17 + $0x18] sm:$0xf]
        %v2944 = vld [vmem:[%s17 + $0x1c] sm:$0xf]
        %v2945 = vld [vmem:[%s18] sm:$0x1]
        %v2954 = vunpack.c.l.b16 %v2937
        %v2955 = vunpack.c.l.b16 %v2938
        %v2956 = vunpack.c.l.b16 %v2939
        %v2957 = vunpack.c.l.b16 %v2940
        %v2958 = vunpack.c.l.b16 %v2941
        %v2959 = vunpack.c.l.b16 %v2942
        %v2960 = vunpack.c.l.b16 %v2943
        %v2961 = vunpack.c.l.b16 %v2944
        %v2962 = vpack.c.b16 %v2955, %v2954
        %v2963 = vpack.c.b16 %v2957, %v2956
        %v2964 = vpack.c.b16 %v2959, %v2958
        %v2965 = vpack.c.b16 %v2961, %v2960
        %v2971 = vsel %vm1238, %v2936, 0
        %2973 = vmatpush.bf16.msra.mxu0 0
        %2974 = vmatpush.bf16.msra.mxu0 0
        %2975 = vmatpush.bf16.msra.mxu0 0
        %2976 = vmatpush.bf16.msra.mxu0 0
        %2977 = vmatpush.bf16.msra.mxu0 %v2965
        %2978 = vmatpush.bf16.msra.mxu0 %v2964
        %2979 = vmatpush.bf16.msra.mxu0 %v2963
        %2980 = vmatpush.bf16.msra.mxu0 %v2962
        %2981 = vmatmul.bf16.gmra.mxu0 %v2971
        %v2982 = vpop.f32.mrf.mxu0
        %v2983 = vadd.f32 %v2945, %v2982
        %v2984 = vpop.f32.mrf.mxu0
        %2985 = vdwg.mxu0
        %2986 = vst [vmem:[%s631] sm:$0x1] %v2983
        %s2987 = sand.u32 %s450, 1
        %s2988 = scalar_lea.sflag [#allocation3], %s2987
        %s2989 = sand.u32 %s450, 1
        %s2990 = scalar_lea.vmem [#allocation2], %s2989
        %s2991 = sand.u32 %s476, 1
        %s2992 = scalar_lea.sflag [#allocation5], %s2991
        %s2993 = sand.u32 %s476, 1
        %s2994 = scalar_lea.vmem [#allocation4], %s2993
        // Predicated region
        $region97: #{vit_forward.1} parent=95 // pred_check
          %p2995 = pneg %p460
        $region98: #{vit_forward.1} parent=95 // pred_check_branch
          %2997 = sbr.rel (%p2995) target = $region100
        $region99: #{vit_forward.1} parent=95 // pred_region
          %2999 = vsyncadd %s2988, 0
          %s3000 = scalar_lea.hbm %s19, %s38
          %s3002 = sshll.u32 %s2990, 4
          %s3003 = int_to_ptr.vmem [resolvable:$true] %s3002
          %s3004 = sshll.u32 %s3000, 4
          %s3005 = int_to_ptr.hbm [resolvable:$true] %s3004
          %3007 = dma.vmem_to_hbm [thread:$0]  %s3003, 16, %s3005, %s2988
        $region100: #{vit_forward.1} parent=95 // pred_fallthru
          _
        // Predicated region
        $region101: #{vit_forward.1} parent=95 // pred_check
          %p3008 = pneg %p486
        $region102: #{vit_forward.1} parent=95 // pred_check_branch
          %3010 = sbr.rel (%p3008) target = $region104
        $region103: #{vit_forward.1} parent=95 // pred_region
          %3012 = vsyncadd %s2992, 0
          %s3013 = scalar_lea.hbm %s20, %s38
          %s3015 = sshll.u32 %s2994, 4
          %s3016 = int_to_ptr.vmem [resolvable:$true] %s3015
          %s3017 = sshll.u32 %s3013, 4
          %s3018 = int_to_ptr.hbm [resolvable:$true] %s3017
          %3020 = dma.vmem_to_hbm [thread:$0]  %s3016, 16, %s3018, %s2992
        $region104: #{vit_forward.1} parent=95 // pred_fallthru
          _
      $region96: #{vit_forward.1} parent=5 // pred_fallthru
        _
      %p3021 = scmp.le.s32.totalorder 2, %s33
      // Predicated region
      $region105: #{vit_forward.1} parent=5 // pred_check
        %p3022 = pneg %p3021
      $region106: #{vit_forward.1} parent=5 // pred_check_branch
        %3024 = sbr.rel (%p3022) target = $region108
      $region107: #{vit_forward.1} parent=5 // pred_region
        %s3025 = ssub.s32 %s33, 2
        // Predicated region
        $region109: #{vit_forward.1} parent=107 // pred_check
          %p3026 = pneg %p466
        $region110: #{vit_forward.1} parent=107 // pred_check_branch
          %3028 = sbr.rel (%p3026) target = $region112
        $region111: #{vit_forward.1} parent=107 // pred_region
          %s3029 = sand.u32 %s451, 1
          %s3030 = scalar_lea.sflag [#allocation3], %s3029
          %s3031 = sand.u32 %s451, 1
          %s3032 = scalar_lea.vmem [#allocation2], %s3031
          %3034 = dma.done %s3030, 16
        $region112: #{vit_forward.1} parent=107 // pred_fallthru
          _
        // Predicated region
        $region113: #{vit_forward.1} parent=107 // pred_check
          %p3035 = pneg %p492
        $region114: #{vit_forward.1} parent=107 // pred_check_branch
          %3037 = sbr.rel (%p3035) target = $region116
        $region115: #{vit_forward.1} parent=107 // pred_region
          %s3038 = sand.u32 %s477, 1
          %s3039 = scalar_lea.sflag [#allocation5], %s3038
          %s3040 = sand.u32 %s477, 1
          %s3041 = scalar_lea.vmem [#allocation4], %s3040
          %3043 = dma.done %s3039, 16
        $region116: #{vit_forward.1} parent=107 // pred_fallthru
          _
      $region108: #{vit_forward.1} parent=5 // pred_fallthru
        _
    $region6: #{vit_forward.1} parent=1 // loop_footer
      %s37 = sadd.s32 1, %s33
    $region7: #{vit_forward.1} parent=1 // loop_footer_branch
      %32 = sbr.rel target = $region3
    $region8: #{vit_forward.1} parent=1 // loop_exit
      _
    %3044 = vsyncpa [#allocation3], 1
    %s3045 = scalar_lea.sflag [#allocation3], 1
    %3046 = vsyncpa %s3045, 1
    %3047 = vsyncpa [#allocation5], 1
    %s3048 = scalar_lea.sflag [#allocation5], 1
    %3049 = vsyncpa %s3048, 1

</llo_original>
